<compile_context>
chip_gen: v7x
topology: tpu7x:2x2x1
jax: 0.10.0
libtpu: 0.0.40
codegen_flags: <defaults>
</compile_context>

<pallas_src>
import jax
import jax.numpy as jnp
import numpy as np
from jax.experimental import pallas as pl
from jax.experimental.pallas import tpu as pltpu  # noqa: F401  (TPU backend)

D_STATE = 16
D_CONV = 4
EXPAND = 2


def _sigmoid(v):
    return 1.0 / (1.0 + jnp.exp(-v))


def _silu(v):
    return v * _sigmoid(v)


def _softplus(v):
    # matches torch.nn.functional.softplus (threshold=20)
    return jnp.where(v > 20.0, v, jnp.log(1.0 + jnp.exp(jnp.minimum(v, 20.0))))


def _mm_nt(a, b):
    # a: (m, k), b: (n, k) -> a @ b.T
    return jax.lax.dot_general(a, b, (((1,), (1,)), ((), ())),
                               preferred_element_type=jnp.float32)


def _mm(a, b):
    # a: (m, k), b: (k, n) -> a @ b
    return jnp.dot(a, b, preferred_element_type=jnp.float32)


# ---------------------------------------------------------------------------
# Fused kernel: pool + excitation + Mamba gate + modulation, one batch per step
# ---------------------------------------------------------------------------
def dptam_fused_kernel(x_ref, e_pool_ref, sel_ref, w_p1_ref,
                       w_in_x_ref, w_in_z_ref, w_conv_ref, b_conv_ref,
                       w_B_ref, w_C_ref, w_dt_full_ref, b_dt_ref,
                       a_log_ref, e_state_ref, t_state_ref, d_ref, w_out_ref,
                       o_ref):
    t = x_ref.shape[1]
    c = w_p1_ref.shape[0]
    hw = x_ref.shape[2] // c
    g = sel_ref.shape[0]                          # c // t
    di = w_conv_ref.shape[0]
    K = w_conv_ref.shape[1]

    x_wide = x_ref[0].astype(jnp.float32)         # (t, c*hw) lane-dense block

    # ---- stage 1: spatial avg pool (matmul with 0/1 pooling matrix) + p1_conv1 ----
    e_pool = e_pool_ref[...]                      # (c, c*hw)
    pool_tc = _mm_nt(x_wide, e_pool) * (1.0 / hw)       # (t, c) == x_22^T
    w_p1 = w_p1_ref[...]
    x22_ct = _mm_nt(pool_tc, w_p1)                # p1_conv1(x_22)          (t, c)
    x22_mean = jnp.mean(pool_tc, axis=0, keepdims=True)
    x22_m = _mm_nt(x22_mean, w_p1)                # p1_conv1(mean_t x_22)   (1, c)
    x22_tc = pool_tc + x22_ct * x22_m             # (t, c)

    # ---- flat .view reinterpretation (c, t) -> (t, c) via selection matmuls ----
    y_ct = x22_tc.T                               # (c, t): PyTorch layout of x22
    m_in = jnp.concatenate([_mm(sel_ref[a], y_ct) for a in range(g)], axis=1)   # (t, c)

    # ---- stage 2: Mamba block ----
    xc = _mm_nt(m_in, w_in_x_ref[...])            # (t, di)
    z = _mm_nt(m_in, w_in_z_ref[...])             # (t, di)

    # causal depthwise conv1d (kernel K, left pad K-1, truncated to t) + SiLU
    w_conv = w_conv_ref[...]
    x_pad = jnp.concatenate([jnp.zeros((K - 1, di), jnp.float32), xc], axis=0)
    conv = b_conv_ref[...]
    for k in range(K):
        conv = conv + x_pad[k:k + t, :] * w_conv[:, k:k + 1].T
    xc = _silu(conv)                              # (t, di)

    # input-dependent SSM parameters
    B = _mm_nt(xc, w_B_ref[...])                  # (t, ds)
    C = _mm_nt(xc, w_C_ref[...])                  # (t, ds)
    dt = _softplus(b_dt_ref[...] + _mm_nt(xc, w_dt_full_ref[...]))   # (t, di)

    # hoisted, batched SSM tensors in lane-dense flattened (t, di*ds) form
    a_flat = -jnp.exp(a_log_ref[...].astype(jnp.float32))            # (1, di*ds)
    e_state = e_state_ref[...]                    # (di, di*ds) channel -> state expansion
    t_state = t_state_ref[...]                    # (ds, di*ds) state tiling over channels
    dA = jnp.exp(_mm(dt, e_state) * a_flat)       # (t, di*ds)
    dBx = _mm(dt * xc, e_state) * _mm(B, t_state)  # (t, di*ds)
    c_rep = _mm(C, t_state)                       # (t, di*ds)

    # recurrence: only two VPU ops per step remain on the serial critical path
    h = jnp.zeros_like(dA[0:1, :])                # (1, di*ds)
    hs = []
    for l in range(t):
        h = dA[l:l + 1, :] * h + dBx[l:l + 1, :]
        hs.append(h)
    h_all = jnp.concatenate(hs, axis=0)           # (t, di*ds)
    y = _mm_nt(h_all * c_rep, e_state) + xc * d_ref[...]   # (t, di)

    y = y * _silu(z)                              # gate
    mo = _mm_nt(y, w_out_ref[...])                # out_proj -> (t, c)

    # ---- reverse flat .view (t, c) -> (c, t) -> gate aligned with (t, c) features ----
    g_tc = _mm(mo[:, 0:t].T, sel_ref[0])
    for a in range(1, g):
        g_tc = g_tc + _mm(mo[:, a * t:(a + 1) * t].T, sel_ref[a])    # (t, c)

    # ---- stage 3: modulate (lane-dense gate broadcast via the pooling matrix) ----
    gate_wide = _mm(g_tc, e_pool)                 # (t, c*hw)
    o_ref[0] = (x_wide * gate_wide).astype(o_ref.dtype)


# ---------------------------------------------------------------------------
# Parameters (deterministic synthetic init, mamba_ssm layout)
# ---------------------------------------------------------------------------
def init_params(key, c):
    di = EXPAND * c
    dt_rank = -(-c // 16)  # ceil(c / 16)
    ks = jax.random.split(key, 11)

    def rn(k, shape, scale):
        return jax.random.normal(k, shape, jnp.float32) * scale

    params = {
        # p1_conv1: Conv1d(c, c, 1, bias=False) -> weight (c, c)
        'w_p1': rn(ks[0], (c, c), 1.0 / np.sqrt(c)),
        # Mamba in_proj (split into x / z halves of the (2*di, c) weight)
        'w_in_x': rn(ks[1], (di, c), 1.0 / np.sqrt(c)),
        'w_in_z': rn(ks[2], (di, c), 1.0 / np.sqrt(c)),
        # depthwise causal conv1d (di, 1, K) -> (di, K), bias (1, di)
        'w_conv': rn(ks[3], (di, D_CONV), 1.0 / np.sqrt(D_CONV)),
        'b_conv': rn(ks[4], (1, di), 0.1),
        # x_proj split: dt / B / C rows of the (dt_rank + 2*d_state, di) weight
        'w_dtin': rn(ks[5], (dt_rank, di), 1.0 / np.sqrt(di)),
        'w_B': rn(ks[6], (D_STATE, di), 1.0 / np.sqrt(di)),
        'w_C': rn(ks[7], (D_STATE, di), 1.0 / np.sqrt(di)),
        # dt_proj
        'w_dt': rn(ks[8], (di, dt_rank), 1.0 / np.sqrt(max(dt_rank, 1))),
        'b_dt': rn(ks[9], (1, di), 0.1),
        # S4D-real A init and skip D
        'a_log': jnp.log(jnp.tile(jnp.arange(1, D_STATE + 1, dtype=jnp.float32)[None, :],
                                  (di, 1))),
        'd_p': jnp.ones((1, di), jnp.float32),
        # out_proj
        'w_out': rn(ks[10], (c, di), 1.0 / np.sqrt(di)),
    }
    return params


# ---------------------------------------------------------------------------
# Host-side constant matrices (pooling / flat-view permutation / state expansion)
# ---------------------------------------------------------------------------
def _dptam_constants(t, c, hw, di, ds):
    g = c // t
    e_pool = np.kron(np.eye(c, dtype=np.float32), np.ones((1, hw), np.float32))   # (c, c*hw)
    sel = np.zeros((g, t, c), np.float32)
    for a in range(g):
        for i in range(t):
            sel[a, i, i * g + a] = 1.0
    e_state = np.kron(np.eye(di, dtype=np.float32), np.ones((1, ds), np.float32))  # (di, di*ds)
    t_state = np.tile(np.eye(ds, dtype=np.float32), (1, di))                       # (ds, di*ds)
    return (jnp.asarray(e_pool), jnp.asarray(sel),
            jnp.asarray(e_state), jnp.asarray(t_state))


# ---------------------------------------------------------------------------
# Forward wrapper (single fused pallas_call)
# ---------------------------------------------------------------------------
def dptam_forward(x, params):
    n, t, c, h, w = x.shape
    hw = h * w
    if c % t != 0:
        # TODO(synk): general flat-view permutation when n_segment does not divide in_channels.
        raise NotImplementedError("dptam_forward requires in_channels % n_segment == 0")
    di = params['w_in_x'].shape[0]
    ds = params['a_log'].shape[1]

    e_pool, sel, e_state, t_state = _dptam_constants(t, c, hw, di, ds)
    # fold x_proj(dt) -> dt_proj into one (di, di) matrix (numerically equivalent)
    w_dt_full = jnp.dot(params['w_dt'], params['w_dtin'],
                        precision=jax.lax.Precision.HIGHEST)
    a_log_flat = params['a_log'].reshape(1, di * ds)

    x3 = x.reshape(n, t, c * hw)                  # lane-dense layout, free bitcast in HBM

    consts = [e_pool, sel, params['w_p1'], params['w_in_x'], params['w_in_z'],
              params['w_conv'], params['b_conv'], params['w_B'], params['w_C'],
              w_dt_full, params['b_dt'], a_log_flat, e_state, t_state,
              params['d_p'], params['w_out']]
    const_specs = [pl.BlockSpec(a.shape, lambda i, nd=a.ndim: (0,) * nd) for a in consts]

    cp_cls = getattr(pltpu, "CompilerParams", None) or getattr(pltpu, "TPUCompilerParams")
    compiler_params = cp_cls(dimension_semantics=("parallel",),
                             vmem_limit_bytes=32 * 1024 * 1024)

    out3 = pl.pallas_call(
        dptam_fused_kernel,
        out_shape=jax.ShapeDtypeStruct((n, t, c * hw), x.dtype),
        grid=(n,),
        in_specs=[pl.BlockSpec((1, t, c * hw), lambda i: (i, 0, 0))] + const_specs,
        out_specs=pl.BlockSpec((1, t, c * hw), lambda i: (i, 0, 0)),
        compiler_params=compiler_params,
    )(x3, *consts)
    return out3.reshape(n, t, c, h, w)


# ---------------------------------------------------------------------------
# Pure-JAX reference (for correctness check)
# ---------------------------------------------------------------------------
def dptam_reference(x, params):
    n, t, c, h, w = x.shape
    hp = jax.lax.Precision.HIGHEST
    pool = jnp.mean(x, axis=(3, 4))                       # (n, t, c)
    x_22 = jnp.transpose(pool, (0, 2, 1))                 # (n, c, t)
    W = params['w_p1']
    x22_c_t = jnp.einsum('oc,nct->not', W, x_22, precision=hp)
    x22_mean = jnp.mean(x_22, axis=2, keepdims=True)
    x22_m = jnp.einsum('oc,nct->not', W, x22_mean, precision=hp)
    x22 = (x_22 + x22_c_t * x22_m).reshape(n, t, c)

    di = params['w_in_x'].shape[0]
    xc = jnp.einsum('ntc,dc->ntd', x22, params['w_in_x'], precision=hp)
    z = jnp.einsum('ntc,dc->ntd', x22, params['w_in_z'], precision=hp)
    K = params['w_conv'].shape[1]
    x_pad = jnp.pad(xc, ((0, 0), (K - 1, 0), (0, 0)))
    conv = sum(x_pad[:, k:k + t, :] * params['w_conv'][:, k][None, None, :]
               for k in range(K))
    conv = conv + params['b_conv']
    xc = conv * jax.nn.sigmoid(conv)
    B = jnp.einsum('ntd,sd->nts', xc, params['w_B'], precision=hp)
    C = jnp.einsum('ntd,sd->nts', xc, params['w_C'], precision=hp)
    dt_low = jnp.einsum('ntd,rd->ntr', xc, params['w_dtin'], precision=hp)
    dt = jnp.einsum('ntr,dr->ntd', dt_low, params['w_dt'], precision=hp) + params['b_dt']
    dt = jnp.where(dt > 20.0, dt, jnp.log(1.0 + jnp.exp(jnp.minimum(dt, 20.0))))
    A = -jnp.exp(params['a_log'])
    Dp = params['d_p'][0]

    def scan_one(xc_b, dt_b, B_b, C_b):
        def step(hst, inp):
            xt, dtt, Bt, Ct = inp
            hst = jnp.exp(dtt[:, None] * A) * hst + dtt[:, None] * Bt[None, :] * xt[:, None]
            y = jnp.sum(hst * Ct[None, :], axis=1) + Dp * xt
            return hst, y
        h0 = jnp.zeros((di, D_STATE), jnp.float32)
        _, ys = jax.lax.scan(step, h0, (xc_b, dt_b, B_b, C_b))
        return ys

    y = jax.vmap(scan_one)(xc, dt, B, C)
    y = y * (z * jax.nn.sigmoid(z))
    mo = jnp.einsum('ntd,cd->ntc', y, params['w_out'], precision=hp)
    gate = mo.reshape(n, c, t)
    return x * jnp.transpose(gate, (0, 2, 1))[:, :, :, None, None]


if __name__ == "__main__":
    n, t, c, h, w = 2, 8, 16, 8, 8          # n_segment = t = 8, in_channels = c = 16
    key = jax.random.PRNGKey(0)
    kx, kp = jax.random.split(key)
    x = jax.random.normal(kx, (n, t, c, h, w), jnp.float32)
    params = init_params(kp, c)

    out = dptam_forward(x, params)
    out = jax.block_until_ready(out)

    ref = dptam_reference(x, params)
    np.testing.assert_allclose(np.asarray(out), np.asarray(ref), rtol=2e-2, atol=2e-2)
    assert out.shape == (n, t, c, h, w)
    print("KERNEL_OK")
</pallas_src>

<mosaic_0001>
module attributes {stable_mosaic.version = 11 : i64} {
  func.func @dptam_fused_kernel(%arg0: i32, %arg1: memref<1x8x1024xf32, #tpu.memory_space<vmem>>, %arg2: memref<16x1024xf32, #tpu.memory_space<vmem>>, %arg3: memref<2x8x16xf32, #tpu.memory_space<vmem>>, %arg4: memref<16x16xf32, #tpu.memory_space<vmem>>, %arg5: memref<32x16xf32, #tpu.memory_space<vmem>>, %arg6: memref<32x16xf32, #tpu.memory_space<vmem>>, %arg7: memref<32x4xf32, #tpu.memory_space<vmem>>, %arg8: memref<1x32xf32, #tpu.memory_space<vmem>>, %arg9: memref<16x32xf32, #tpu.memory_space<vmem>>, %arg10: memref<16x32xf32, #tpu.memory_space<vmem>>, %arg11: memref<32x32xf32, #tpu.memory_space<vmem>>, %arg12: memref<1x32xf32, #tpu.memory_space<vmem>>, %arg13: memref<1x512xf32, #tpu.memory_space<vmem>>, %arg14: memref<32x512xf32, #tpu.memory_space<vmem>>, %arg15: memref<16x512xf32, #tpu.memory_space<vmem>>, %arg16: memref<1x32xf32, #tpu.memory_space<vmem>>, %arg17: memref<16x32xf32, #tpu.memory_space<vmem>>, %arg18: memref<1x8x1024xf32, #tpu.memory_space<vmem>>) attributes {dimension_semantics = [#tpu.dimension_semantics<parallel>], iteration_bounds = array<i64: 2>, scalar_prefetch = 0 : i64, scratch_operands = 0 : i64, tpu.core_type = #tpu.core_type<tc>, window_params = [{transform_indices = @transform_0, window_bounds = array<i64: 1, 8, 1024>}, {pipeline_mode = #tpu.pipeline_mode<synchronous>, transform_indices = @transform_1, window_bounds = array<i64: 16, 1024>}, {pipeline_mode = #tpu.pipeline_mode<synchronous>, transform_indices = @transform_2, window_bounds = array<i64: 2, 8, 16>}, {pipeline_mode = #tpu.pipeline_mode<synchronous>, transform_indices = @transform_3, window_bounds = array<i64: 16, 16>}, {pipeline_mode = #tpu.pipeline_mode<synchronous>, transform_indices = @transform_4, window_bounds = array<i64: 32, 16>}, {pipeline_mode = #tpu.pipeline_mode<synchronous>, transform_indices = @transform_5, window_bounds = array<i64: 32, 16>}, {pipeline_mode = #tpu.pipeline_mode<synchronous>, transform_indices = @transform_6, window_bounds = array<i64: 32, 4>}, {pipeline_mode = #tpu.pipeline_mode<synchronous>, transform_indices = @transform_7, window_bounds = array<i64: 1, 32>}, {pipeline_mode = #tpu.pipeline_mode<synchronous>, transform_indices = @transform_8, window_bounds = array<i64: 16, 32>}, {pipeline_mode = #tpu.pipeline_mode<synchronous>, transform_indices = @transform_9, window_bounds = array<i64: 16, 32>}, {pipeline_mode = #tpu.pipeline_mode<synchronous>, transform_indices = @transform_10, window_bounds = array<i64: 32, 32>}, {pipeline_mode = #tpu.pipeline_mode<synchronous>, transform_indices = @transform_11, window_bounds = array<i64: 1, 32>}, {pipeline_mode = #tpu.pipeline_mode<synchronous>, transform_indices = @transform_12, window_bounds = array<i64: 1, 512>}, {pipeline_mode = #tpu.pipeline_mode<synchronous>, transform_indices = @transform_13, window_bounds = array<i64: 32, 512>}, {pipeline_mode = #tpu.pipeline_mode<synchronous>, transform_indices = @transform_14, window_bounds = array<i64: 16, 512>}, {pipeline_mode = #tpu.pipeline_mode<synchronous>, transform_indices = @transform_15, window_bounds = array<i64: 1, 32>}, {pipeline_mode = #tpu.pipeline_mode<synchronous>, transform_indices = @transform_16, window_bounds = array<i64: 16, 32>}, {transform_indices = @transform_17, window_bounds = array<i64: 1, 8, 1024>}]} {
    %c0 = arith.constant 0 : index
    %c0_0 = arith.constant 0 : index
    %c0_1 = arith.constant 0 : index
    %0 = vector.load %arg1[%c0, %c0_0, %c0_1] : memref<1x8x1024xf32, #tpu.memory_space<vmem>>, vector<1x8x1024xf32>
    %1 = vector.shape_cast %0 : vector<1x8x1024xf32> to vector<8x1024xf32>
    %c0_2 = arith.constant 0 : index
    %c0_3 = arith.constant 0 : index
    %2 = vector.load %arg2[%c0_2, %c0_3] : memref<16x1024xf32, #tpu.memory_space<vmem>>, vector<16x1024xf32>
    %cst = arith.constant dense<0.000000e+00> : vector<8x16xf32>
    %3 = tpu.matmul %1, %2, %cst {dimension_numbers = #tpu.dot_dimension_numbers<[1], [1], [0], [0], [0, 0, 1, 0], [], []>} : vector<8x1024xf32>, vector<16x1024xf32>, vector<8x16xf32> -> vector<8x16xf32>
    %cst_4 = arith.constant 1.562500e-02 : f32
    %4 = vector.broadcast %cst_4 : f32 to vector<8x16xf32>
    %5 = arith.mulf %3, %4 : vector<8x16xf32>
    %c0_5 = arith.constant 0 : index
    %c0_6 = arith.constant 0 : index
    %6 = vector.load %arg4[%c0_5, %c0_6] : memref<16x16xf32, #tpu.memory_space<vmem>>, vector<16x16xf32>
    %cst_7 = arith.constant dense<0.000000e+00> : vector<8x16xf32>
    %7 = tpu.matmul %5, %6, %cst_7 {dimension_numbers = #tpu.dot_dimension_numbers<[1], [1], [0], [0], [0, 0, 1, 0], [], []>} : vector<8x16xf32>, vector<16x16xf32>, vector<8x16xf32> -> vector<8x16xf32>
    %cst_8 = arith.constant dense<0.000000e+00> : vector<16xf32>
    %8 = vector.multi_reduction <add>, %5, %cst_8 [0] : vector<8x16xf32> to vector<16xf32>
    %9 = vector.shape_cast %8 : vector<16xf32> to vector<1x16xf32>
    %cst_9 = arith.constant 8.000000e+00 : f32
    %10 = vector.broadcast %cst_9 : f32 to vector<1x16xf32>
    %11 = arith.divf %9, %10 : vector<1x16xf32>
    %cst_10 = arith.constant dense<0.000000e+00> : vector<1x16xf32>
    %12 = tpu.matmul %11, %6, %cst_10 {dimension_numbers = #tpu.dot_dimension_numbers<[1], [1], [0], [0], [0, 0, 1, 0], [], []>} : vector<1x16xf32>, vector<16x16xf32>, vector<1x16xf32> -> vector<1x16xf32>
    %13 = vector.broadcast %12 : vector<1x16xf32> to vector<8x16xf32>
    %14 = arith.mulf %7, %13 : vector<8x16xf32>
    %15 = arith.addf %5, %14 : vector<8x16xf32>
    %16 = tpu.transpose %15, [1, 0] : vector<8x16xf32> -> vector<16x8xf32>
    %c0_11 = arith.constant 0 : index
    %c0_12 = arith.constant 0 : index
    %c0_13 = arith.constant 0 : index
    %17 = vector.load %arg3[%c0_11, %c0_12, %c0_13] : memref<2x8x16xf32, #tpu.memory_space<vmem>>, vector<1x8x16xf32>
    %18 = vector.shape_cast %17 : vector<1x8x16xf32> to vector<8x16xf32>
    %cst_14 = arith.constant dense<0.000000e+00> : vector<8x8xf32>
    %19 = tpu.matmul %18, %16, %cst_14 {dimension_numbers = #tpu.dot_dimension_numbers<[1], [0], [0], [1], [0, 0, 1, 1], [], []>} : vector<8x16xf32>, vector<16x8xf32>, vector<8x8xf32> -> vector<8x8xf32>
    %c1 = arith.constant 1 : index
    %c0_15 = arith.constant 0 : index
    %c0_16 = arith.constant 0 : index
    %20 = vector.load %arg3[%c1, %c0_15, %c0_16] : memref<2x8x16xf32, #tpu.memory_space<vmem>>, vector<1x8x16xf32>
    %21 = vector.shape_cast %20 : vector<1x8x16xf32> to vector<8x16xf32>
    %cst_17 = arith.constant dense<0.000000e+00> : vector<8x8xf32>
    %22 = tpu.matmul %21, %16, %cst_17 {dimension_numbers = #tpu.dot_dimension_numbers<[1], [0], [0], [1], [0, 0, 1, 1], [], []>} : vector<8x16xf32>, vector<16x8xf32>, vector<8x8xf32> -> vector<8x8xf32>
    %23 = tpu.concatenate %19, %22 in 1 : vector<8x8xf32>, vector<8x8xf32> -> vector<8x16xf32>
    %c0_18 = arith.constant 0 : index
    %c0_19 = arith.constant 0 : index
    %24 = vector.load %arg5[%c0_18, %c0_19] : memref<32x16xf32, #tpu.memory_space<vmem>>, vector<32x16xf32>
    %cst_20 = arith.constant dense<0.000000e+00> : vector<8x32xf32>
    %25 = tpu.matmul %23, %24, %cst_20 {dimension_numbers = #tpu.dot_dimension_numbers<[1], [1], [0], [0], [0, 0, 1, 0], [], []>} : vector<8x16xf32>, vector<32x16xf32>, vector<8x32xf32> -> vector<8x32xf32>
    %c0_21 = arith.constant 0 : index
    %c0_22 = arith.constant 0 : index
    %26 = vector.load %arg6[%c0_21, %c0_22] : memref<32x16xf32, #tpu.memory_space<vmem>>, vector<32x16xf32>
    %cst_23 = arith.constant dense<0.000000e+00> : vector<8x32xf32>
    %27 = tpu.matmul %23, %26, %cst_23 {dimension_numbers = #tpu.dot_dimension_numbers<[1], [1], [0], [0], [0, 0, 1, 0], [], []>} : vector<8x16xf32>, vector<32x16xf32>, vector<8x32xf32> -> vector<8x32xf32>
    %c0_24 = arith.constant 0 : index
    %c0_25 = arith.constant 0 : index
    %28 = vector.load %arg7[%c0_24, %c0_25] : memref<32x4xf32, #tpu.memory_space<vmem>>, vector<32x4xf32>
    %cst_26 = arith.constant 0.000000e+00 : f32
    %29 = vector.broadcast %cst_26 : f32 to vector<3x32xf32>
    %30 = tpu.concatenate %29, %25 in 0 : vector<3x32xf32>, vector<8x32xf32> -> vector<11x32xf32>
    %c0_27 = arith.constant 0 : index
    %c0_28 = arith.constant 0 : index
    %31 = vector.load %arg8[%c0_27, %c0_28] : memref<1x32xf32, #tpu.memory_space<vmem>>, vector<1x32xf32>
    %32 = vector.extract_strided_slice %30 {offsets = [0, 0], sizes = [8, 32], strides = [1, 1]} : vector<11x32xf32> to vector<8x32xf32>
    %33 = vector.extract_strided_slice %28 {offsets = [0, 0], sizes = [32, 1], strides = [1, 1]} : vector<32x4xf32> to vector<32x1xf32>
    %34 = tpu.transpose %33, [1, 0] : vector<32x1xf32> -> vector<1x32xf32>
    %35 = vector.broadcast %34 : vector<1x32xf32> to vector<8x32xf32>
    %36 = arith.mulf %32, %35 : vector<8x32xf32>
    %37 = vector.broadcast %31 : vector<1x32xf32> to vector<8x32xf32>
    %38 = arith.addf %37, %36 : vector<8x32xf32>
    %39 = vector.extract_strided_slice %30 {offsets = [1, 0], sizes = [8, 32], strides = [1, 1]} : vector<11x32xf32> to vector<8x32xf32>
    %40 = vector.extract_strided_slice %28 {offsets = [0, 1], sizes = [32, 1], strides = [1, 1]} : vector<32x4xf32> to vector<32x1xf32>
    %41 = tpu.transpose %40, [1, 0] : vector<32x1xf32> -> vector<1x32xf32>
    %42 = vector.broadcast %41 : vector<1x32xf32> to vector<8x32xf32>
    %43 = arith.mulf %39, %42 : vector<8x32xf32>
    %44 = arith.addf %38, %43 : vector<8x32xf32>
    %45 = vector.extract_strided_slice %30 {offsets = [2, 0], sizes = [8, 32], strides = [1, 1]} : vector<11x32xf32> to vector<8x32xf32>
    %46 = vector.extract_strided_slice %28 {offsets = [0, 2], sizes = [32, 1], strides = [1, 1]} : vector<32x4xf32> to vector<32x1xf32>
    %47 = tpu.transpose %46, [1, 0] : vector<32x1xf32> -> vector<1x32xf32>
    %48 = vector.broadcast %47 : vector<1x32xf32> to vector<8x32xf32>
    %49 = arith.mulf %45, %48 : vector<8x32xf32>
    %50 = arith.addf %44, %49 : vector<8x32xf32>
    %51 = vector.extract_strided_slice %30 {offsets = [3, 0], sizes = [8, 32], strides = [1, 1]} : vector<11x32xf32> to vector<8x32xf32>
    %52 = vector.extract_strided_slice %28 {offsets = [0, 3], sizes = [32, 1], strides = [1, 1]} : vector<32x4xf32> to vector<32x1xf32>
    %53 = tpu.transpose %52, [1, 0] : vector<32x1xf32> -> vector<1x32xf32>
    %54 = vector.broadcast %53 : vector<1x32xf32> to vector<8x32xf32>
    %55 = arith.mulf %51, %54 : vector<8x32xf32>
    %56 = arith.addf %50, %55 : vector<8x32xf32>
    %cst_29 = arith.constant 0.000000e+00 : f32
    %57 = vector.broadcast %cst_29 : f32 to vector<8x32xf32>
    %58 = arith.subf %57, %56 : vector<8x32xf32>
    %59 = math.exp %58 : vector<8x32xf32>
    %cst_30 = arith.constant 1.000000e+00 : f32
    %60 = vector.broadcast %cst_30 : f32 to vector<8x32xf32>
    %61 = arith.addf %60, %59 : vector<8x32xf32>
    %cst_31 = arith.constant 1.000000e+00 : f32
    %62 = vector.broadcast %cst_31 : f32 to vector<8x32xf32>
    %63 = arith.divf %62, %61 : vector<8x32xf32>
    %64 = arith.mulf %56, %63 : vector<8x32xf32>
    %c0_32 = arith.constant 0 : index
    %c0_33 = arith.constant 0 : index
    %65 = vector.load %arg9[%c0_32, %c0_33] : memref<16x32xf32, #tpu.memory_space<vmem>>, vector<16x32xf32>
    %cst_34 = arith.constant dense<0.000000e+00> : vector<8x16xf32>
    %66 = tpu.matmul %64, %65, %cst_34 {dimension_numbers = #tpu.dot_dimension_numbers<[1], [1], [0], [0], [0, 0, 1, 0], [], []>} : vector<8x32xf32>, vector<16x32xf32>, vector<8x16xf32> -> vector<8x16xf32>
    %c0_35 = arith.constant 0 : index
    %c0_36 = arith.constant 0 : index
    %67 = vector.load %arg10[%c0_35, %c0_36] : memref<16x32xf32, #tpu.memory_space<vmem>>, vector<16x32xf32>
    %cst_37 = arith.constant dense<0.000000e+00> : vector<8x16xf32>
    %68 = tpu.matmul %64, %67, %cst_37 {dimension_numbers = #tpu.dot_dimension_numbers<[1], [1], [0], [0], [0, 0, 1, 0], [], []>} : vector<8x32xf32>, vector<16x32xf32>, vector<8x16xf32> -> vector<8x16xf32>
    %c0_38 = arith.constant 0 : index
    %c0_39 = arith.constant 0 : index
    %69 = vector.load %arg12[%c0_38, %c0_39] : memref<1x32xf32, #tpu.memory_space<vmem>>, vector<1x32xf32>
    %c0_40 = arith.constant 0 : index
    %c0_41 = arith.constant 0 : index
    %70 = vector.load %arg11[%c0_40, %c0_41] : memref<32x32xf32, #tpu.memory_space<vmem>>, vector<32x32xf32>
    %cst_42 = arith.constant dense<0.000000e+00> : vector<8x32xf32>
    %71 = tpu.matmul %64, %70, %cst_42 {dimension_numbers = #tpu.dot_dimension_numbers<[1], [1], [0], [0], [0, 0, 1, 0], [], []>} : vector<8x32xf32>, vector<32x32xf32>, vector<8x32xf32> -> vector<8x32xf32>
    %72 = vector.broadcast %69 : vector<1x32xf32> to vector<8x32xf32>
    %73 = arith.addf %72, %71 : vector<8x32xf32>
    %cst_43 = arith.constant 2.000000e+01 : f32
    %74 = vector.broadcast %cst_43 : f32 to vector<8x32xf32>
    %75 = arith.cmpf ogt, %73, %74 : vector<8x32xf32>
    %cst_44 = arith.constant 2.000000e+01 : f32
    %76 = vector.broadcast %cst_44 : f32 to vector<8x32xf32>
    %77 = arith.minimumf %73, %76 : vector<8x32xf32>
    %78 = math.exp %77 : vector<8x32xf32>
    %cst_45 = arith.constant 1.000000e+00 : f32
    %79 = vector.broadcast %cst_45 : f32 to vector<8x32xf32>
    %80 = arith.addf %79, %78 : vector<8x32xf32>
    %81 = math.log %80 : vector<8x32xf32>
    %82 = arith.select %75, %73, %81 : vector<8x32xi1>, vector<8x32xf32>
    %c0_46 = arith.constant 0 : index
    %c0_47 = arith.constant 0 : index
    %83 = vector.load %arg13[%c0_46, %c0_47] : memref<1x512xf32, #tpu.memory_space<vmem>>, vector<1x512xf32>
    %84 = math.exp %83 : vector<1x512xf32>
    %cst_48 = arith.constant 0.000000e+00 : f32
    %85 = vector.broadcast %cst_48 : f32 to vector<1x512xf32>
    %86 = arith.subf %85, %84 : vector<1x512xf32>
    %c0_49 = arith.constant 0 : index
    %c0_50 = arith.constant 0 : index
    %87 = vector.load %arg14[%c0_49, %c0_50] : memref<32x512xf32, #tpu.memory_space<vmem>>, vector<32x512xf32>
    %c0_51 = arith.constant 0 : index
    %c0_52 = arith.constant 0 : index
    %88 = vector.load %arg15[%c0_51, %c0_52] : memref<16x512xf32, #tpu.memory_space<vmem>>, vector<16x512xf32>
    %cst_53 = arith.constant dense<0.000000e+00> : vector<8x512xf32>
    %89 = tpu.matmul %82, %87, %cst_53 {dimension_numbers = #tpu.dot_dimension_numbers<[1], [0], [0], [1], [0, 0, 1, 1], [], []>} : vector<8x32xf32>, vector<32x512xf32>, vector<8x512xf32> -> vector<8x512xf32>
    %90 = vector.broadcast %86 : vector<1x512xf32> to vector<8x512xf32>
    %91 = arith.mulf %89, %90 : vector<8x512xf32>
    %92 = math.exp %91 : vector<8x512xf32>
    %93 = arith.mulf %82, %64 : vector<8x32xf32>
    %cst_54 = arith.constant dense<0.000000e+00> : vector<8x512xf32>
    %94 = tpu.matmul %93, %87, %cst_54 {dimension_numbers = #tpu.dot_dimension_numbers<[1], [0], [0], [1], [0, 0, 1, 1], [], []>} : vector<8x32xf32>, vector<32x512xf32>, vector<8x512xf32> -> vector<8x512xf32>
    %cst_55 = arith.constant dense<0.000000e+00> : vector<8x512xf32>
    %95 = tpu.matmul %66, %88, %cst_55 {dimension_numbers = #tpu.dot_dimension_numbers<[1], [0], [0], [1], [0, 0, 1, 1], [], []>} : vector<8x16xf32>, vector<16x512xf32>, vector<8x512xf32> -> vector<8x512xf32>
    %96 = arith.mulf %94, %95 : vector<8x512xf32>
    %cst_56 = arith.constant dense<0.000000e+00> : vector<8x512xf32>
    %97 = tpu.matmul %68, %88, %cst_56 {dimension_numbers = #tpu.dot_dimension_numbers<[1], [0], [0], [1], [0, 0, 1, 1], [], []>} : vector<8x16xf32>, vector<16x512xf32>, vector<8x512xf32> -> vector<8x512xf32>
    %cst_57 = arith.constant 0.000000e+00 : f32
    %98 = vector.broadcast %cst_57 : f32 to vector<1x512xf32>
    %99 = vector.extract_strided_slice %92 {offsets = [0, 0], sizes = [1, 512], strides = [1, 1]} : vector<8x512xf32> to vector<1x512xf32>
    %100 = arith.mulf %99, %98 : vector<1x512xf32>
    %101 = vector.extract_strided_slice %96 {offsets = [0, 0], sizes = [1, 512], strides = [1, 1]} : vector<8x512xf32> to vector<1x512xf32>
    %102 = arith.addf %100, %101 : vector<1x512xf32>
    %103 = vector.extract_strided_slice %92 {offsets = [1, 0], sizes = [1, 512], strides = [1, 1]} : vector<8x512xf32> to vector<1x512xf32>
    %104 = arith.mulf %103, %102 : vector<1x512xf32>
    %105 = vector.extract_strided_slice %96 {offsets = [1, 0], sizes = [1, 512], strides = [1, 1]} : vector<8x512xf32> to vector<1x512xf32>
    %106 = arith.addf %104, %105 : vector<1x512xf32>
    %107 = vector.extract_strided_slice %92 {offsets = [2, 0], sizes = [1, 512], strides = [1, 1]} : vector<8x512xf32> to vector<1x512xf32>
    %108 = arith.mulf %107, %106 : vector<1x512xf32>
    %109 = vector.extract_strided_slice %96 {offsets = [2, 0], sizes = [1, 512], strides = [1, 1]} : vector<8x512xf32> to vector<1x512xf32>
    %110 = arith.addf %108, %109 : vector<1x512xf32>
    %111 = vector.extract_strided_slice %92 {offsets = [3, 0], sizes = [1, 512], strides = [1, 1]} : vector<8x512xf32> to vector<1x512xf32>
    %112 = arith.mulf %111, %110 : vector<1x512xf32>
    %113 = vector.extract_strided_slice %96 {offsets = [3, 0], sizes = [1, 512], strides = [1, 1]} : vector<8x512xf32> to vector<1x512xf32>
    %114 = arith.addf %112, %113 : vector<1x512xf32>
    %115 = vector.extract_strided_slice %92 {offsets = [4, 0], sizes = [1, 512], strides = [1, 1]} : vector<8x512xf32> to vector<1x512xf32>
    %116 = arith.mulf %115, %114 : vector<1x512xf32>
    %117 = vector.extract_strided_slice %96 {offsets = [4, 0], sizes = [1, 512], strides = [1, 1]} : vector<8x512xf32> to vector<1x512xf32>
    %118 = arith.addf %116, %117 : vector<1x512xf32>
    %119 = vector.extract_strided_slice %92 {offsets = [5, 0], sizes = [1, 512], strides = [1, 1]} : vector<8x512xf32> to vector<1x512xf32>
    %120 = arith.mulf %119, %118 : vector<1x512xf32>
    %121 = vector.extract_strided_slice %96 {offsets = [5, 0], sizes = [1, 512], strides = [1, 1]} : vector<8x512xf32> to vector<1x512xf32>
    %122 = arith.addf %120, %121 : vector<1x512xf32>
    %123 = vector.extract_strided_slice %92 {offsets = [6, 0], sizes = [1, 512], strides = [1, 1]} : vector<8x512xf32> to vector<1x512xf32>
    %124 = arith.mulf %123, %122 : vector<1x512xf32>
    %125 = vector.extract_strided_slice %96 {offsets = [6, 0], sizes = [1, 512], strides = [1, 1]} : vector<8x512xf32> to vector<1x512xf32>
    %126 = arith.addf %124, %125 : vector<1x512xf32>
    %127 = vector.extract_strided_slice %92 {offsets = [7, 0], sizes = [1, 512], strides = [1, 1]} : vector<8x512xf32> to vector<1x512xf32>
    %128 = arith.mulf %127, %126 : vector<1x512xf32>
    %129 = vector.extract_strided_slice %96 {offsets = [7, 0], sizes = [1, 512], strides = [1, 1]} : vector<8x512xf32> to vector<1x512xf32>
    %130 = arith.addf %128, %129 : vector<1x512xf32>
    %131 = tpu.concatenate %102, %106, %110, %114, %118, %122, %126, %130 in 0 : vector<1x512xf32>, vector<1x512xf32>, vector<1x512xf32>, vector<1x512xf32>, vector<1x512xf32>, vector<1x512xf32>, vector<1x512xf32>, vector<1x512xf32> -> vector<8x512xf32>
    %132 = arith.mulf %131, %97 : vector<8x512xf32>
    %cst_58 = arith.constant dense<0.000000e+00> : vector<8x32xf32>
    %133 = tpu.matmul %132, %87, %cst_58 {dimension_numbers = #tpu.dot_dimension_numbers<[1], [1], [0], [0], [0, 0, 1, 0], [], []>} : vector<8x512xf32>, vector<32x512xf32>, vector<8x32xf32> -> vector<8x32xf32>
    %c0_59 = arith.constant 0 : index
    %c0_60 = arith.constant 0 : index
    %134 = vector.load %arg16[%c0_59, %c0_60] : memref<1x32xf32, #tpu.memory_space<vmem>>, vector<1x32xf32>
    %135 = vector.broadcast %134 : vector<1x32xf32> to vector<8x32xf32>
    %136 = arith.mulf %64, %135 : vector<8x32xf32>
    %137 = arith.addf %133, %136 : vector<8x32xf32>
    %cst_61 = arith.constant 0.000000e+00 : f32
    %138 = vector.broadcast %cst_61 : f32 to vector<8x32xf32>
    %139 = arith.subf %138, %27 : vector<8x32xf32>
    %140 = math.exp %139 : vector<8x32xf32>
    %cst_62 = arith.constant 1.000000e+00 : f32
    %141 = vector.broadcast %cst_62 : f32 to vector<8x32xf32>
    %142 = arith.addf %141, %140 : vector<8x32xf32>
    %cst_63 = arith.constant 1.000000e+00 : f32
    %143 = vector.broadcast %cst_63 : f32 to vector<8x32xf32>
    %144 = arith.divf %143, %142 : vector<8x32xf32>
    %145 = arith.mulf %27, %144 : vector<8x32xf32>
    %146 = arith.mulf %137, %145 : vector<8x32xf32>
    %c0_64 = arith.constant 0 : index
    %c0_65 = arith.constant 0 : index
    %147 = vector.load %arg17[%c0_64, %c0_65] : memref<16x32xf32, #tpu.memory_space<vmem>>, vector<16x32xf32>
    %cst_66 = arith.constant dense<0.000000e+00> : vector<8x16xf32>
    %148 = tpu.matmul %146, %147, %cst_66 {dimension_numbers = #tpu.dot_dimension_numbers<[1], [1], [0], [0], [0, 0, 1, 0], [], []>} : vector<8x32xf32>, vector<16x32xf32>, vector<8x16xf32> -> vector<8x16xf32>
    %149 = vector.extract_strided_slice %148 {offsets = [0, 0], sizes = [8, 8], strides = [1, 1]} : vector<8x16xf32> to vector<8x8xf32>
    %150 = tpu.transpose %149, [1, 0] : vector<8x8xf32> -> vector<8x8xf32>
    %c0_67 = arith.constant 0 : index
    %c0_68 = arith.constant 0 : index
    %c0_69 = arith.constant 0 : index
    %151 = vector.load %arg3[%c0_67, %c0_68, %c0_69] : memref<2x8x16xf32, #tpu.memory_space<vmem>>, vector<1x8x16xf32>
    %152 = vector.shape_cast %151 : vector<1x8x16xf32> to vector<8x16xf32>
    %cst_70 = arith.constant dense<0.000000e+00> : vector<8x16xf32>
    %153 = tpu.matmul %150, %152, %cst_70 {dimension_numbers = #tpu.dot_dimension_numbers<[1], [0], [0], [1], [0, 0, 1, 1], [], []>} : vector<8x8xf32>, vector<8x16xf32>, vector<8x16xf32> -> vector<8x16xf32>
    %154 = vector.extract_strided_slice %148 {offsets = [0, 8], sizes = [8, 8], strides = [1, 1]} : vector<8x16xf32> to vector<8x8xf32>
    %155 = tpu.transpose %154, [1, 0] : vector<8x8xf32> -> vector<8x8xf32>
    %c1_71 = arith.constant 1 : index
    %c0_72 = arith.constant 0 : index
    %c0_73 = arith.constant 0 : index
    %156 = vector.load %arg3[%c1_71, %c0_72, %c0_73] : memref<2x8x16xf32, #tpu.memory_space<vmem>>, vector<1x8x16xf32>
    %157 = vector.shape_cast %156 : vector<1x8x16xf32> to vector<8x16xf32>
    %cst_74 = arith.constant dense<0.000000e+00> : vector<8x16xf32>
    %158 = tpu.matmul %155, %157, %cst_74 {dimension_numbers = #tpu.dot_dimension_numbers<[1], [0], [0], [1], [0, 0, 1, 1], [], []>} : vector<8x8xf32>, vector<8x16xf32>, vector<8x16xf32> -> vector<8x16xf32>
    %159 = arith.addf %153, %158 : vector<8x16xf32>
    %cst_75 = arith.constant dense<0.000000e+00> : vector<8x1024xf32>
    %160 = tpu.matmul %159, %2, %cst_75 {dimension_numbers = #tpu.dot_dimension_numbers<[1], [0], [0], [1], [0, 0, 1, 1], [], []>} : vector<8x16xf32>, vector<16x1024xf32>, vector<8x1024xf32> -> vector<8x1024xf32>
    %161 = arith.mulf %1, %160 : vector<8x1024xf32>
    %c0_76 = arith.constant 0 : index
    %c0_77 = arith.constant 0 : index
    %c0_78 = arith.constant 0 : index
    %162 = vector.load %arg18[%c0_76, %c0_77, %c0_78] : memref<1x8x1024xf32, #tpu.memory_space<vmem>>, vector<1x8x1024xf32>
    %163 = vector.shape_cast %162 : vector<1x8x1024xf32> to vector<8x1024xf32>
    %164 = vector.shape_cast %161 : vector<8x1024xf32> to vector<1x8x1024xf32>
    tpu.vector_store %arg18[%c0_76, %c0_77, %c0_78], %164 {strides = array<i32>} : memref<1x8x1024xf32, #tpu.memory_space<vmem>>, vector<1x8x1024xf32>,
    return
  }
  func.func @transform_0(%arg0: i32) -> (i32, i32, i32) {
    %c0_i32 = arith.constant 0 : i32
    %c0_i32_0 = arith.constant 0 : i32
    %c0_i32_1 = arith.constant 0 : i32
    return %arg0, %c0_i32, %c0_i32_0 : i32, i32, i32
  }
  func.func @transform_1(%arg0: i32) -> (i32, i32) {
    %c0_i32 = arith.constant 0 : i32
    %c0_i32_0 = arith.constant 0 : i32
    %c0_i32_1 = arith.constant 0 : i32
    return %c0_i32, %c0_i32_0 : i32, i32
  }
  func.func @transform_2(%arg0: i32) -> (i32, i32, i32) {
    %c0_i32 = arith.constant 0 : i32
    %c0_i32_0 = arith.constant 0 : i32
    %c0_i32_1 = arith.constant 0 : i32
    %c0_i32_2 = arith.constant 0 : i32
    return %c0_i32, %c0_i32_0, %c0_i32_1 : i32, i32, i32
  }
  func.func @transform_3(%arg0: i32) -> (i32, i32) {
    %c0_i32 = arith.constant 0 : i32
    %c0_i32_0 = arith.constant 0 : i32
    %c0_i32_1 = arith.constant 0 : i32
    return %c0_i32, %c0_i32_0 : i32, i32
  }
  func.func @transform_4(%arg0: i32) -> (i32, i32) {
    %c0_i32 = arith.constant 0 : i32
    %c0_i32_0 = arith.constant 0 : i32
    %c0_i32_1 = arith.constant 0 : i32
    return %c0_i32, %c0_i32_0 : i32, i32
  }
  func.func @transform_5(%arg0: i32) -> (i32, i32) {
    %c0_i32 = arith.constant 0 : i32
    %c0_i32_0 = arith.constant 0 : i32
    %c0_i32_1 = arith.constant 0 : i32
    return %c0_i32, %c0_i32_0 : i32, i32
  }
  func.func @transform_6(%arg0: i32) -> (i32, i32) {
    %c0_i32 = arith.constant 0 : i32
    %c0_i32_0 = arith.constant 0 : i32
    %c0_i32_1 = arith.constant 0 : i32
    return %c0_i32, %c0_i32_0 : i32, i32
  }
  func.func @transform_7(%arg0: i32) -> (i32, i32) {
    %c0_i32 = arith.constant 0 : i32
    %c0_i32_0 = arith.constant 0 : i32
    %c0_i32_1 = arith.constant 0 : i32
    return %c0_i32, %c0_i32_0 : i32, i32
  }
  func.func @transform_8(%arg0: i32) -> (i32, i32) {
    %c0_i32 = arith.constant 0 : i32
    %c0_i32_0 = arith.constant 0 : i32
    %c0_i32_1 = arith.constant 0 : i32
    return %c0_i32, %c0_i32_0 : i32, i32
  }
  func.func @transform_9(%arg0: i32) -> (i32, i32) {
    %c0_i32 = arith.constant 0 : i32
    %c0_i32_0 = arith.constant 0 : i32
    %c0_i32_1 = arith.constant 0 : i32
    return %c0_i32, %c0_i32_0 : i32, i32
  }
  func.func @transform_10(%arg0: i32) -> (i32, i32) {
    %c0_i32 = arith.constant 0 : i32
    %c0_i32_0 = arith.constant 0 : i32
    %c0_i32_1 = arith.constant 0 : i32
    return %c0_i32, %c0_i32_0 : i32, i32
  }
  func.func @transform_11(%arg0: i32) -> (i32, i32) {
    %c0_i32 = arith.constant 0 : i32
    %c0_i32_0 = arith.constant 0 : i32
    %c0_i32_1 = arith.constant 0 : i32
    return %c0_i32, %c0_i32_0 : i32, i32
  }
  func.func @transform_12(%arg0: i32) -> (i32, i32) {
    %c0_i32 = arith.constant 0 : i32
    %c0_i32_0 = arith.constant 0 : i32
    %c0_i32_1 = arith.constant 0 : i32
    return %c0_i32, %c0_i32_0 : i32, i32
  }
  func.func @transform_13(%arg0: i32) -> (i32, i32) {
    %c0_i32 = arith.constant 0 : i32
    %c0_i32_0 = arith.constant 0 : i32
    %c0_i32_1 = arith.constant 0 : i32
    return %c0_i32, %c0_i32_0 : i32, i32
  }
  func.func @transform_14(%arg0: i32) -> (i32, i32) {
    %c0_i32 = arith.constant 0 : i32
    %c0_i32_0 = arith.constant 0 : i32
    %c0_i32_1 = arith.constant 0 : i32
    return %c0_i32, %c0_i32_0 : i32, i32
  }
  func.func @transform_15(%arg0: i32) -> (i32, i32) {
    %c0_i32 = arith.constant 0 : i32
    %c0_i32_0 = arith.constant 0 : i32
    %c0_i32_1 = arith.constant 0 : i32
    return %c0_i32, %c0_i32_0 : i32, i32
  }
  func.func @transform_16(%arg0: i32) -> (i32, i32) {
    %c0_i32 = arith.constant 0 : i32
    %c0_i32_0 = arith.constant 0 : i32
    %c0_i32_1 = arith.constant 0 : i32
    return %c0_i32, %c0_i32_0 : i32, i32
  }
  func.func @transform_17(%arg0: i32) -> (i32, i32, i32) {
    %c0_i32 = arith.constant 0 : i32
    %c0_i32_0 = arith.constant 0 : i32
    %c0_i32_1 = arith.constant 0 : i32
    return %arg0, %c0_i32, %c0_i32_0 : i32, i32, i32
  }
}

</mosaic_0001>

<llo_original>
// kernel: tpu_custom_call.1
$region0: #{tpu_custom_call.1}
  #allocation0 [shape = 'u32[]', space=smem, size = 0x4, offset = 0x4, fixed_abs, tag = 'smem constant byte address 0x4 - core index']
  #allocation1 [shape = 'u32[144,128]{1,0:T(1,128)}', space=vmem, size = 0x12000, scoped, tag = 'internal scratch']
  %s0 = inlined_call_operand.vmem [shape: f32[2,8,1024], index: 0, kind: input, shape index: {}]
  %s1 = inlined_call_operand.hbm [shape: f32[16,1024], index: 1, kind: input, shape index: {}]
  %s2 = inlined_call_operand.hbm [shape: f32[2,8,16], index: 2, kind: input, shape index: {}]
  %s3 = inlined_call_operand.hbm [shape: f32[16,16], index: 3, kind: input, shape index: {}]
  %s4 = inlined_call_operand.vmem [shape: f32[32,16], index: 4, kind: input, shape index: {}]
  %s5 = inlined_call_operand.vmem [shape: f32[32,16], index: 5, kind: input, shape index: {}]
  %s6 = inlined_call_operand.vmem [shape: f32[32,4], index: 6, kind: input, shape index: {}]
  %s7 = inlined_call_operand.vmem [shape: f32[1,32], index: 7, kind: input, shape index: {}]
  %s8 = inlined_call_operand.hbm [shape: f32[16,32], index: 8, kind: input, shape index: {}]
  %s9 = inlined_call_operand.hbm [shape: f32[16,32], index: 9, kind: input, shape index: {}]
  %s10 = inlined_call_operand.vmem [shape: f32[32,32], index: 10, kind: input, shape index: {}]
  %s11 = inlined_call_operand.hbm [shape: f32[1,32], index: 11, kind: input, shape index: {}]
  %s12 = inlined_call_operand.hbm [shape: f32[1,512], index: 12, kind: input, shape index: {}]
  %s13 = inlined_call_operand.hbm [shape: f32[32,512], index: 13, kind: input, shape index: {}]
  %s14 = inlined_call_operand.hbm [shape: f32[16,512], index: 14, kind: input, shape index: {}]
  %s15 = inlined_call_operand.vmem [shape: f32[1,32], index: 15, kind: input, shape index: {}]
  %s16 = inlined_call_operand.vmem [shape: f32[16,32], index: 16, kind: input, shape index: {}]
  %s17 = inlined_call_operand.hbm [shape: f32[2,8,1024], index: 17, kind: output, shape index: {}]
  %s18 = sld [smem:[#allocation0]]
  $region137: #{tpu_custom_call.1} parent=0
    _
  %s20 = ssub.s32 1, %s18
  %s21 = scalar_select 0, %s20, %s18
  $region1: #{tpu_custom_call.1} parent=0
    #allocation2 [shape = 'u8[65536]{0}', space=vmem, size = 0x10000, scoped, tag = 'input window, operand 1, single buffered']
    #allocation3 [shape = 's32[2]{0}', space=sflag, size = 0x8, scoped, tag = 'scoped memory for tpu_custom_call.1']
    #allocation4 [shape = 's32[2]{0}', space=sflag, size = 0x8, scoped, tag = 'scoped memory for tpu_custom_call.1']
    #allocation5 [shape = 'u8[8192]{0}', space=vmem, size = 0x2000, scoped, tag = 'input window, operand 2, single buffered']
    #allocation6 [shape = 's32[1]{0}', space=sflag, size = 0x4, scoped, tag = 'scoped memory for tpu_custom_call.1']
    #allocation7 [shape = 'u8[8192]{0}', space=vmem, size = 0x2000, scoped, tag = 'input window, operand 3, single buffered']
    #allocation8 [shape = 'u8[8192]{0}', space=vmem, size = 0x2000, scoped, tag = 'input window, operand 8, single buffered']
    #allocation9 [shape = 's32[1]{0}', space=sflag, size = 0x4, scoped, tag = 'scoped memory for tpu_custom_call.1']
    #allocation10 [shape = 'u8[8192]{0}', space=vmem, size = 0x2000, scoped, tag = 'input window, operand 9, single buffered']
    #allocation11 [shape = 'u8[512]{0}', space=vmem, size = 0x400, scoped, tag = 'input window, operand 11, single buffered']
    #allocation12 [shape = 's32[1]{0}', space=sflag, size = 0x4, scoped, tag = 'scoped memory for tpu_custom_call.1']
    #allocation13 [shape = 'u8[2048]{0}', space=vmem, size = 0x800, scoped, tag = 'input window, operand 12, single buffered']
    #allocation14 [shape = 'u8[65536]{0}', space=vmem, size = 0x10000, scoped, tag = 'input window, operand 13, single buffered']
    #allocation15 [shape = 's32[1]{0}', space=sflag, size = 0x4, scoped, tag = 'scoped memory for tpu_custom_call.1']
    #allocation16 [shape = 'u8[32768]{0}', space=vmem, size = 0x8000, scoped, tag = 'input window, operand 14, single buffered']
    #allocation17 [shape = 'u8[65536]{0}', space=vmem, size = 0x10000, scoped, tag = 'output window, operand 0']
    %22 = vsyncpa [#allocation3], 0
    %23 = vsyncpa [#allocation6], 0
    %24 = vsyncpa [#allocation9], 0
    %25 = vsyncpa [#allocation12], 0
    %26 = vsyncpa [#allocation15], 0
    %27 = vsyncpa [#allocation4], 0
    %s28 = scalar_lea.sflag [#allocation4], 1
    %29 = vsyncpa %s28, 0
    loop: start=0, step=1, limit=4
    $region2: #{tpu_custom_call.1} parent=1 // loop_pre_header
      _
    $region3: #{tpu_custom_call.1} parent=1 // loop_header
      %s31 = sphi 0, %s35
      %p32 = scmp.ge.s32.totalorder %s31, 4
      %s41 = sphi 0, %s43
      %s44 = sphi 0, %s41
      %s45 = sphi 0, %s44
      %s61 = sphi 0, %s45
      %s65 = sphi 0, %s65
      %s67 = sphi 0, %s65
      %s68 = sphi 0, %s67
      %s82 = sphi 0, %s68
      %s86 = sphi 0, %s86
      %s88 = sphi 0, %s86
      %s89 = sphi 0, %s88
      %s103 = sphi 0, %s89
      %s107 = sphi 0, %s107
      %s109 = sphi 0, %s107
      %s110 = sphi 0, %s109
      %s124 = sphi 0, %s110
      %s128 = sphi 0, %s128
      %s130 = sphi 0, %s128
      %s131 = sphi 0, %s130
      %s145 = sphi 0, %s131
      %s149 = sphi 0, %s149
      %s151 = sphi 0, %s149
      %s152 = sphi 0, %s151
      %s166 = sphi 0, %s152
      %s170 = sphi 0, %s170
      %s172 = sphi 0, %s170
      %s173 = sphi 0, %s172
      %s187 = sphi 0, %s173
      %s191 = sphi 0, %s191
      %s193 = sphi 0, %s191
      %s194 = sphi 0, %s193
      %s208 = sphi 0, %s194
      %s212 = sphi 0, %s212
      %s214 = sphi 0, %s212
      %s215 = sphi 0, %s214
      %s229 = sphi 0, %s215
      %s233 = sphi 0, %s233
      %s235 = sphi 0, %s233
      %s236 = sphi 0, %s235
      %s250 = sphi 0, %s236
      %s254 = sphi 0, %s254
      %s256 = sphi 0, %s254
      %s257 = sphi 0, %s256
      %s271 = sphi 0, %s257
      %s275 = sphi 0, %s275
      %s277 = sphi 0, %s275
      %s278 = sphi 0, %s277
      %s292 = sphi 0, %s278
      %s296 = sphi 0, %s296
      %s298 = sphi 0, %s296
      %s299 = sphi 0, %s298
      %s313 = sphi 0, %s299
      %s317 = sphi 0, %s317
      %s319 = sphi 0, %s317
      %s320 = sphi 0, %s319
      %s334 = sphi 0, %s320
      %s338 = sphi 0, %s338
      %s340 = sphi 0, %s338
      %s341 = sphi 0, %s340
      %s355 = sphi 0, %s341
      %s359 = sphi 0, %s359
      %s361 = sphi 0, %s359
      %s362 = sphi 0, %s361
      %s376 = sphi 0, %s362
      %s380 = sphi 0, %s380
      %s382 = sphi 0, %s380
      %s383 = sphi 0, %s382
      %s397 = sphi 0, %s383
      %s403 = sphi 0, %s405
      %s406 = sphi 0, %s403
      %s407 = sphi 0, %s406
      %s423 = sphi 0, %s407
    $region4: #{tpu_custom_call.1} parent=1 // loop_header_branch
      %34 = sbr.rel (%p32) target = $region8
    $region5: #{tpu_custom_call.1} parent=1 // loop_body
      %s36 = ssub.s32 %s31, 1
      %s37 = ssub.s32 %s31, 2
      %s38 = sadd.s32 %s31, 1
      %s39 = ssub.s32 %s31, %s38
      %p40 = scmp.eq.s32.totalorder %s39, 0
      %s42 = sadd.s32 %s41, 1
      %s43 = scalar_select %p40, %s41, %s42
      %p46 = pneg %p40
      %p47 = scmp.eq.s32.totalorder %s31, 1
      %p48 = por %p46, %p47
      %p49 = scmp.ne.s32.totalorder %s41, %s44
      %p50 = scmp.eq.s32.totalorder %s31, 0
      %p51 = por %p49, %p50
      %p52 = scmp.ne.s32.totalorder %s41, %s44
      %p53 = scmp.eq.s32.totalorder %s36, 1
      %p54 = por %p52, %p53
      %p55 = scmp.ne.s32.totalorder %s44, %s45
      %p56 = scmp.eq.s32.totalorder %s36, 0
      %p57 = por %p55, %p56
      %p58 = scmp.ne.s32.totalorder %s44, %s45
      %p59 = scmp.eq.s32.totalorder %s37, 1
      %p60 = por %p58, %p59
      %p62 = scmp.ne.s32.totalorder %s45, %s61
      %p63 = scmp.eq.s32.totalorder %s37, 0
      %p64 = por %p62, %p63
      %s66 = sadd.s32 %s65, 1
      %p69 = scmp.eq.s32.totalorder %s31, 1
      %p70 = scmp.ne.s32.totalorder %s65, %s67
      %p71 = scmp.eq.s32.totalorder %s31, 0
      %p72 = por %p70, %p71
      %p73 = scmp.ne.s32.totalorder %s65, %s67
      %p74 = scmp.eq.s32.totalorder %s36, 1
      %p75 = por %p73, %p74
      %p76 = scmp.ne.s32.totalorder %s67, %s68
      %p77 = scmp.eq.s32.totalorder %s36, 0
      %p78 = por %p76, %p77
      %p79 = scmp.ne.s32.totalorder %s67, %s68
      %p80 = scmp.eq.s32.totalorder %s37, 1
      %p81 = por %p79, %p80
      %p83 = scmp.ne.s32.totalorder %s68, %s82
      %p84 = scmp.eq.s32.totalorder %s37, 0
      %p85 = por %p83, %p84
      %s87 = sadd.s32 %s86, 1
      %p90 = scmp.eq.s32.totalorder %s31, 1
      %p91 = scmp.ne.s32.totalorder %s86, %s88
      %p92 = scmp.eq.s32.totalorder %s31, 0
      %p93 = por %p91, %p92
      %p94 = scmp.ne.s32.totalorder %s86, %s88
      %p95 = scmp.eq.s32.totalorder %s36, 1
      %p96 = por %p94, %p95
      %p97 = scmp.ne.s32.totalorder %s88, %s89
      %p98 = scmp.eq.s32.totalorder %s36, 0
      %p99 = por %p97, %p98
      %p100 = scmp.ne.s32.totalorder %s88, %s89
      %p101 = scmp.eq.s32.totalorder %s37, 1
      %p102 = por %p100, %p101
      %p104 = scmp.ne.s32.totalorder %s89, %s103
      %p105 = scmp.eq.s32.totalorder %s37, 0
      %p106 = por %p104, %p105
      %s108 = sadd.s32 %s107, 1
      %p111 = scmp.eq.s32.totalorder %s31, 1
      %p112 = scmp.ne.s32.totalorder %s107, %s109
      %p113 = scmp.eq.s32.totalorder %s31, 0
      %p114 = por %p112, %p113
      %p115 = scmp.ne.s32.totalorder %s107, %s109
      %p116 = scmp.eq.s32.totalorder %s36, 1
      %p117 = por %p115, %p116
      %p118 = scmp.ne.s32.totalorder %s109, %s110
      %p119 = scmp.eq.s32.totalorder %s36, 0
      %p120 = por %p118, %p119
      %p121 = scmp.ne.s32.totalorder %s109, %s110
      %p122 = scmp.eq.s32.totalorder %s37, 1
      %p123 = por %p121, %p122
      %p125 = scmp.ne.s32.totalorder %s110, %s124
      %p126 = scmp.eq.s32.totalorder %s37, 0
      %p127 = por %p125, %p126
      %s129 = sadd.s32 %s128, 1
      %p132 = scmp.eq.s32.totalorder %s31, 1
      %p133 = scmp.ne.s32.totalorder %s128, %s130
      %p134 = scmp.eq.s32.totalorder %s31, 0
      %p135 = por %p133, %p134
      %p136 = scmp.ne.s32.totalorder %s128, %s130
      %p137 = scmp.eq.s32.totalorder %s36, 1
      %p138 = por %p136, %p137
      %p139 = scmp.ne.s32.totalorder %s130, %s131
      %p140 = scmp.eq.s32.totalorder %s36, 0
      %p141 = por %p139, %p140
      %p142 = scmp.ne.s32.totalorder %s130, %s131
      %p143 = scmp.eq.s32.totalorder %s37, 1
      %p144 = por %p142, %p143
      %p146 = scmp.ne.s32.totalorder %s131, %s145
      %p147 = scmp.eq.s32.totalorder %s37, 0
      %p148 = por %p146, %p147
      %s150 = sadd.s32 %s149, 1
      %p153 = scmp.eq.s32.totalorder %s31, 1
      %p154 = scmp.ne.s32.totalorder %s149, %s151
      %p155 = scmp.eq.s32.totalorder %s31, 0
      %p156 = por %p154, %p155
      %p157 = scmp.ne.s32.totalorder %s149, %s151
      %p158 = scmp.eq.s32.totalorder %s36, 1
      %p159 = por %p157, %p158
      %p160 = scmp.ne.s32.totalorder %s151, %s152
      %p161 = scmp.eq.s32.totalorder %s36, 0
      %p162 = por %p160, %p161
      %p163 = scmp.ne.s32.totalorder %s151, %s152
      %p164 = scmp.eq.s32.totalorder %s37, 1
      %p165 = por %p163, %p164
      %p167 = scmp.ne.s32.totalorder %s152, %s166
      %p168 = scmp.eq.s32.totalorder %s37, 0
      %p169 = por %p167, %p168
      %s171 = sadd.s32 %s170, 1
      %p174 = scmp.eq.s32.totalorder %s31, 1
      %p175 = scmp.ne.s32.totalorder %s170, %s172
      %p176 = scmp.eq.s32.totalorder %s31, 0
      %p177 = por %p175, %p176
      %p178 = scmp.ne.s32.totalorder %s170, %s172
      %p179 = scmp.eq.s32.totalorder %s36, 1
      %p180 = por %p178, %p179
      %p181 = scmp.ne.s32.totalorder %s172, %s173
      %p182 = scmp.eq.s32.totalorder %s36, 0
      %p183 = por %p181, %p182
      %p184 = scmp.ne.s32.totalorder %s172, %s173
      %p185 = scmp.eq.s32.totalorder %s37, 1
      %p186 = por %p184, %p185
      %p188 = scmp.ne.s32.totalorder %s173, %s187
      %p189 = scmp.eq.s32.totalorder %s37, 0
      %p190 = por %p188, %p189
      %s192 = sadd.s32 %s191, 1
      %p195 = scmp.eq.s32.totalorder %s31, 1
      %p196 = scmp.ne.s32.totalorder %s191, %s193
      %p197 = scmp.eq.s32.totalorder %s31, 0
      %p198 = por %p196, %p197
      %p199 = scmp.ne.s32.totalorder %s191, %s193
      %p200 = scmp.eq.s32.totalorder %s36, 1
      %p201 = por %p199, %p200
      %p202 = scmp.ne.s32.totalorder %s193, %s194
      %p203 = scmp.eq.s32.totalorder %s36, 0
      %p204 = por %p202, %p203
      %p205 = scmp.ne.s32.totalorder %s193, %s194
      %p206 = scmp.eq.s32.totalorder %s37, 1
      %p207 = por %p205, %p206
      %p209 = scmp.ne.s32.totalorder %s194, %s208
      %p210 = scmp.eq.s32.totalorder %s37, 0
      %p211 = por %p209, %p210
      %s213 = sadd.s32 %s212, 1
      %p216 = scmp.eq.s32.totalorder %s31, 1
      %p217 = scmp.ne.s32.totalorder %s212, %s214
      %p218 = scmp.eq.s32.totalorder %s31, 0
      %p219 = por %p217, %p218
      %p220 = scmp.ne.s32.totalorder %s212, %s214
      %p221 = scmp.eq.s32.totalorder %s36, 1
      %p222 = por %p220, %p221
      %p223 = scmp.ne.s32.totalorder %s214, %s215
      %p224 = scmp.eq.s32.totalorder %s36, 0
      %p225 = por %p223, %p224
      %p226 = scmp.ne.s32.totalorder %s214, %s215
      %p227 = scmp.eq.s32.totalorder %s37, 1
      %p228 = por %p226, %p227
      %p230 = scmp.ne.s32.totalorder %s215, %s229
      %p231 = scmp.eq.s32.totalorder %s37, 0
      %p232 = por %p230, %p231
      %s234 = sadd.s32 %s233, 1
      %p237 = scmp.eq.s32.totalorder %s31, 1
      %p238 = scmp.ne.s32.totalorder %s233, %s235
      %p239 = scmp.eq.s32.totalorder %s31, 0
      %p240 = por %p238, %p239
      %p241 = scmp.ne.s32.totalorder %s233, %s235
      %p242 = scmp.eq.s32.totalorder %s36, 1
      %p243 = por %p241, %p242
      %p244 = scmp.ne.s32.totalorder %s235, %s236
      %p245 = scmp.eq.s32.totalorder %s36, 0
      %p246 = por %p244, %p245
      %p247 = scmp.ne.s32.totalorder %s235, %s236
      %p248 = scmp.eq.s32.totalorder %s37, 1
      %p249 = por %p247, %p248
      %p251 = scmp.ne.s32.totalorder %s236, %s250
      %p252 = scmp.eq.s32.totalorder %s37, 0
      %p253 = por %p251, %p252
      %s255 = sadd.s32 %s254, 1
      %p258 = scmp.eq.s32.totalorder %s31, 1
      %p259 = scmp.ne.s32.totalorder %s254, %s256
      %p260 = scmp.eq.s32.totalorder %s31, 0
      %p261 = por %p259, %p260
      %p262 = scmp.ne.s32.totalorder %s254, %s256
      %p263 = scmp.eq.s32.totalorder %s36, 1
      %p264 = por %p262, %p263
      %p265 = scmp.ne.s32.totalorder %s256, %s257
      %p266 = scmp.eq.s32.totalorder %s36, 0
      %p267 = por %p265, %p266
      %p268 = scmp.ne.s32.totalorder %s256, %s257
      %p269 = scmp.eq.s32.totalorder %s37, 1
      %p270 = por %p268, %p269
      %p272 = scmp.ne.s32.totalorder %s257, %s271
      %p273 = scmp.eq.s32.totalorder %s37, 0
      %p274 = por %p272, %p273
      %s276 = sadd.s32 %s275, 1
      %p279 = scmp.eq.s32.totalorder %s31, 1
      %p280 = scmp.ne.s32.totalorder %s275, %s277
      %p281 = scmp.eq.s32.totalorder %s31, 0
      %p282 = por %p280, %p281
      %p283 = scmp.ne.s32.totalorder %s275, %s277
      %p284 = scmp.eq.s32.totalorder %s36, 1
      %p285 = por %p283, %p284
      %p286 = scmp.ne.s32.totalorder %s277, %s278
      %p287 = scmp.eq.s32.totalorder %s36, 0
      %p288 = por %p286, %p287
      %p289 = scmp.ne.s32.totalorder %s277, %s278
      %p290 = scmp.eq.s32.totalorder %s37, 1
      %p291 = por %p289, %p290
      %p293 = scmp.ne.s32.totalorder %s278, %s292
      %p294 = scmp.eq.s32.totalorder %s37, 0
      %p295 = por %p293, %p294
      %s297 = sadd.s32 %s296, 1
      %p300 = scmp.eq.s32.totalorder %s31, 1
      %p301 = scmp.ne.s32.totalorder %s296, %s298
      %p302 = scmp.eq.s32.totalorder %s31, 0
      %p303 = por %p301, %p302
      %p304 = scmp.ne.s32.totalorder %s296, %s298
      %p305 = scmp.eq.s32.totalorder %s36, 1
      %p306 = por %p304, %p305
      %p307 = scmp.ne.s32.totalorder %s298, %s299
      %p308 = scmp.eq.s32.totalorder %s36, 0
      %p309 = por %p307, %p308
      %p310 = scmp.ne.s32.totalorder %s298, %s299
      %p311 = scmp.eq.s32.totalorder %s37, 1
      %p312 = por %p310, %p311
      %p314 = scmp.ne.s32.totalorder %s299, %s313
      %p315 = scmp.eq.s32.totalorder %s37, 0
      %p316 = por %p314, %p315
      %s318 = sadd.s32 %s317, 1
      %p321 = scmp.eq.s32.totalorder %s31, 1
      %p322 = scmp.ne.s32.totalorder %s317, %s319
      %p323 = scmp.eq.s32.totalorder %s31, 0
      %p324 = por %p322, %p323
      %p325 = scmp.ne.s32.totalorder %s317, %s319
      %p326 = scmp.eq.s32.totalorder %s36, 1
      %p327 = por %p325, %p326
      %p328 = scmp.ne.s32.totalorder %s319, %s320
      %p329 = scmp.eq.s32.totalorder %s36, 0
      %p330 = por %p328, %p329
      %p331 = scmp.ne.s32.totalorder %s319, %s320
      %p332 = scmp.eq.s32.totalorder %s37, 1
      %p333 = por %p331, %p332
      %p335 = scmp.ne.s32.totalorder %s320, %s334
      %p336 = scmp.eq.s32.totalorder %s37, 0
      %p337 = por %p335, %p336
      %s339 = sadd.s32 %s338, 1
      %p342 = scmp.eq.s32.totalorder %s31, 1
      %p343 = scmp.ne.s32.totalorder %s338, %s340
      %p344 = scmp.eq.s32.totalorder %s31, 0
      %p345 = por %p343, %p344
      %p346 = scmp.ne.s32.totalorder %s338, %s340
      %p347 = scmp.eq.s32.totalorder %s36, 1
      %p348 = por %p346, %p347
      %p349 = scmp.ne.s32.totalorder %s340, %s341
      %p350 = scmp.eq.s32.totalorder %s36, 0
      %p351 = por %p349, %p350
      %p352 = scmp.ne.s32.totalorder %s340, %s341
      %p353 = scmp.eq.s32.totalorder %s37, 1
      %p354 = por %p352, %p353
      %p356 = scmp.ne.s32.totalorder %s341, %s355
      %p357 = scmp.eq.s32.totalorder %s37, 0
      %p358 = por %p356, %p357
      %s360 = sadd.s32 %s359, 1
      %p363 = scmp.eq.s32.totalorder %s31, 1
      %p364 = scmp.ne.s32.totalorder %s359, %s361
      %p365 = scmp.eq.s32.totalorder %s31, 0
      %p366 = por %p364, %p365
      %p367 = scmp.ne.s32.totalorder %s359, %s361
      %p368 = scmp.eq.s32.totalorder %s36, 1
      %p369 = por %p367, %p368
      %p370 = scmp.ne.s32.totalorder %s361, %s362
      %p371 = scmp.eq.s32.totalorder %s36, 0
      %p372 = por %p370, %p371
      %p373 = scmp.ne.s32.totalorder %s361, %s362
      %p374 = scmp.eq.s32.totalorder %s37, 1
      %p375 = por %p373, %p374
      %p377 = scmp.ne.s32.totalorder %s362, %s376
      %p378 = scmp.eq.s32.totalorder %s37, 0
      %p379 = por %p377, %p378
      %s381 = sadd.s32 %s380, 1
      %p384 = scmp.eq.s32.totalorder %s31, 1
      %p385 = scmp.ne.s32.totalorder %s380, %s382
      %p386 = scmp.eq.s32.totalorder %s31, 0
      %p387 = por %p385, %p386
      %p388 = scmp.ne.s32.totalorder %s380, %s382
      %p389 = scmp.eq.s32.totalorder %s36, 1
      %p390 = por %p388, %p389
      %p391 = scmp.ne.s32.totalorder %s382, %s383
      %p392 = scmp.eq.s32.totalorder %s36, 0
      %p393 = por %p391, %p392
      %p394 = scmp.ne.s32.totalorder %s382, %s383
      %p395 = scmp.eq.s32.totalorder %s37, 1
      %p396 = por %p394, %p395
      %p398 = scmp.ne.s32.totalorder %s383, %s397
      %p399 = scmp.eq.s32.totalorder %s37, 0
      %p400 = por %p398, %p399
      %s401 = ssub.s32 %s31, %s38
      %p402 = scmp.eq.s32.totalorder %s401, 0
      %s404 = sadd.s32 %s403, 1
      %s405 = scalar_select %p402, %s403, %s404
      %p408 = pneg %p402
      %p409 = scmp.eq.s32.totalorder %s31, 1
      %p410 = por %p408, %p409
      %p411 = scmp.ne.s32.totalorder %s403, %s406
      %p412 = scmp.eq.s32.totalorder %s31, 0
      %p413 = por %p411, %p412
      %p414 = scmp.ne.s32.totalorder %s403, %s406
      %p415 = scmp.eq.s32.totalorder %s36, 1
      %p416 = por %p414, %p415
      %p417 = scmp.ne.s32.totalorder %s406, %s407
      %p418 = scmp.eq.s32.totalorder %s36, 0
      %p419 = por %p417, %p418
      %p420 = scmp.ne.s32.totalorder %s406, %s407
      %p421 = scmp.eq.s32.totalorder %s37, 1
      %p422 = por %p420, %p421
      %p424 = scmp.ne.s32.totalorder %s407, %s423
      %p425 = scmp.eq.s32.totalorder %s37, 0
      %p426 = por %p424, %p425
      %p427 = scmp.le.s32.totalorder 1, %s31
      %p428 = scmp.lt.s32.totalorder %s31, 3
      %p429 = pnand %p427, %p428
      %p430 = pneg %p429
      // Predicated region
      $region9: #{tpu_custom_call.1} parent=5 // pred_check
        _
      $region10: #{tpu_custom_call.1} parent=5 // pred_check_branch
        %432 = sbr.rel (%p429) target = $region12
      $region11: #{tpu_custom_call.1} parent=5 // pred_region
        %s433 = ssub.s32 %s31, 1
        // Predicated region
        $region13: #{tpu_custom_call.1} parent=11 // pred_check
          %p434 = pneg %p78
        $region14: #{tpu_custom_call.1} parent=11 // pred_check_branch
          %436 = sbr.rel (%p434) target = $region16
        $region15: #{tpu_custom_call.1} parent=11 // pred_region
          %s438 = ssub.s32 2048, 2048
          %439 = vsyncadd [#allocation3], %s438
          %s440 = sshll.u32 [#allocation2], 4
          %s441 = int_to_ptr.vmem [resolvable:$true] %s440
          %446 = dma.hbm_to_vmem [thread:$0]  %s1, 2048, %s441, [#allocation3], 1024, 1024, 64
        $region16: #{tpu_custom_call.1} parent=11 // pred_fallthru
          _
        // Predicated region
        $region17: #{tpu_custom_call.1} parent=11 // pred_check
          %p447 = pneg %p99
        $region18: #{tpu_custom_call.1} parent=11 // pred_check_branch
          %449 = sbr.rel (%p447) target = $region20
        $region19: #{tpu_custom_call.1} parent=11 // pred_region
          %s451 = ssub.s32 256, 256
          %452 = vsyncadd [#allocation6], %s451
          %s453 = sshll.u32 [#allocation5], 4
          %s454 = int_to_ptr.vmem [resolvable:$true] %s453
          %459 = dma.hbm_to_vmem [thread:$0]  %s2, 256, %s454, [#allocation6], 128, 128, 8
        $region20: #{tpu_custom_call.1} parent=11 // pred_fallthru
          _
        // Predicated region
        $region21: #{tpu_custom_call.1} parent=11 // pred_check
          %p460 = pneg %p120
        $region22: #{tpu_custom_call.1} parent=11 // pred_check_branch
          %462 = sbr.rel (%p460) target = $region24
        $region23: #{tpu_custom_call.1} parent=11 // pred_region
          %s464 = ssub.s32 256, 256
          %465 = vsyncadd [#allocation6], %s464
          %s466 = sshll.u32 [#allocation7], 4
          %s467 = int_to_ptr.vmem [resolvable:$true] %s466
          %472 = dma.hbm_to_vmem [thread:$0]  %s3, 256, %s467, [#allocation6], 128, 128, 8
        $region24: #{tpu_custom_call.1} parent=11 // pred_fallthru
          _
        // Predicated region
        $region25: #{tpu_custom_call.1} parent=11 // pred_check
          %p473 = pneg %p141
        $region26: #{tpu_custom_call.1} parent=11 // pred_check_branch
          %475 = sbr.rel (%p473) target = $region28
        $region27: #{tpu_custom_call.1} parent=11 // pred_region
          _
        $region28: #{tpu_custom_call.1} parent=11 // pred_fallthru
          _
        // Predicated region
        $region29: #{tpu_custom_call.1} parent=11 // pred_check
          %p476 = pneg %p162
        $region30: #{tpu_custom_call.1} parent=11 // pred_check_branch
          %478 = sbr.rel (%p476) target = $region32
        $region31: #{tpu_custom_call.1} parent=11 // pred_region
          _
        $region32: #{tpu_custom_call.1} parent=11 // pred_fallthru
          _
        // Predicated region
        $region33: #{tpu_custom_call.1} parent=11 // pred_check
          %p479 = pneg %p183
        $region34: #{tpu_custom_call.1} parent=11 // pred_check_branch
          %481 = sbr.rel (%p479) target = $region36
        $region35: #{tpu_custom_call.1} parent=11 // pred_region
          _
        $region36: #{tpu_custom_call.1} parent=11 // pred_fallthru
          _
        // Predicated region
        $region37: #{tpu_custom_call.1} parent=11 // pred_check
          %p482 = pneg %p204
        $region38: #{tpu_custom_call.1} parent=11 // pred_check_branch
          %484 = sbr.rel (%p482) target = $region40
        $region39: #{tpu_custom_call.1} parent=11 // pred_region
          _
        $region40: #{tpu_custom_call.1} parent=11 // pred_fallthru
          _
        // Predicated region
        $region41: #{tpu_custom_call.1} parent=11 // pred_check
          %p485 = pneg %p225
        $region42: #{tpu_custom_call.1} parent=11 // pred_check_branch
          %487 = sbr.rel (%p485) target = $region44
        $region43: #{tpu_custom_call.1} parent=11 // pred_region
          %s489 = ssub.s32 256, 256
          %490 = vsyncadd [#allocation9], %s489
          %s491 = sshll.u32 [#allocation8], 4
          %s492 = int_to_ptr.vmem [resolvable:$true] %s491
          %497 = dma.hbm_to_vmem [thread:$0]  %s8, 256, %s492, [#allocation9], 128, 128, 8
        $region44: #{tpu_custom_call.1} parent=11 // pred_fallthru
          _
        // Predicated region
        $region45: #{tpu_custom_call.1} parent=11 // pred_check
          %p498 = pneg %p246
        $region46: #{tpu_custom_call.1} parent=11 // pred_check_branch
          %500 = sbr.rel (%p498) target = $region48
        $region47: #{tpu_custom_call.1} parent=11 // pred_region
          %s502 = ssub.s32 256, 256
          %503 = vsyncadd [#allocation9], %s502
          %s504 = sshll.u32 [#allocation10], 4
          %s505 = int_to_ptr.vmem [resolvable:$true] %s504
          %510 = dma.hbm_to_vmem [thread:$0]  %s9, 256, %s505, [#allocation9], 128, 128, 8
        $region48: #{tpu_custom_call.1} parent=11 // pred_fallthru
          _
        // Predicated region
        $region49: #{tpu_custom_call.1} parent=11 // pred_check
          %p511 = pneg %p267
        $region50: #{tpu_custom_call.1} parent=11 // pred_check_branch
          %513 = sbr.rel (%p511) target = $region52
        $region51: #{tpu_custom_call.1} parent=11 // pred_region
          _
        $region52: #{tpu_custom_call.1} parent=11 // pred_fallthru
          _
        // Predicated region
        $region53: #{tpu_custom_call.1} parent=11 // pred_check
          %p514 = pneg %p288
        $region54: #{tpu_custom_call.1} parent=11 // pred_check_branch
          %516 = sbr.rel (%p514) target = $region56
        $region55: #{tpu_custom_call.1} parent=11 // pred_region
          %s518 = ssub.s32 16, 16
          %519 = vsyncadd [#allocation12], %s518
          %s521 = sshll.u32 [#allocation11], 4
          %s522 = int_to_ptr.vmem [resolvable:$true] %s521
          %524 = dma.hbm_to_vmem [thread:$0]  %s11, 16, %s522, [#allocation12]
        $region56: #{tpu_custom_call.1} parent=11 // pred_fallthru
          _
        // Predicated region
        $region57: #{tpu_custom_call.1} parent=11 // pred_check
          %p525 = pneg %p309
        $region58: #{tpu_custom_call.1} parent=11 // pred_check_branch
          %527 = sbr.rel (%p525) target = $region60
        $region59: #{tpu_custom_call.1} parent=11 // pred_region
          %s529 = ssub.s32 64, 64
          %530 = vsyncadd [#allocation12], %s529
          %s532 = sshll.u32 [#allocation13], 4
          %s533 = int_to_ptr.vmem [resolvable:$true] %s532
          %535 = dma.hbm_to_vmem [thread:$0]  %s12, 64, %s533, [#allocation12]
        $region60: #{tpu_custom_call.1} parent=11 // pred_fallthru
          _
        // Predicated region
        $region61: #{tpu_custom_call.1} parent=11 // pred_check
          %p536 = pneg %p330
        $region62: #{tpu_custom_call.1} parent=11 // pred_check_branch
          %538 = sbr.rel (%p536) target = $region64
        $region63: #{tpu_custom_call.1} parent=11 // pred_region
          %s540 = ssub.s32 2048, 2048
          %541 = vsyncadd [#allocation15], %s540
          %s542 = sshll.u32 [#allocation14], 4
          %s543 = int_to_ptr.vmem [resolvable:$true] %s542
          %548 = dma.hbm_to_vmem [thread:$0]  %s13, 2048, %s543, [#allocation15], 512, 512, 32
        $region64: #{tpu_custom_call.1} parent=11 // pred_fallthru
          _
        // Predicated region
        $region65: #{tpu_custom_call.1} parent=11 // pred_check
          %p549 = pneg %p351
        $region66: #{tpu_custom_call.1} parent=11 // pred_check_branch
          %551 = sbr.rel (%p549) target = $region68
        $region67: #{tpu_custom_call.1} parent=11 // pred_region
          %s553 = ssub.s32 1024, 1024
          %554 = vsyncadd [#allocation15], %s553
          %s555 = sshll.u32 [#allocation16], 4
          %s556 = int_to_ptr.vmem [resolvable:$true] %s555
          %561 = dma.hbm_to_vmem [thread:$0]  %s14, 1024, %s556, [#allocation15], 512, 512, 32
        $region68: #{tpu_custom_call.1} parent=11 // pred_fallthru
          _
        // Predicated region
        $region69: #{tpu_custom_call.1} parent=11 // pred_check
          %p562 = pneg %p372
        $region70: #{tpu_custom_call.1} parent=11 // pred_check_branch
          %564 = sbr.rel (%p562) target = $region72
        $region71: #{tpu_custom_call.1} parent=11 // pred_region
          _
        $region72: #{tpu_custom_call.1} parent=11 // pred_fallthru
          _
        // Predicated region
        $region73: #{tpu_custom_call.1} parent=11 // pred_check
          %p565 = pneg %p393
        $region74: #{tpu_custom_call.1} parent=11 // pred_check_branch
          %567 = sbr.rel (%p565) target = $region76
        $region75: #{tpu_custom_call.1} parent=11 // pred_region
          _
        $region76: #{tpu_custom_call.1} parent=11 // pred_fallthru
          _
      $region12: #{tpu_custom_call.1} parent=5 // pred_fallthru
        _
      %p568 = scmp.lt.s32.totalorder %s31, 2
      // Predicated region
      $region77: #{tpu_custom_call.1} parent=5 // pred_check
        %p569 = pneg %p568
      $region78: #{tpu_custom_call.1} parent=5 // pred_check_branch
        %571 = sbr.rel (%p569) target = $region80
      $region79: #{tpu_custom_call.1} parent=5 // pred_region
        // Predicated region
        $region81: #{tpu_custom_call.1} parent=79 // pred_check
          %p572 = pneg %p51
        $region82: #{tpu_custom_call.1} parent=79 // pred_check_branch
          %574 = sbr.rel (%p572) target = $region84
        $region83: #{tpu_custom_call.1} parent=79 // pred_region
          %p575 = scmp.lt.s32.totalorder %s31, 1
          %s576 = scalar_select %p575, %s31, 1
          %s577 = smul.addr %s576, 8
          %s578 = smul.addr %s577, 8
          %s579 = scalar_lea.vmem %s0, %s578
        $region84: #{tpu_custom_call.1} parent=79 // pred_fallthru
          _
      $region80: #{tpu_custom_call.1} parent=5 // pred_fallthru
        _
      %p580 = scmp.le.s32.totalorder 1, %s31
      %p581 = scmp.lt.s32.totalorder %s31, 3
      %p582 = pnand %p580, %p581
      %p583 = pneg %p582
      // Predicated region
      $region85: #{tpu_custom_call.1} parent=5 // pred_check
        _
      $region86: #{tpu_custom_call.1} parent=5 // pred_check_branch
        %585 = sbr.rel (%p582) target = $region88
      $region87: #{tpu_custom_call.1} parent=5 // pred_region
        %s586 = ssub.s32 %s31, 1
        // Predicated region
        $region89: #{tpu_custom_call.1} parent=87 // pred_check
          %p587 = pneg %p78
        $region90: #{tpu_custom_call.1} parent=87 // pred_check_branch
          %589 = sbr.rel (%p587) target = $region92
        $region91: #{tpu_custom_call.1} parent=87 // pred_region
          %590 = dma.done [#allocation3], 2048
        $region92: #{tpu_custom_call.1} parent=87 // pred_fallthru
          _
        // Predicated region
        $region93: #{tpu_custom_call.1} parent=87 // pred_check
          %p591 = pneg %p99
        $region94: #{tpu_custom_call.1} parent=87 // pred_check_branch
          %593 = sbr.rel (%p591) target = $region96
        $region95: #{tpu_custom_call.1} parent=87 // pred_region
          %594 = dma.done [#allocation6], 256
        $region96: #{tpu_custom_call.1} parent=87 // pred_fallthru
          _
        // Predicated region
        $region97: #{tpu_custom_call.1} parent=87 // pred_check
          %p595 = pneg %p120
        $region98: #{tpu_custom_call.1} parent=87 // pred_check_branch
          %597 = sbr.rel (%p595) target = $region100
        $region99: #{tpu_custom_call.1} parent=87 // pred_region
          %598 = dma.done [#allocation6], 256
        $region100: #{tpu_custom_call.1} parent=87 // pred_fallthru
          _
        // Predicated region
        $region101: #{tpu_custom_call.1} parent=87 // pred_check
          %p599 = pneg %p225
        $region102: #{tpu_custom_call.1} parent=87 // pred_check_branch
          %601 = sbr.rel (%p599) target = $region104
        $region103: #{tpu_custom_call.1} parent=87 // pred_region
          %602 = dma.done [#allocation9], 256
        $region104: #{tpu_custom_call.1} parent=87 // pred_fallthru
          _
        // Predicated region
        $region105: #{tpu_custom_call.1} parent=87 // pred_check
          %p603 = pneg %p246
        $region106: #{tpu_custom_call.1} parent=87 // pred_check_branch
          %605 = sbr.rel (%p603) target = $region108
        $region107: #{tpu_custom_call.1} parent=87 // pred_region
          %606 = dma.done [#allocation9], 256
        $region108: #{tpu_custom_call.1} parent=87 // pred_fallthru
          _
        // Predicated region
        $region109: #{tpu_custom_call.1} parent=87 // pred_check
          %p607 = pneg %p288
        $region110: #{tpu_custom_call.1} parent=87 // pred_check_branch
          %609 = sbr.rel (%p607) target = $region112
        $region111: #{tpu_custom_call.1} parent=87 // pred_region
          %610 = dma.done [#allocation12], 16
        $region112: #{tpu_custom_call.1} parent=87 // pred_fallthru
          _
        // Predicated region
        $region113: #{tpu_custom_call.1} parent=87 // pred_check
          %p611 = pneg %p309
        $region114: #{tpu_custom_call.1} parent=87 // pred_check_branch
          %613 = sbr.rel (%p611) target = $region116
        $region115: #{tpu_custom_call.1} parent=87 // pred_region
          %614 = dma.done [#allocation12], 64
        $region116: #{tpu_custom_call.1} parent=87 // pred_fallthru
          _
        // Predicated region
        $region117: #{tpu_custom_call.1} parent=87 // pred_check
          %p615 = pneg %p330
        $region118: #{tpu_custom_call.1} parent=87 // pred_check_branch
          %617 = sbr.rel (%p615) target = $region120
        $region119: #{tpu_custom_call.1} parent=87 // pred_region
          %618 = dma.done [#allocation15], 2048
        $region120: #{tpu_custom_call.1} parent=87 // pred_fallthru
          _
        // Predicated region
        $region121: #{tpu_custom_call.1} parent=87 // pred_check
          %p619 = pneg %p351
        $region122: #{tpu_custom_call.1} parent=87 // pred_check_branch
          %621 = sbr.rel (%p619) target = $region124
        $region123: #{tpu_custom_call.1} parent=87 // pred_region
          %622 = dma.done [#allocation15], 1024
        $region124: #{tpu_custom_call.1} parent=87 // pred_fallthru
          _
        %p623 = scmp.lt.s32.totalorder %s36, 1
        %s624 = scalar_select %p623, %s36, 1
        %s625 = smul.addr %s624, 8
        %s626 = smul.addr %s625, 8
        %s627 = scalar_lea.vmem %s0, %s626
        %p628 = pneg %p57
        %p629 = pneg %p54
        %p630 = pneg %p78
        %p631 = pneg %p75
        %p632 = pneg %p99
        %p633 = pneg %p96
        %p634 = pneg %p120
        %p635 = pneg %p117
        %p636 = pneg %p141
        %p637 = pneg %p138
        %p638 = pneg %p162
        %p639 = pneg %p159
        %p640 = pneg %p183
        %p641 = pneg %p180
        %p642 = pneg %p204
        %p643 = pneg %p201
        %p644 = pneg %p225
        %p645 = pneg %p222
        %p646 = pneg %p246
        %p647 = pneg %p243
        %p648 = pneg %p267
        %p649 = pneg %p264
        %p650 = pneg %p288
        %p651 = pneg %p285
        %p652 = pneg %p309
        %p653 = pneg %p306
        %p654 = pneg %p330
        %p655 = pneg %p327
        %p656 = pneg %p351
        %p657 = pneg %p348
        %p658 = pneg %p372
        %p659 = pneg %p369
        %p660 = pneg %p393
        %p661 = pneg %p390
        %p662 = pneg %p419
        %p663 = pneg %p416
        %s664 = sand.u32 %s406, 1
        %s665 = scalar_lea.sflag [#allocation4], %s664
        %s666 = sand.u32 %s406, 1
        %s667 = smul.addr %s666, 64
        %s668 = scalar_lea.vmem [#allocation17], %s667
        %p669 = scmp.lt.s32.totalorder %s36, 1
        %s670 = scalar_select %p669, %s36, 1
        %s671 = smul.addr %s670, 8
        %s672 = smul.addr %s671, 8
        %s673 = scalar_lea.vmem %s0, %s672
        %v674 = vld [vmem:[%s673] sm:$0xff]
        %v675 = vld [vmem:[%s673 + $0x8] sm:$0xff]
        %v676 = vld [vmem:[%s673 + $0x10] sm:$0xff]
        %v677 = vld [vmem:[%s673 + $0x18] sm:$0xff]
        %v678 = vld [vmem:[%s673 + $0x20] sm:$0xff]
        %v679 = vld [vmem:[%s673 + $0x28] sm:$0xff]
        %v680 = vld [vmem:[%s673 + $0x30] sm:$0xff]
        %v681 = vld [vmem:[%s673 + $0x38] sm:$0xff]
        %v682 = vld [vmem:[#allocation2] sm:$0xff]
        %v683 = vld [vmem:[#allocation2 + $0x8] sm:$0xff]
        %v684 = vld [vmem:[#allocation2 + $0x10] sm:$0xff]
        %v685 = vld [vmem:[#allocation2 + $0x18] sm:$0xff]
        %v686 = vld [vmem:[#allocation2 + $0x20] sm:$0xff]
        %v687 = vld [vmem:[#allocation2 + $0x28] sm:$0xff]
        %v688 = vld [vmem:[#allocation2 + $0x30] sm:$0xff]
        %v689 = vld [vmem:[#allocation2 + $0x38] sm:$0xff]
        %v690 = vld [vmem:[#allocation2 + $0x40] sm:$0xff]
        %v691 = vld [vmem:[#allocation2 + $0x48] sm:$0xff]
        %v692 = vld [vmem:[#allocation2 + $0x50] sm:$0xff]
        %v693 = vld [vmem:[#allocation2 + $0x58] sm:$0xff]
        %v694 = vld [vmem:[#allocation2 + $0x60] sm:$0xff]
        %v695 = vld [vmem:[#allocation2 + $0x68] sm:$0xff]
        %v696 = vld [vmem:[#allocation2 + $0x70] sm:$0xff]
        %v697 = vld [vmem:[#allocation2 + $0x78] sm:$0xff]
        %698 = vmatprep.subr.mxu0 %v683
        %699 = vmatpush1.xpose.msra.mxu0 %v682
        %700 = vmatprep.subr.mxu0 %v691
        %701 = vmatpush1.xpose.msra.mxu0 %v690
        %702 = vmatprep.subr.mxu0 0.0
        %703 = vmatpush1.xpose.msra.mxu0 0.0
        %704 = vmatprep.subr.mxu0 0.0
        %705 = vmatpush1.xpose.msra.mxu0 0.0
        %706 = vmatprep.subr.mxu0 0.0
        %707 = vmatpush1.xpose.msra.mxu0 0.0
        %708 = vmatprep.subr.mxu0 0.0
        %709 = vmatpush1.xpose.msra.mxu0 0.0
        %710 = vmatprep.subr.mxu0 0.0
        %711 = vmatpush1.xpose.msra.mxu0 0.0
        %712 = vmatprep.subr.mxu0 0.0
        %713 = vmatpush1.xpose.msra.mxu0 0.0
        %714 = vmatprep.subr.mxu0 0.0
        %715 = vmatpush1.xpose.msra.mxu0 0.0
        %716 = vmatprep.subr.mxu0 0.0
        %717 = vmatpush1.xpose.msra.mxu0 0.0
        %718 = vmatprep.subr.mxu0 0.0
        %719 = vmatpush1.xpose.msra.mxu0 0.0
        %720 = vmatprep.subr.mxu0 0.0
        %721 = vmatpush1.xpose.msra.mxu0 0.0
        %722 = vmatprep.subr.mxu0 0.0
        %723 = vmatpush1.xpose.msra.mxu0 0.0
        %724 = vmatprep.subr.mxu0 0.0
        %725 = vmatpush1.xpose.msra.mxu0 0.0
        %726 = vmatprep.subr.mxu0 0.0
        %727 = vmatpush1.xpose.msra.mxu0 0.0
        %728 = vmatprep.subr.mxu0 0.0
        %729 = vmatpush1.xpose.msra.mxu0 0.0
        %730 = vmatprep.subr.mxu0 0.0
        %731 = vmatpush1.xpose.msra.mxu0 0.0
        %732 = vmatprep.subr.mxu0 0.0
        %733 = vmatpush1.xpose.msra.mxu0 0.0
        %734 = vmatprep.subr.mxu0 0.0
        %735 = vmatpush1.xpose.msra.mxu0 0.0
        %736 = vmatprep.subr.mxu0 0.0
        %737 = vmatpush1.xpose.msra.mxu0 0.0
        %738 = vmatprep.subr.mxu0 0.0
        %739 = vmatpush1.xpose.msra.mxu0 0.0
        %740 = vmatprep.subr.mxu0 0.0
        %741 = vmatpush1.xpose.msra.mxu0 0.0
        %742 = vmatprep.subr.mxu0 0.0
        %743 = vmatpush1.xpose.msra.mxu0 0.0
        %744 = vmatprep.subr.mxu0 0.0
        %745 = vmatpush1.xpose.msra.mxu0 0.0
        %746 = vmatprep.subr.mxu0 0.0
        %747 = vmatpush1.xpose.msra.mxu0 0.0
        %748 = vmatprep.subr.mxu0 0.0
        %749 = vmatpush1.xpose.msra.mxu0 0.0
        %750 = vmatprep.subr.mxu0 0.0
        %751 = vmatpush1.xpose.msra.mxu0 0.0
        %752 = vmatprep.subr.mxu0 0.0
        %753 = vmatpush1.xpose.msra.mxu0 0.0
        %754 = vmatprep.subr.mxu0 0.0
        %755 = vmatpush1.xpose.msra.mxu0 0.0
        %756 = vmatprep.subr.mxu0 0.0
        %757 = vmatpush1.xpose.msra.mxu0 0.0
        %758 = vmatprep.subr.mxu0 0.0
        %759 = vmatpush1.xpose.msra.mxu0 0.0
        %760 = vmatprep.subr.mxu0 0.0
        %761 = vmatpush1.xpose.msra.mxu0 0.0
        %762 = vmatprep.mubr.f32.mxu0 %v675
        %763 = vmatmul.mubr.f32.gmra.mrb[0].mxu0 %v674
        %v764 = vpop.f32.mrb[0].mxu0
        %v765 = vadd.f32 0.0, %v764
        %v766 = vpop.f32.mrb[0].mxu0
        %767 = vdwg.mxu0
        %768 = vmatprep.subr.mxu0 %v685
        %769 = vmatpush1.xpose.msra.mxu0 %v684
        %770 = vmatprep.subr.mxu0 %v693
        %771 = vmatpush1.xpose.msra.mxu0 %v692
        %772 = vmatprep.subr.mxu0 0.0
        %773 = vmatpush1.xpose.msra.mxu0 0.0
        %774 = vmatprep.subr.mxu0 0.0
        %775 = vmatpush1.xpose.msra.mxu0 0.0
        %776 = vmatprep.subr.mxu0 0.0
        %777 = vmatpush1.xpose.msra.mxu0 0.0
        %778 = vmatprep.subr.mxu0 0.0
        %779 = vmatpush1.xpose.msra.mxu0 0.0
        %780 = vmatprep.subr.mxu0 0.0
        %781 = vmatpush1.xpose.msra.mxu0 0.0
        %782 = vmatprep.subr.mxu0 0.0
        %783 = vmatpush1.xpose.msra.mxu0 0.0
        %784 = vmatprep.subr.mxu0 0.0
        %785 = vmatpush1.xpose.msra.mxu0 0.0
        %786 = vmatprep.subr.mxu0 0.0
        %787 = vmatpush1.xpose.msra.mxu0 0.0
        %788 = vmatprep.subr.mxu0 0.0
        %789 = vmatpush1.xpose.msra.mxu0 0.0
        %790 = vmatprep.subr.mxu0 0.0
        %791 = vmatpush1.xpose.msra.mxu0 0.0
        %792 = vmatprep.subr.mxu0 0.0
        %793 = vmatpush1.xpose.msra.mxu0 0.0
        %794 = vmatprep.subr.mxu0 0.0
        %795 = vmatpush1.xpose.msra.mxu0 0.0
        %796 = vmatprep.subr.mxu0 0.0
        %797 = vmatpush1.xpose.msra.mxu0 0.0
        %798 = vmatprep.subr.mxu0 0.0
        %799 = vmatpush1.xpose.msra.mxu0 0.0
        %800 = vmatprep.subr.mxu0 0.0
        %801 = vmatpush1.xpose.msra.mxu0 0.0
        %802 = vmatprep.subr.mxu0 0.0
        %803 = vmatpush1.xpose.msra.mxu0 0.0
        %804 = vmatprep.subr.mxu0 0.0
        %805 = vmatpush1.xpose.msra.mxu0 0.0
        %806 = vmatprep.subr.mxu0 0.0
        %807 = vmatpush1.xpose.msra.mxu0 0.0
        %808 = vmatprep.subr.mxu0 0.0
        %809 = vmatpush1.xpose.msra.mxu0 0.0
        %810 = vmatprep.subr.mxu0 0.0
        %811 = vmatpush1.xpose.msra.mxu0 0.0
        %812 = vmatprep.subr.mxu0 0.0
        %813 = vmatpush1.xpose.msra.mxu0 0.0
        %814 = vmatprep.subr.mxu0 0.0
        %815 = vmatpush1.xpose.msra.mxu0 0.0
        %816 = vmatprep.subr.mxu0 0.0
        %817 = vmatpush1.xpose.msra.mxu0 0.0
        %818 = vmatprep.subr.mxu0 0.0
        %819 = vmatpush1.xpose.msra.mxu0 0.0
        %820 = vmatprep.subr.mxu0 0.0
        %821 = vmatpush1.xpose.msra.mxu0 0.0
        %822 = vmatprep.subr.mxu0 0.0
        %823 = vmatpush1.xpose.msra.mxu0 0.0
        %824 = vmatprep.subr.mxu0 0.0
        %825 = vmatpush1.xpose.msra.mxu0 0.0
        %826 = vmatprep.subr.mxu0 0.0
        %827 = vmatpush1.xpose.msra.mxu0 0.0
        %828 = vmatprep.subr.mxu0 0.0
        %829 = vmatpush1.xpose.msra.mxu0 0.0
        %830 = vmatprep.subr.mxu0 0.0
        %831 = vmatpush1.xpose.msra.mxu0 0.0
        %832 = vmatprep.mubr.f32.mxu0 %v677
        %833 = vmatmul.mubr.f32.gmra.mrb[0].mxu0 %v676
        %v834 = vpop.f32.mrb[0].mxu0
        %v835 = vadd.f32 %v765, %v834
        %v836 = vpop.f32.mrb[0].mxu0
        %837 = vdwg.mxu0
        %838 = vmatprep.subr.mxu0 %v687
        %839 = vmatpush1.xpose.msra.mxu0 %v686
        %840 = vmatprep.subr.mxu0 %v695
        %841 = vmatpush1.xpose.msra.mxu0 %v694
        %842 = vmatprep.subr.mxu0 0.0
        %843 = vmatpush1.xpose.msra.mxu0 0.0
        %844 = vmatprep.subr.mxu0 0.0
        %845 = vmatpush1.xpose.msra.mxu0 0.0
        %846 = vmatprep.subr.mxu0 0.0
        %847 = vmatpush1.xpose.msra.mxu0 0.0
        %848 = vmatprep.subr.mxu0 0.0
        %849 = vmatpush1.xpose.msra.mxu0 0.0
        %850 = vmatprep.subr.mxu0 0.0
        %851 = vmatpush1.xpose.msra.mxu0 0.0
        %852 = vmatprep.subr.mxu0 0.0
        %853 = vmatpush1.xpose.msra.mxu0 0.0
        %854 = vmatprep.subr.mxu0 0.0
        %855 = vmatpush1.xpose.msra.mxu0 0.0
        %856 = vmatprep.subr.mxu0 0.0
        %857 = vmatpush1.xpose.msra.mxu0 0.0
        %858 = vmatprep.subr.mxu0 0.0
        %859 = vmatpush1.xpose.msra.mxu0 0.0
        %860 = vmatprep.subr.mxu0 0.0
        %861 = vmatpush1.xpose.msra.mxu0 0.0
        %862 = vmatprep.subr.mxu0 0.0
        %863 = vmatpush1.xpose.msra.mxu0 0.0
        %864 = vmatprep.subr.mxu0 0.0
        %865 = vmatpush1.xpose.msra.mxu0 0.0
        %866 = vmatprep.subr.mxu0 0.0
        %867 = vmatpush1.xpose.msra.mxu0 0.0
        %868 = vmatprep.subr.mxu0 0.0
        %869 = vmatpush1.xpose.msra.mxu0 0.0
        %870 = vmatprep.subr.mxu0 0.0
        %871 = vmatpush1.xpose.msra.mxu0 0.0
        %872 = vmatprep.subr.mxu0 0.0
        %873 = vmatpush1.xpose.msra.mxu0 0.0
        %874 = vmatprep.subr.mxu0 0.0
        %875 = vmatpush1.xpose.msra.mxu0 0.0
        %876 = vmatprep.subr.mxu0 0.0
        %877 = vmatpush1.xpose.msra.mxu0 0.0
        %878 = vmatprep.subr.mxu0 0.0
        %879 = vmatpush1.xpose.msra.mxu0 0.0
        %880 = vmatprep.subr.mxu0 0.0
        %881 = vmatpush1.xpose.msra.mxu0 0.0
        %882 = vmatprep.subr.mxu0 0.0
        %883 = vmatpush1.xpose.msra.mxu0 0.0
        %884 = vmatprep.subr.mxu0 0.0
        %885 = vmatpush1.xpose.msra.mxu0 0.0
        %886 = vmatprep.subr.mxu0 0.0
        %887 = vmatpush1.xpose.msra.mxu0 0.0
        %888 = vmatprep.subr.mxu0 0.0
        %889 = vmatpush1.xpose.msra.mxu0 0.0
        %890 = vmatprep.subr.mxu0 0.0
        %891 = vmatpush1.xpose.msra.mxu0 0.0
        %892 = vmatprep.subr.mxu0 0.0
        %893 = vmatpush1.xpose.msra.mxu0 0.0
        %894 = vmatprep.subr.mxu0 0.0
        %895 = vmatpush1.xpose.msra.mxu0 0.0
        %896 = vmatprep.subr.mxu0 0.0
        %897 = vmatpush1.xpose.msra.mxu0 0.0
        %898 = vmatprep.subr.mxu0 0.0
        %899 = vmatpush1.xpose.msra.mxu0 0.0
        %900 = vmatprep.subr.mxu0 0.0
        %901 = vmatpush1.xpose.msra.mxu0 0.0
        %902 = vmatprep.mubr.f32.mxu0 %v679
        %903 = vmatmul.mubr.f32.gmra.mrb[0].mxu0 %v678
        %v904 = vpop.f32.mrb[0].mxu0
        %v905 = vadd.f32 %v835, %v904
        %v906 = vpop.f32.mrb[0].mxu0
        %907 = vdwg.mxu0
        %908 = vmatprep.subr.mxu0 %v689
        %909 = vmatpush1.xpose.msra.mxu0 %v688
        %910 = vmatprep.subr.mxu0 %v697
        %911 = vmatpush1.xpose.msra.mxu0 %v696
        %912 = vmatprep.subr.mxu0 0.0
        %913 = vmatpush1.xpose.msra.mxu0 0.0
        %914 = vmatprep.subr.mxu0 0.0
        %915 = vmatpush1.xpose.msra.mxu0 0.0
        %916 = vmatprep.subr.mxu0 0.0
        %917 = vmatpush1.xpose.msra.mxu0 0.0
        %918 = vmatprep.subr.mxu0 0.0
        %919 = vmatpush1.xpose.msra.mxu0 0.0
        %920 = vmatprep.subr.mxu0 0.0
        %921 = vmatpush1.xpose.msra.mxu0 0.0
        %922 = vmatprep.subr.mxu0 0.0
        %923 = vmatpush1.xpose.msra.mxu0 0.0
        %924 = vmatprep.subr.mxu0 0.0
        %925 = vmatpush1.xpose.msra.mxu0 0.0
        %926 = vmatprep.subr.mxu0 0.0
        %927 = vmatpush1.xpose.msra.mxu0 0.0
        %928 = vmatprep.subr.mxu0 0.0
        %929 = vmatpush1.xpose.msra.mxu0 0.0
        %930 = vmatprep.subr.mxu0 0.0
        %931 = vmatpush1.xpose.msra.mxu0 0.0
        %932 = vmatprep.subr.mxu0 0.0
        %933 = vmatpush1.xpose.msra.mxu0 0.0
        %934 = vmatprep.subr.mxu0 0.0
        %935 = vmatpush1.xpose.msra.mxu0 0.0
        %936 = vmatprep.subr.mxu0 0.0
        %937 = vmatpush1.xpose.msra.mxu0 0.0
        %938 = vmatprep.subr.mxu0 0.0
        %939 = vmatpush1.xpose.msra.mxu0 0.0
        %940 = vmatprep.subr.mxu0 0.0
        %941 = vmatpush1.xpose.msra.mxu0 0.0
        %942 = vmatprep.subr.mxu0 0.0
        %943 = vmatpush1.xpose.msra.mxu0 0.0
        %944 = vmatprep.subr.mxu0 0.0
        %945 = vmatpush1.xpose.msra.mxu0 0.0
        %946 = vmatprep.subr.mxu0 0.0
        %947 = vmatpush1.xpose.msra.mxu0 0.0
        %948 = vmatprep.subr.mxu0 0.0
        %949 = vmatpush1.xpose.msra.mxu0 0.0
        %950 = vmatprep.subr.mxu0 0.0
        %951 = vmatpush1.xpose.msra.mxu0 0.0
        %952 = vmatprep.subr.mxu0 0.0
        %953 = vmatpush1.xpose.msra.mxu0 0.0
        %954 = vmatprep.subr.mxu0 0.0
        %955 = vmatpush1.xpose.msra.mxu0 0.0
        %956 = vmatprep.subr.mxu0 0.0
        %957 = vmatpush1.xpose.msra.mxu0 0.0
        %958 = vmatprep.subr.mxu0 0.0
        %959 = vmatpush1.xpose.msra.mxu0 0.0
        %960 = vmatprep.subr.mxu0 0.0
        %961 = vmatpush1.xpose.msra.mxu0 0.0
        %962 = vmatprep.subr.mxu0 0.0
        %963 = vmatpush1.xpose.msra.mxu0 0.0
        %964 = vmatprep.subr.mxu0 0.0
        %965 = vmatpush1.xpose.msra.mxu0 0.0
        %966 = vmatprep.subr.mxu0 0.0
        %967 = vmatpush1.xpose.msra.mxu0 0.0
        %968 = vmatprep.subr.mxu0 0.0
        %969 = vmatpush1.xpose.msra.mxu0 0.0
        %970 = vmatprep.subr.mxu0 0.0
        %971 = vmatpush1.xpose.msra.mxu0 0.0
        %972 = vmatprep.mubr.f32.mxu0 %v681
        %973 = vmatmul.mubr.f32.gmra.mrb[0].mxu0 %v680
        %v974 = vpop.f32.mrb[0].mxu0
        %v975 = vadd.f32 %v905, %v974
        %v976 = vpop.f32.mrb[0].mxu0
        %977 = vdwg.mxu0
        %v978 = vmul.f32 %v975, 0.015625
        %v979 = vld [vmem:[#allocation7] sm:$0xff]
        %v980 = vld [vmem:[#allocation7 + $0x8] sm:$0xff]
        %vm981 = vcmask 130048
        %v983 = vsel %vm981, %v978, 0
        %v986 = vsel %vm981, %v979, 0
        %v989 = vsel %vm981, %v980, 0
        %991 = vmatprep.subr.mxu0 0.0
        %992 = vmatpush1.xpose.msra.mxu0 %v986
        %993 = vmatprep.subr.mxu0 0.0
        %994 = vmatpush1.xpose.msra.mxu0 %v989
        %995 = vmatprep.subr.mxu0 0.0
        %996 = vmatpush1.xpose.msra.mxu0 0.0
        %997 = vmatprep.subr.mxu0 0.0
        %998 = vmatpush1.xpose.msra.mxu0 0.0
        %999 = vmatprep.subr.mxu0 0.0
        %1000 = vmatpush1.xpose.msra.mxu0 0.0
        %1001 = vmatprep.subr.mxu0 0.0
        %1002 = vmatpush1.xpose.msra.mxu0 0.0
        %1003 = vmatprep.subr.mxu0 0.0
        %1004 = vmatpush1.xpose.msra.mxu0 0.0
        %1005 = vmatprep.subr.mxu0 0.0
        %1006 = vmatpush1.xpose.msra.mxu0 0.0
        %1007 = vmatprep.subr.mxu0 0.0
        %1008 = vmatpush1.xpose.msra.mxu0 0.0
        %1009 = vmatprep.subr.mxu0 0.0
        %1010 = vmatpush1.xpose.msra.mxu0 0.0
        %1011 = vmatprep.subr.mxu0 0.0
        %1012 = vmatpush1.xpose.msra.mxu0 0.0
        %1013 = vmatprep.subr.mxu0 0.0
        %1014 = vmatpush1.xpose.msra.mxu0 0.0
        %1015 = vmatprep.subr.mxu0 0.0
        %1016 = vmatpush1.xpose.msra.mxu0 0.0
        %1017 = vmatprep.subr.mxu0 0.0
        %1018 = vmatpush1.xpose.msra.mxu0 0.0
        %1019 = vmatprep.subr.mxu0 0.0
        %1020 = vmatpush1.xpose.msra.mxu0 0.0
        %1021 = vmatprep.subr.mxu0 0.0
        %1022 = vmatpush1.xpose.msra.mxu0 0.0
        %1023 = vmatprep.subr.mxu0 0.0
        %1024 = vmatpush1.xpose.msra.mxu0 0.0
        %1025 = vmatprep.subr.mxu0 0.0
        %1026 = vmatpush1.xpose.msra.mxu0 0.0
        %1027 = vmatprep.subr.mxu0 0.0
        %1028 = vmatpush1.xpose.msra.mxu0 0.0
        %1029 = vmatprep.subr.mxu0 0.0
        %1030 = vmatpush1.xpose.msra.mxu0 0.0
        %1031 = vmatprep.subr.mxu0 0.0
        %1032 = vmatpush1.xpose.msra.mxu0 0.0
        %1033 = vmatprep.subr.mxu0 0.0
        %1034 = vmatpush1.xpose.msra.mxu0 0.0
        %1035 = vmatprep.subr.mxu0 0.0
        %1036 = vmatpush1.xpose.msra.mxu0 0.0
        %1037 = vmatprep.subr.mxu0 0.0
        %1038 = vmatpush1.xpose.msra.mxu0 0.0
        %1039 = vmatprep.subr.mxu0 0.0
        %1040 = vmatpush1.xpose.msra.mxu0 0.0
        %1041 = vmatprep.subr.mxu0 0.0
        %1042 = vmatpush1.xpose.msra.mxu0 0.0
        %1043 = vmatprep.subr.mxu0 0.0
        %1044 = vmatpush1.xpose.msra.mxu0 0.0
        %1045 = vmatprep.subr.mxu0 0.0
        %1046 = vmatpush1.xpose.msra.mxu0 0.0
        %1047 = vmatprep.subr.mxu0 0.0
        %1048 = vmatpush1.xpose.msra.mxu0 0.0
        %1049 = vmatprep.subr.mxu0 0.0
        %1050 = vmatpush1.xpose.msra.mxu0 0.0
        %1051 = vmatprep.subr.mxu0 0.0
        %1052 = vmatpush1.xpose.msra.mxu0 0.0
        %1053 = vmatprep.subr.mxu0 0.0
        %1054 = vmatpush1.xpose.msra.mxu0 0.0
        %1055 = vmatprep.mubr.f32.mxu0 0.0
        %1056 = vmatmul.mubr.f32.gmra.mrb[0].mxu0 %v983
        %v1057 = vpop.f32.mrb[0].mxu0
        %v1058 = vadd.f32 0.0, %v1057
        %v1059 = vpop.f32.mrb[0].mxu0
        %1060 = vdwg.mxu0
        %v1061 = vsel %vm981, %v978, 0.0
        %v1062 = vrot.slane %v1061, 4
        %v1063 = vadd.f32 %v1061, %v1062
        %v1064 = vrot.slane %v1063, 2
        %v1065 = vadd.f32 %v1063, %v1064
        %v1066 = vrot.slane %v1065, 1
        %v1067 = vadd.f32 %v1065, %v1066
        %v1068 = vrcp.pop 8.0
        %v1069 = vmul.f32 %v1067, %v1068
        %v1071 = vsel %vm981, %v1069, 0
        %1073 = vmatprep.subr.mxu0 0.0
        %1074 = vmatpush1.xpose.msra.mxu0 %v986
        %1075 = vmatprep.subr.mxu0 0.0
        %1076 = vmatpush1.xpose.msra.mxu0 %v989
        %1077 = vmatprep.subr.mxu0 0.0
        %1078 = vmatpush1.xpose.msra.mxu0 0.0
        %1079 = vmatprep.subr.mxu0 0.0
        %1080 = vmatpush1.xpose.msra.mxu0 0.0
        %1081 = vmatprep.subr.mxu0 0.0
        %1082 = vmatpush1.xpose.msra.mxu0 0.0
        %1083 = vmatprep.subr.mxu0 0.0
        %1084 = vmatpush1.xpose.msra.mxu0 0.0
        %1085 = vmatprep.subr.mxu0 0.0
        %1086 = vmatpush1.xpose.msra.mxu0 0.0
        %1087 = vmatprep.subr.mxu0 0.0
        %1088 = vmatpush1.xpose.msra.mxu0 0.0
        %1089 = vmatprep.subr.mxu0 0.0
        %1090 = vmatpush1.xpose.msra.mxu0 0.0
        %1091 = vmatprep.subr.mxu0 0.0
        %1092 = vmatpush1.xpose.msra.mxu0 0.0
        %1093 = vmatprep.subr.mxu0 0.0
        %1094 = vmatpush1.xpose.msra.mxu0 0.0
        %1095 = vmatprep.subr.mxu0 0.0
        %1096 = vmatpush1.xpose.msra.mxu0 0.0
        %1097 = vmatprep.subr.mxu0 0.0
        %1098 = vmatpush1.xpose.msra.mxu0 0.0
        %1099 = vmatprep.subr.mxu0 0.0
        %1100 = vmatpush1.xpose.msra.mxu0 0.0
        %1101 = vmatprep.subr.mxu0 0.0
        %1102 = vmatpush1.xpose.msra.mxu0 0.0
        %1103 = vmatprep.subr.mxu0 0.0
        %1104 = vmatpush1.xpose.msra.mxu0 0.0
        %1105 = vmatprep.subr.mxu0 0.0
        %1106 = vmatpush1.xpose.msra.mxu0 0.0
        %1107 = vmatprep.subr.mxu0 0.0
        %1108 = vmatpush1.xpose.msra.mxu0 0.0
        %1109 = vmatprep.subr.mxu0 0.0
        %1110 = vmatpush1.xpose.msra.mxu0 0.0
        %1111 = vmatprep.subr.mxu0 0.0
        %1112 = vmatpush1.xpose.msra.mxu0 0.0
        %1113 = vmatprep.subr.mxu0 0.0
        %1114 = vmatpush1.xpose.msra.mxu0 0.0
        %1115 = vmatprep.subr.mxu0 0.0
        %1116 = vmatpush1.xpose.msra.mxu0 0.0
        %1117 = vmatprep.subr.mxu0 0.0
        %1118 = vmatpush1.xpose.msra.mxu0 0.0
        %1119 = vmatprep.subr.mxu0 0.0
        %1120 = vmatpush1.xpose.msra.mxu0 0.0
        %1121 = vmatprep.subr.mxu0 0.0
        %1122 = vmatpush1.xpose.msra.mxu0 0.0
        %1123 = vmatprep.subr.mxu0 0.0
        %1124 = vmatpush1.xpose.msra.mxu0 0.0
        %1125 = vmatprep.subr.mxu0 0.0
        %1126 = vmatpush1.xpose.msra.mxu0 0.0
        %1127 = vmatprep.subr.mxu0 0.0
        %1128 = vmatpush1.xpose.msra.mxu0 0.0
        %1129 = vmatprep.subr.mxu0 0.0
        %1130 = vmatpush1.xpose.msra.mxu0 0.0
        %1131 = vmatprep.subr.mxu0 0.0
        %1132 = vmatpush1.xpose.msra.mxu0 0.0
        %1133 = vmatprep.subr.mxu0 0.0
        %1134 = vmatpush1.xpose.msra.mxu0 0.0
        %1135 = vmatprep.subr.mxu0 0.0
        %1136 = vmatpush1.xpose.msra.mxu0 0.0
        %1137 = vmatprep.mubr.f32.mxu0 0.0
        %1138 = vmatmul.mubr.f32.gmra.mrb[0].mxu0 %v1071
        %v1139 = vpop.f32.mrb[0].mxu0
        %v1140 = vadd.f32 0.0, %v1139
        %v1141 = vpop.f32.mrb[0].mxu0
        %1142 = vdwg.mxu0
        %v1143 = vlaneseq
        %v1144 = vshrl.u32 %v1143, 7
        %v1145 = vsub.s32 0, %v1144
        %v1146 = vrot.slane %v1140, %v1145
        %v1147 = vmul.f32 %v1058, %v1146
        %v1148 = vadd.f32 %v978, %v1147
        %v1149 = vld [vmem:[#allocation5] sm:$0xff]
        %v1151 = vsel %vm981, %v1149, 0
        %v1154 = vsel %vm981, %v1148, 0
        %1156 = vmatprep.subr.mxu0 0.0
        %1157 = vmatpush1.xpose.msra.mxu0 %v1154
        %1158 = vmatprep.subr.mxu0 0.0
        %1159 = vmatpush1.xpose.msra.mxu0 0.0
        %1160 = vmatprep.subr.mxu0 0.0
        %1161 = vmatpush1.xpose.msra.mxu0 0.0
        %1162 = vmatprep.subr.mxu0 0.0
        %1163 = vmatpush1.xpose.msra.mxu0 0.0
        %1164 = vmatprep.subr.mxu0 0.0
        %1165 = vmatpush1.xpose.msra.mxu0 0.0
        %1166 = vmatprep.subr.mxu0 0.0
        %1167 = vmatpush1.xpose.msra.mxu0 0.0
        %1168 = vmatprep.subr.mxu0 0.0
        %1169 = vmatpush1.xpose.msra.mxu0 0.0
        %1170 = vmatprep.subr.mxu0 0.0
        %1171 = vmatpush1.xpose.msra.mxu0 0.0
        %1172 = vmatprep.subr.mxu0 0.0
        %1173 = vmatpush1.xpose.msra.mxu0 0.0
        %1174 = vmatprep.subr.mxu0 0.0
        %1175 = vmatpush1.xpose.msra.mxu0 0.0
        %1176 = vmatprep.subr.mxu0 0.0
        %1177 = vmatpush1.xpose.msra.mxu0 0.0
        %1178 = vmatprep.subr.mxu0 0.0
        %1179 = vmatpush1.xpose.msra.mxu0 0.0
        %1180 = vmatprep.subr.mxu0 0.0
        %1181 = vmatpush1.xpose.msra.mxu0 0.0
        %1182 = vmatprep.subr.mxu0 0.0
        %1183 = vmatpush1.xpose.msra.mxu0 0.0
        %1184 = vmatprep.subr.mxu0 0.0
        %1185 = vmatpush1.xpose.msra.mxu0 0.0
        %1186 = vmatprep.subr.mxu0 0.0
        %1187 = vmatpush1.xpose.msra.mxu0 0.0
        %1188 = vmatprep.subr.mxu0 0.0
        %1189 = vmatpush1.xpose.msra.mxu0 0.0
        %1190 = vmatprep.subr.mxu0 0.0
        %1191 = vmatpush1.xpose.msra.mxu0 0.0
        %1192 = vmatprep.subr.mxu0 0.0
        %1193 = vmatpush1.xpose.msra.mxu0 0.0
        %1194 = vmatprep.subr.mxu0 0.0
        %1195 = vmatpush1.xpose.msra.mxu0 0.0
        %1196 = vmatprep.subr.mxu0 0.0
        %1197 = vmatpush1.xpose.msra.mxu0 0.0
        %1198 = vmatprep.subr.mxu0 0.0
        %1199 = vmatpush1.xpose.msra.mxu0 0.0
        %1200 = vmatprep.subr.mxu0 0.0
        %1201 = vmatpush1.xpose.msra.mxu0 0.0
        %1202 = vmatprep.subr.mxu0 0.0
        %1203 = vmatpush1.xpose.msra.mxu0 0.0
        %1204 = vmatprep.subr.mxu0 0.0
        %1205 = vmatpush1.xpose.msra.mxu0 0.0
        %1206 = vmatprep.subr.mxu0 0.0
        %1207 = vmatpush1.xpose.msra.mxu0 0.0
        %1208 = vmatprep.subr.mxu0 0.0
        %1209 = vmatpush1.xpose.msra.mxu0 0.0
        %1210 = vmatprep.subr.mxu0 0.0
        %1211 = vmatpush1.xpose.msra.mxu0 0.0
        %1212 = vmatprep.subr.mxu0 0.0
        %1213 = vmatpush1.xpose.msra.mxu0 0.0
        %1214 = vmatprep.subr.mxu0 0.0
        %1215 = vmatpush1.xpose.msra.mxu0 0.0
        %1216 = vmatprep.subr.mxu0 0.0
        %1217 = vmatpush1.xpose.msra.mxu0 0.0
        %1218 = vmatprep.subr.mxu0 0.0
        %1219 = vmatpush1.xpose.msra.mxu0 0.0
        %1220 = vmatprep.mubr.f32.mxu0 0.0
        %1221 = vmatmul.mubr.f32.gmra.mrb[0].mxu0 %v1151
        %v1222 = vpop.f32.mrb[0].mxu0
        %v1223 = vadd.f32 0.0, %v1222
        %v1224 = vpop.f32.mrb[0].mxu0
        %1225 = vdwg.mxu0
        %s1226 = scalar_lea.vmem [#allocation5], 8
        %v1227 = vld [vmem:[%s1226] sm:$0xff]
        %v1229 = vsel %vm981, %v1227, 0
        %1231 = vmatprep.subr.mxu0 0.0
        %1232 = vmatpush1.xpose.msra.mxu0 %v1154
        %1233 = vmatprep.subr.mxu0 0.0
        %1234 = vmatpush1.xpose.msra.mxu0 0.0
        %1235 = vmatprep.subr.mxu0 0.0
        %1236 = vmatpush1.xpose.msra.mxu0 0.0
        %1237 = vmatprep.subr.mxu0 0.0
        %1238 = vmatpush1.xpose.msra.mxu0 0.0
        %1239 = vmatprep.subr.mxu0 0.0
        %1240 = vmatpush1.xpose.msra.mxu0 0.0
        %1241 = vmatprep.subr.mxu0 0.0
        %1242 = vmatpush1.xpose.msra.mxu0 0.0
        %1243 = vmatprep.subr.mxu0 0.0
        %1244 = vmatpush1.xpose.msra.mxu0 0.0
        %1245 = vmatprep.subr.mxu0 0.0
        %1246 = vmatpush1.xpose.msra.mxu0 0.0
        %1247 = vmatprep.subr.mxu0 0.0
        %1248 = vmatpush1.xpose.msra.mxu0 0.0
        %1249 = vmatprep.subr.mxu0 0.0
        %1250 = vmatpush1.xpose.msra.mxu0 0.0
        %1251 = vmatprep.subr.mxu0 0.0
        %1252 = vmatpush1.xpose.msra.mxu0 0.0
        %1253 = vmatprep.subr.mxu0 0.0
        %1254 = vmatpush1.xpose.msra.mxu0 0.0
        %1255 = vmatprep.subr.mxu0 0.0
        %1256 = vmatpush1.xpose.msra.mxu0 0.0
        %1257 = vmatprep.subr.mxu0 0.0
        %1258 = vmatpush1.xpose.msra.mxu0 0.0
        %1259 = vmatprep.subr.mxu0 0.0
        %1260 = vmatpush1.xpose.msra.mxu0 0.0
        %1261 = vmatprep.subr.mxu0 0.0
        %1262 = vmatpush1.xpose.msra.mxu0 0.0
        %1263 = vmatprep.subr.mxu0 0.0
        %1264 = vmatpush1.xpose.msra.mxu0 0.0
        %1265 = vmatprep.subr.mxu0 0.0
        %1266 = vmatpush1.xpose.msra.mxu0 0.0
        %1267 = vmatprep.subr.mxu0 0.0
        %1268 = vmatpush1.xpose.msra.mxu0 0.0
        %1269 = vmatprep.subr.mxu0 0.0
        %1270 = vmatpush1.xpose.msra.mxu0 0.0
        %1271 = vmatprep.subr.mxu0 0.0
        %1272 = vmatpush1.xpose.msra.mxu0 0.0
        %1273 = vmatprep.subr.mxu0 0.0
        %1274 = vmatpush1.xpose.msra.mxu0 0.0
        %1275 = vmatprep.subr.mxu0 0.0
        %1276 = vmatpush1.xpose.msra.mxu0 0.0
        %1277 = vmatprep.subr.mxu0 0.0
        %1278 = vmatpush1.xpose.msra.mxu0 0.0
        %1279 = vmatprep.subr.mxu0 0.0
        %1280 = vmatpush1.xpose.msra.mxu0 0.0
        %1281 = vmatprep.subr.mxu0 0.0
        %1282 = vmatpush1.xpose.msra.mxu0 0.0
        %1283 = vmatprep.subr.mxu0 0.0
        %1284 = vmatpush1.xpose.msra.mxu0 0.0
        %1285 = vmatprep.subr.mxu0 0.0
        %1286 = vmatpush1.xpose.msra.mxu0 0.0
        %1287 = vmatprep.subr.mxu0 0.0
        %1288 = vmatpush1.xpose.msra.mxu0 0.0
        %1289 = vmatprep.subr.mxu0 0.0
        %1290 = vmatpush1.xpose.msra.mxu0 0.0
        %1291 = vmatprep.subr.mxu0 0.0
        %1292 = vmatpush1.xpose.msra.mxu0 0.0
        %1293 = vmatprep.subr.mxu0 0.0
        %1294 = vmatpush1.xpose.msra.mxu0 0.0
        %1295 = vmatprep.mubr.f32.mxu0 0.0
        %1296 = vmatmul.mubr.f32.gmra.mrb[0].mxu0 %v1229
        %v1297 = vpop.f32.mrb[0].mxu0
        %v1298 = vadd.f32 0.0, %v1297
        %v1299 = vpop.f32.mrb[0].mxu0
        %1300 = vdwg.mxu0
        %1302 = vrot.lane.b32.xlu0 %v1298, 8
        %v1303 = vpop.permute.xlu0 %1302
        %vm1305 = vcmask 64512
        %v1306 = vsel %vm1305, %v1223, %v1303
        %v1307 = vld [vmem:[%s4] sm:$0xff]
        %v1308 = vld [vmem:[%s4 + $0x8] sm:$0xff]
        %v1309 = vld [vmem:[%s4 + $0x10] sm:$0xff]
        %v1310 = vld [vmem:[%s4 + $0x18] sm:$0xff]
        %v1312 = vsel %vm981, %v1306, 0
        %v1315 = vsel %vm981, %v1307, 0
        %v1318 = vsel %vm981, %v1308, 0
        %v1321 = vsel %vm981, %v1309, 0
        %v1324 = vsel %vm981, %v1310, 0
        %1326 = vmatprep.subr.mxu0 0.0
        %1327 = vmatpush1.xpose.msra.mxu0 %v1315
        %1328 = vmatprep.subr.mxu0 0.0
        %1329 = vmatpush1.xpose.msra.mxu0 %v1318
        %1330 = vmatprep.subr.mxu0 0.0
        %1331 = vmatpush1.xpose.msra.mxu0 %v1321
        %1332 = vmatprep.subr.mxu0 0.0
        %1333 = vmatpush1.xpose.msra.mxu0 %v1324
        %1334 = vmatprep.subr.mxu0 0.0
        %1335 = vmatpush1.xpose.msra.mxu0 0.0
        %1336 = vmatprep.subr.mxu0 0.0
        %1337 = vmatpush1.xpose.msra.mxu0 0.0
        %1338 = vmatprep.subr.mxu0 0.0
        %1339 = vmatpush1.xpose.msra.mxu0 0.0
        %1340 = vmatprep.subr.mxu0 0.0
        %1341 = vmatpush1.xpose.msra.mxu0 0.0
        %1342 = vmatprep.subr.mxu0 0.0
        %1343 = vmatpush1.xpose.msra.mxu0 0.0
        %1344 = vmatprep.subr.mxu0 0.0
        %1345 = vmatpush1.xpose.msra.mxu0 0.0
        %1346 = vmatprep.subr.mxu0 0.0
        %1347 = vmatpush1.xpose.msra.mxu0 0.0
        %1348 = vmatprep.subr.mxu0 0.0
        %1349 = vmatpush1.xpose.msra.mxu0 0.0
        %1350 = vmatprep.subr.mxu0 0.0
        %1351 = vmatpush1.xpose.msra.mxu0 0.0
        %1352 = vmatprep.subr.mxu0 0.0
        %1353 = vmatpush1.xpose.msra.mxu0 0.0
        %1354 = vmatprep.subr.mxu0 0.0
        %1355 = vmatpush1.xpose.msra.mxu0 0.0
        %1356 = vmatprep.subr.mxu0 0.0
        %1357 = vmatpush1.xpose.msra.mxu0 0.0
        %1358 = vmatprep.subr.mxu0 0.0
        %1359 = vmatpush1.xpose.msra.mxu0 0.0
        %1360 = vmatprep.subr.mxu0 0.0
        %1361 = vmatpush1.xpose.msra.mxu0 0.0
        %1362 = vmatprep.subr.mxu0 0.0
        %1363 = vmatpush1.xpose.msra.mxu0 0.0
        %1364 = vmatprep.subr.mxu0 0.0
        %1365 = vmatpush1.xpose.msra.mxu0 0.0
        %1366 = vmatprep.subr.mxu0 0.0
        %1367 = vmatpush1.xpose.msra.mxu0 0.0
        %1368 = vmatprep.subr.mxu0 0.0
        %1369 = vmatpush1.xpose.msra.mxu0 0.0
        %1370 = vmatprep.subr.mxu0 0.0
        %1371 = vmatpush1.xpose.msra.mxu0 0.0
        %1372 = vmatprep.subr.mxu0 0.0
        %1373 = vmatpush1.xpose.msra.mxu0 0.0
        %1374 = vmatprep.subr.mxu0 0.0
        %1375 = vmatpush1.xpose.msra.mxu0 0.0
        %1376 = vmatprep.subr.mxu0 0.0
        %1377 = vmatpush1.xpose.msra.mxu0 0.0
        %1378 = vmatprep.subr.mxu0 0.0
        %1379 = vmatpush1.xpose.msra.mxu0 0.0
        %1380 = vmatprep.subr.mxu0 0.0
        %1381 = vmatpush1.xpose.msra.mxu0 0.0
        %1382 = vmatprep.subr.mxu0 0.0
        %1383 = vmatpush1.xpose.msra.mxu0 0.0
        %1384 = vmatprep.subr.mxu0 0.0
        %1385 = vmatpush1.xpose.msra.mxu0 0.0
        %1386 = vmatprep.subr.mxu0 0.0
        %1387 = vmatpush1.xpose.msra.mxu0 0.0
        %1388 = vmatprep.subr.mxu0 0.0
        %1389 = vmatpush1.xpose.msra.mxu0 0.0
        %1390 = vmatprep.mubr.f32.mxu0 0.0
        %1391 = vmatmul.mubr.f32.gmra.mrb[0].mxu0 %v1312
        %v1392 = vpop.f32.mrb[0].mxu0
        %v1393 = vadd.f32 0.0, %v1392
        %v1394 = vpop.f32.mrb[0].mxu0
        %1395 = vdwg.mxu0
        %v1396 = vld [vmem:[%s5] sm:$0xff]
        %v1397 = vld [vmem:[%s5 + $0x8] sm:$0xff]
        %v1398 = vld [vmem:[%s5 + $0x10] sm:$0xff]
        %v1399 = vld [vmem:[%s5 + $0x18] sm:$0xff]
        %v1401 = vsel %vm981, %v1396, 0
        %v1404 = vsel %vm981, %v1397, 0
        %v1407 = vsel %vm981, %v1398, 0
        %v1410 = vsel %vm981, %v1399, 0
        %1412 = vmatprep.subr.mxu0 0.0
        %1413 = vmatpush1.xpose.msra.mxu0 %v1401
        %1414 = vmatprep.subr.mxu0 0.0
        %1415 = vmatpush1.xpose.msra.mxu0 %v1404
        %1416 = vmatprep.subr.mxu0 0.0
        %1417 = vmatpush1.xpose.msra.mxu0 %v1407
        %1418 = vmatprep.subr.mxu0 0.0
        %1419 = vmatpush1.xpose.msra.mxu0 %v1410
        %1420 = vmatprep.subr.mxu0 0.0
        %1421 = vmatpush1.xpose.msra.mxu0 0.0
        %1422 = vmatprep.subr.mxu0 0.0
        %1423 = vmatpush1.xpose.msra.mxu0 0.0
        %1424 = vmatprep.subr.mxu0 0.0
        %1425 = vmatpush1.xpose.msra.mxu0 0.0
        %1426 = vmatprep.subr.mxu0 0.0
        %1427 = vmatpush1.xpose.msra.mxu0 0.0
        %1428 = vmatprep.subr.mxu0 0.0
        %1429 = vmatpush1.xpose.msra.mxu0 0.0
        %1430 = vmatprep.subr.mxu0 0.0
        %1431 = vmatpush1.xpose.msra.mxu0 0.0
        %1432 = vmatprep.subr.mxu0 0.0
        %1433 = vmatpush1.xpose.msra.mxu0 0.0
        %1434 = vmatprep.subr.mxu0 0.0
        %1435 = vmatpush1.xpose.msra.mxu0 0.0
        %1436 = vmatprep.subr.mxu0 0.0
        %1437 = vmatpush1.xpose.msra.mxu0 0.0
        %1438 = vmatprep.subr.mxu0 0.0
        %1439 = vmatpush1.xpose.msra.mxu0 0.0
        %1440 = vmatprep.subr.mxu0 0.0
        %1441 = vmatpush1.xpose.msra.mxu0 0.0
        %1442 = vmatprep.subr.mxu0 0.0
        %1443 = vmatpush1.xpose.msra.mxu0 0.0
        %1444 = vmatprep.subr.mxu0 0.0
        %1445 = vmatpush1.xpose.msra.mxu0 0.0
        %1446 = vmatprep.subr.mxu0 0.0
        %1447 = vmatpush1.xpose.msra.mxu0 0.0
        %1448 = vmatprep.subr.mxu0 0.0
        %1449 = vmatpush1.xpose.msra.mxu0 0.0
        %1450 = vmatprep.subr.mxu0 0.0
        %1451 = vmatpush1.xpose.msra.mxu0 0.0
        %1452 = vmatprep.subr.mxu0 0.0
        %1453 = vmatpush1.xpose.msra.mxu0 0.0
        %1454 = vmatprep.subr.mxu0 0.0
        %1455 = vmatpush1.xpose.msra.mxu0 0.0
        %1456 = vmatprep.subr.mxu0 0.0
        %1457 = vmatpush1.xpose.msra.mxu0 0.0
        %1458 = vmatprep.subr.mxu0 0.0
        %1459 = vmatpush1.xpose.msra.mxu0 0.0
        %1460 = vmatprep.subr.mxu0 0.0
        %1461 = vmatpush1.xpose.msra.mxu0 0.0
        %1462 = vmatprep.subr.mxu0 0.0
        %1463 = vmatpush1.xpose.msra.mxu0 0.0
        %1464 = vmatprep.subr.mxu0 0.0
        %1465 = vmatpush1.xpose.msra.mxu0 0.0
        %1466 = vmatprep.subr.mxu0 0.0
        %1467 = vmatpush1.xpose.msra.mxu0 0.0
        %1468 = vmatprep.subr.mxu0 0.0
        %1469 = vmatpush1.xpose.msra.mxu0 0.0
        %1470 = vmatprep.subr.mxu0 0.0
        %1471 = vmatpush1.xpose.msra.mxu0 0.0
        %1472 = vmatprep.subr.mxu0 0.0
        %1473 = vmatpush1.xpose.msra.mxu0 0.0
        %1474 = vmatprep.subr.mxu0 0.0
        %1475 = vmatpush1.xpose.msra.mxu0 0.0
        %1476 = vmatprep.mubr.f32.mxu0 0.0
        %1477 = vmatmul.mubr.f32.gmra.mrb[0].mxu0 %v1312
        %v1478 = vpop.f32.mrb[0].mxu0
        %v1479 = vadd.f32 0.0, %v1478
        %v1480 = vpop.f32.mrb[0].mxu0
        %1481 = vdwg.mxu0
        %v1482 = vld [vmem:[%s6] sm:$0xff]
        %v1483 = vld [vmem:[%s6 + $0x8] sm:$0xff]
        %v1484 = vld [vmem:[%s6 + $0x10] sm:$0xff]
        %v1485 = vld [vmem:[%s6 + $0x18] sm:$0xff]
        %v1487 = vrot.slane %v1393, 5
        %vm1489 = vcmask 1042432
        %v1490 = vsel %vm1489, 0.0, %v1487
        %v1491 = vld [vmem:[%s7] sm:$0x1]
        %1492 = vxpose.xlu0.b32.start [1/16] %v1482, 128
        %1493 = vxpose.xlu0.b32.cont [2/16] %v1483, 128
        %1494 = vxpose.xlu0.b32.cont [3/16] %v1484, 128
        %1495 = vxpose.xlu0.b32.cont [4/16] %v1485, 128
        %1496 = vxpose.xlu0.b32.cont [5/16] 0.0, 128
        %1497 = vxpose.xlu0.b32.cont [6/16] 0.0, 128
        %1498 = vxpose.xlu0.b32.cont [7/16] 0.0, 128
        %1499 = vxpose.xlu0.b32.cont [8/16] 0.0, 128
        %1500 = vxpose.xlu0.b32.cont [9/16] 0.0, 128
        %1501 = vxpose.xlu0.b32.cont [10/16] 0.0, 128
        %1502 = vxpose.xlu0.b32.cont [11/16] 0.0, 128
        %1503 = vxpose.xlu0.b32.cont [12/16] 0.0, 128
        %1504 = vxpose.xlu0.b32.cont [13/16] 0.0, 128
        %1505 = vxpose.xlu0.b32.cont [14/16] 0.0, 128
        %1506 = vxpose.xlu0.b32.cont [15/16] 0.0, 128
        %1507 = vxpose.xlu0.b32.end [16/16] 0.0, 128
        %v1508 = vpop.trf.xlu0
        %v1509 = vpop.trf.xlu0
        %v1510 = vpop.trf.xlu0
        %v1511 = vpop.trf.xlu0
        %v1512 = vpop.trf.xlu0
        %v1513 = vpop.trf.xlu0
        %v1514 = vpop.trf.xlu0
        %v1515 = vpop.trf.xlu0
        %v1516 = vpop.trf.xlu0
        %v1517 = vpop.trf.xlu0
        %v1518 = vpop.trf.xlu0
        %v1519 = vpop.trf.xlu0
        %v1520 = vpop.trf.xlu0
        %v1521 = vpop.trf.xlu0
        %v1522 = vpop.trf.xlu0
        %v1523 = vpop.trf.xlu0
        %v1524 = vlaneseq
        %v1525 = vshrl.u32 %v1524, 7
        %v1526 = vsub.s32 0, %v1525
        %v1527 = vrot.slane %v1508, %v1526
        %v1528 = vmul.f32 %v1490, %v1527
        %v1530 = vlaneseq
        %v1531 = vshrl.u32 %v1530, 7
        %v1532 = vsub.s32 0, %v1531
        %v1533 = vrot.slane %v1491, %v1532
        %v1535 = vadd.f32 %v1533, %v1528
        %1540 = vrot.lane.b32.xlu0 %v1482, 127
        %v1541 = vpop.permute.xlu0 %1540
        %1542 = vrot.lane.b32.xlu0 %v1483, 127
        %v1543 = vpop.permute.xlu0 %1542
        %1544 = vrot.lane.b32.xlu0 %v1484, 127
        %v1545 = vpop.permute.xlu0 %1544
        %1546 = vrot.lane.b32.xlu0 %v1485, 127
        %v1547 = vpop.permute.xlu0 %1546
        %1552 = vxpose.xlu0.b32.start [1/16] %v1541, 128
        %1553 = vxpose.xlu0.b32.cont [2/16] %v1543, 128
        %1554 = vxpose.xlu0.b32.cont [3/16] %v1545, 128
        %1555 = vxpose.xlu0.b32.cont [4/16] %v1547, 128
        %1556 = vxpose.xlu0.b32.cont [5/16] 0.0, 128
        %1557 = vxpose.xlu0.b32.cont [6/16] 0.0, 128
        %1558 = vxpose.xlu0.b32.cont [7/16] 0.0, 128
        %1559 = vxpose.xlu0.b32.cont [8/16] 0.0, 128
        %1560 = vxpose.xlu0.b32.cont [9/16] 0.0, 128
        %1561 = vxpose.xlu0.b32.cont [10/16] 0.0, 128
        %1562 = vxpose.xlu0.b32.cont [11/16] 0.0, 128
        %1563 = vxpose.xlu0.b32.cont [12/16] 0.0, 128
        %1564 = vxpose.xlu0.b32.cont [13/16] 0.0, 128
        %1565 = vxpose.xlu0.b32.cont [14/16] 0.0, 128
        %1566 = vxpose.xlu0.b32.cont [15/16] 0.0, 128
        %1567 = vxpose.xlu0.b32.end [16/16] 0.0, 128
        %v1568 = vpop.trf.xlu0
        %v1569 = vpop.trf.xlu0
        %v1570 = vpop.trf.xlu0
        %v1571 = vpop.trf.xlu0
        %v1572 = vpop.trf.xlu0
        %v1573 = vpop.trf.xlu0
        %v1574 = vpop.trf.xlu0
        %v1575 = vpop.trf.xlu0
        %v1576 = vpop.trf.xlu0
        %v1577 = vpop.trf.xlu0
        %v1578 = vpop.trf.xlu0
        %v1579 = vpop.trf.xlu0
        %v1580 = vpop.trf.xlu0
        %v1581 = vpop.trf.xlu0
        %v1582 = vpop.trf.xlu0
        %v1583 = vpop.trf.xlu0
        %v1584 = vlaneseq
        %v1585 = vshrl.u32 %v1584, 7
        %v1586 = vsub.s32 0, %v1585
        %v1587 = vrot.slane %v1568, %v1586
        %v1588 = vmul.f32 %v1490, %v1587
        %v1589 = vmul.f32 %v1487, %v1587
        %vm1592 = vcmask 1046528
        %v1593 = vrot.slane %v1588, 1
        %v1594 = vrot.slane %v1589, 1
        %v1595 = vsel %vm1592, %v1593, %v1594
        %v1597 = vadd.f32 %v1535, %v1595
        %1598 = vrot.lane.b32.xlu0 %v1482, 126
        %v1599 = vpop.permute.xlu0 %1598
        %1600 = vrot.lane.b32.xlu0 %v1483, 126
        %v1601 = vpop.permute.xlu0 %1600
        %1602 = vrot.lane.b32.xlu0 %v1484, 126
        %v1603 = vpop.permute.xlu0 %1602
        %1604 = vrot.lane.b32.xlu0 %v1485, 126
        %v1605 = vpop.permute.xlu0 %1604
        %1610 = vxpose.xlu0.b32.start [1/16] %v1599, 128
        %1611 = vxpose.xlu0.b32.cont [2/16] %v1601, 128
        %1612 = vxpose.xlu0.b32.cont [3/16] %v1603, 128
        %1613 = vxpose.xlu0.b32.cont [4/16] %v1605, 128
        %1614 = vxpose.xlu0.b32.cont [5/16] 0.0, 128
        %1615 = vxpose.xlu0.b32.cont [6/16] 0.0, 128
        %1616 = vxpose.xlu0.b32.cont [7/16] 0.0, 128
        %1617 = vxpose.xlu0.b32.cont [8/16] 0.0, 128
        %1618 = vxpose.xlu0.b32.cont [9/16] 0.0, 128
        %1619 = vxpose.xlu0.b32.cont [10/16] 0.0, 128
        %1620 = vxpose.xlu0.b32.cont [11/16] 0.0, 128
        %1621 = vxpose.xlu0.b32.cont [12/16] 0.0, 128
        %1622 = vxpose.xlu0.b32.cont [13/16] 0.0, 128
        %1623 = vxpose.xlu0.b32.cont [14/16] 0.0, 128
        %1624 = vxpose.xlu0.b32.cont [15/16] 0.0, 128
        %1625 = vxpose.xlu0.b32.end [16/16] 0.0, 128
        %v1626 = vpop.trf.xlu0
        %v1627 = vpop.trf.xlu0
        %v1628 = vpop.trf.xlu0
        %v1629 = vpop.trf.xlu0
        %v1630 = vpop.trf.xlu0
        %v1631 = vpop.trf.xlu0
        %v1632 = vpop.trf.xlu0
        %v1633 = vpop.trf.xlu0
        %v1634 = vpop.trf.xlu0
        %v1635 = vpop.trf.xlu0
        %v1636 = vpop.trf.xlu0
        %v1637 = vpop.trf.xlu0
        %v1638 = vpop.trf.xlu0
        %v1639 = vpop.trf.xlu0
        %v1640 = vpop.trf.xlu0
        %v1641 = vpop.trf.xlu0
        %v1642 = vlaneseq
        %v1643 = vshrl.u32 %v1642, 7
        %v1644 = vsub.s32 0, %v1643
        %v1645 = vrot.slane %v1626, %v1644
        %v1646 = vmul.f32 %v1490, %v1645
        %v1647 = vmul.f32 %v1487, %v1645
        %vm1650 = vcmask 1045504
        %v1651 = vrot.slane %v1646, 2
        %v1652 = vrot.slane %v1647, 2
        %v1653 = vsel %vm1650, %v1651, %v1652
        %v1655 = vadd.f32 %v1597, %v1653
        %1656 = vrot.lane.b32.xlu0 %v1482, 125
        %v1657 = vpop.permute.xlu0 %1656
        %1658 = vrot.lane.b32.xlu0 %v1483, 125
        %v1659 = vpop.permute.xlu0 %1658
        %1660 = vrot.lane.b32.xlu0 %v1484, 125
        %v1661 = vpop.permute.xlu0 %1660
        %1662 = vrot.lane.b32.xlu0 %v1485, 125
        %v1663 = vpop.permute.xlu0 %1662
        %1668 = vxpose.xlu0.b32.start [1/16] %v1657, 128
        %1669 = vxpose.xlu0.b32.cont [2/16] %v1659, 128
        %1670 = vxpose.xlu0.b32.cont [3/16] %v1661, 128
        %1671 = vxpose.xlu0.b32.cont [4/16] %v1663, 128
        %1672 = vxpose.xlu0.b32.cont [5/16] 0.0, 128
        %1673 = vxpose.xlu0.b32.cont [6/16] 0.0, 128
        %1674 = vxpose.xlu0.b32.cont [7/16] 0.0, 128
        %1675 = vxpose.xlu0.b32.cont [8/16] 0.0, 128
        %1676 = vxpose.xlu0.b32.cont [9/16] 0.0, 128
        %1677 = vxpose.xlu0.b32.cont [10/16] 0.0, 128
        %1678 = vxpose.xlu0.b32.cont [11/16] 0.0, 128
        %1679 = vxpose.xlu0.b32.cont [12/16] 0.0, 128
        %1680 = vxpose.xlu0.b32.cont [13/16] 0.0, 128
        %1681 = vxpose.xlu0.b32.cont [14/16] 0.0, 128
        %1682 = vxpose.xlu0.b32.cont [15/16] 0.0, 128
        %1683 = vxpose.xlu0.b32.end [16/16] 0.0, 128
        %v1684 = vpop.trf.xlu0
        %v1685 = vpop.trf.xlu0
        %v1686 = vpop.trf.xlu0
        %v1687 = vpop.trf.xlu0
        %v1688 = vpop.trf.xlu0
        %v1689 = vpop.trf.xlu0
        %v1690 = vpop.trf.xlu0
        %v1691 = vpop.trf.xlu0
        %v1692 = vpop.trf.xlu0
        %v1693 = vpop.trf.xlu0
        %v1694 = vpop.trf.xlu0
        %v1695 = vpop.trf.xlu0
        %v1696 = vpop.trf.xlu0
        %v1697 = vpop.trf.xlu0
        %v1698 = vpop.trf.xlu0
        %v1699 = vpop.trf.xlu0
        %v1700 = vlaneseq
        %v1701 = vshrl.u32 %v1700, 7
        %v1702 = vsub.s32 0, %v1701
        %v1703 = vrot.slane %v1684, %v1702
        %v1704 = vmul.f32 %v1490, %v1703
        %v1705 = vmul.f32 %v1487, %v1703
        %vm1708 = vcmask 1044480
        %v1709 = vrot.slane %v1704, 3
        %v1710 = vrot.slane %v1705, 3
        %v1711 = vsel %vm1708, %v1709, %v1710
        %v1713 = vadd.f32 %v1655, %v1711
        %v1714 = vsub.f32 0.0, %v1713
        %v1715 = vmul.f32 %v1714, 1.442695
        %v1716 = vpow.pop %v1715
        %v1717 = vadd.f32 %v1716, 1.0
        %v1718 = vrcp.pop %v1717
        %v1719 = vmul.f32 1.0, %v1718
        %v1720 = vmul.f32 %v1713, %v1719
        %v1721 = vld [vmem:[#allocation8] sm:$0xff]
        %v1722 = vld [vmem:[#allocation8 + $0x8] sm:$0xff]
        %vm1723 = vcmask 261120
        %v1725 = vsel %vm1723, %v1720, 0
        %v1728 = vsel %vm1723, %v1721, 0
        %v1731 = vsel %vm1723, %v1722, 0
        %1733 = vmatprep.subr.mxu0 0.0
        %1734 = vmatpush1.xpose.msra.mxu0 %v1728
        %1735 = vmatprep.subr.mxu0 0.0
        %1736 = vmatpush1.xpose.msra.mxu0 %v1731
        %1737 = vmatprep.subr.mxu0 0.0
        %1738 = vmatpush1.xpose.msra.mxu0 0.0
        %1739 = vmatprep.subr.mxu0 0.0
        %1740 = vmatpush1.xpose.msra.mxu0 0.0
        %1741 = vmatprep.subr.mxu0 0.0
        %1742 = vmatpush1.xpose.msra.mxu0 0.0
        %1743 = vmatprep.subr.mxu0 0.0
        %1744 = vmatpush1.xpose.msra.mxu0 0.0
        %1745 = vmatprep.subr.mxu0 0.0
        %1746 = vmatpush1.xpose.msra.mxu0 0.0
        %1747 = vmatprep.subr.mxu0 0.0
        %1748 = vmatpush1.xpose.msra.mxu0 0.0
        %1749 = vmatprep.subr.mxu0 0.0
        %1750 = vmatpush1.xpose.msra.mxu0 0.0
        %1751 = vmatprep.subr.mxu0 0.0
        %1752 = vmatpush1.xpose.msra.mxu0 0.0
        %1753 = vmatprep.subr.mxu0 0.0
        %1754 = vmatpush1.xpose.msra.mxu0 0.0
        %1755 = vmatprep.subr.mxu0 0.0
        %1756 = vmatpush1.xpose.msra.mxu0 0.0
        %1757 = vmatprep.subr.mxu0 0.0
        %1758 = vmatpush1.xpose.msra.mxu0 0.0
        %1759 = vmatprep.subr.mxu0 0.0
        %1760 = vmatpush1.xpose.msra.mxu0 0.0
        %1761 = vmatprep.subr.mxu0 0.0
        %1762 = vmatpush1.xpose.msra.mxu0 0.0
        %1763 = vmatprep.subr.mxu0 0.0
        %1764 = vmatpush1.xpose.msra.mxu0 0.0
        %1765 = vmatprep.subr.mxu0 0.0
        %1766 = vmatpush1.xpose.msra.mxu0 0.0
        %1767 = vmatprep.subr.mxu0 0.0
        %1768 = vmatpush1.xpose.msra.mxu0 0.0
        %1769 = vmatprep.subr.mxu0 0.0
        %1770 = vmatpush1.xpose.msra.mxu0 0.0
        %1771 = vmatprep.subr.mxu0 0.0
        %1772 = vmatpush1.xpose.msra.mxu0 0.0
        %1773 = vmatprep.subr.mxu0 0.0
        %1774 = vmatpush1.xpose.msra.mxu0 0.0
        %1775 = vmatprep.subr.mxu0 0.0
        %1776 = vmatpush1.xpose.msra.mxu0 0.0
        %1777 = vmatprep.subr.mxu0 0.0
        %1778 = vmatpush1.xpose.msra.mxu0 0.0
        %1779 = vmatprep.subr.mxu0 0.0
        %1780 = vmatpush1.xpose.msra.mxu0 0.0
        %1781 = vmatprep.subr.mxu0 0.0
        %1782 = vmatpush1.xpose.msra.mxu0 0.0
        %1783 = vmatprep.subr.mxu0 0.0
        %1784 = vmatpush1.xpose.msra.mxu0 0.0
        %1785 = vmatprep.subr.mxu0 0.0
        %1786 = vmatpush1.xpose.msra.mxu0 0.0
        %1787 = vmatprep.subr.mxu0 0.0
        %1788 = vmatpush1.xpose.msra.mxu0 0.0
        %1789 = vmatprep.subr.mxu0 0.0
        %1790 = vmatpush1.xpose.msra.mxu0 0.0
        %1791 = vmatprep.subr.mxu0 0.0
        %1792 = vmatpush1.xpose.msra.mxu0 0.0
        %1793 = vmatprep.subr.mxu0 0.0
        %1794 = vmatpush1.xpose.msra.mxu0 0.0
        %1795 = vmatprep.subr.mxu0 0.0
        %1796 = vmatpush1.xpose.msra.mxu0 0.0
        %1797 = vmatprep.mubr.f32.mxu0 0.0
        %1798 = vmatmul.mubr.f32.gmra.mrb[0].mxu0 %v1725
        %v1799 = vpop.f32.mrb[0].mxu0
        %v1800 = vadd.f32 0.0, %v1799
        %v1801 = vpop.f32.mrb[0].mxu0
        %1802 = vdwg.mxu0
        %v1803 = vld [vmem:[#allocation10] sm:$0xff]
        %v1804 = vld [vmem:[#allocation10 + $0x8] sm:$0xff]
        %v1806 = vsel %vm1723, %v1803, 0
        %v1809 = vsel %vm1723, %v1804, 0
        %1811 = vmatprep.subr.mxu0 0.0
        %1812 = vmatpush1.xpose.msra.mxu0 %v1806
        %1813 = vmatprep.subr.mxu0 0.0
        %1814 = vmatpush1.xpose.msra.mxu0 %v1809
        %1815 = vmatprep.subr.mxu0 0.0
        %1816 = vmatpush1.xpose.msra.mxu0 0.0
        %1817 = vmatprep.subr.mxu0 0.0
        %1818 = vmatpush1.xpose.msra.mxu0 0.0
        %1819 = vmatprep.subr.mxu0 0.0
        %1820 = vmatpush1.xpose.msra.mxu0 0.0
        %1821 = vmatprep.subr.mxu0 0.0
        %1822 = vmatpush1.xpose.msra.mxu0 0.0
        %1823 = vmatprep.subr.mxu0 0.0
        %1824 = vmatpush1.xpose.msra.mxu0 0.0
        %1825 = vmatprep.subr.mxu0 0.0
        %1826 = vmatpush1.xpose.msra.mxu0 0.0
        %1827 = vmatprep.subr.mxu0 0.0
        %1828 = vmatpush1.xpose.msra.mxu0 0.0
        %1829 = vmatprep.subr.mxu0 0.0
        %1830 = vmatpush1.xpose.msra.mxu0 0.0
        %1831 = vmatprep.subr.mxu0 0.0
        %1832 = vmatpush1.xpose.msra.mxu0 0.0
        %1833 = vmatprep.subr.mxu0 0.0
        %1834 = vmatpush1.xpose.msra.mxu0 0.0
        %1835 = vmatprep.subr.mxu0 0.0
        %1836 = vmatpush1.xpose.msra.mxu0 0.0
        %1837 = vmatprep.subr.mxu0 0.0
        %1838 = vmatpush1.xpose.msra.mxu0 0.0
        %1839 = vmatprep.subr.mxu0 0.0
        %1840 = vmatpush1.xpose.msra.mxu0 0.0
        %1841 = vmatprep.subr.mxu0 0.0
        %1842 = vmatpush1.xpose.msra.mxu0 0.0
        %1843 = vmatprep.subr.mxu0 0.0
        %1844 = vmatpush1.xpose.msra.mxu0 0.0
        %1845 = vmatprep.subr.mxu0 0.0
        %1846 = vmatpush1.xpose.msra.mxu0 0.0
        %1847 = vmatprep.subr.mxu0 0.0
        %1848 = vmatpush1.xpose.msra.mxu0 0.0
        %1849 = vmatprep.subr.mxu0 0.0
        %1850 = vmatpush1.xpose.msra.mxu0 0.0
        %1851 = vmatprep.subr.mxu0 0.0
        %1852 = vmatpush1.xpose.msra.mxu0 0.0
        %1853 = vmatprep.subr.mxu0 0.0
        %1854 = vmatpush1.xpose.msra.mxu0 0.0
        %1855 = vmatprep.subr.mxu0 0.0
        %1856 = vmatpush1.xpose.msra.mxu0 0.0
        %1857 = vmatprep.subr.mxu0 0.0
        %1858 = vmatpush1.xpose.msra.mxu0 0.0
        %1859 = vmatprep.subr.mxu0 0.0
        %1860 = vmatpush1.xpose.msra.mxu0 0.0
        %1861 = vmatprep.subr.mxu0 0.0
        %1862 = vmatpush1.xpose.msra.mxu0 0.0
        %1863 = vmatprep.subr.mxu0 0.0
        %1864 = vmatpush1.xpose.msra.mxu0 0.0
        %1865 = vmatprep.subr.mxu0 0.0
        %1866 = vmatpush1.xpose.msra.mxu0 0.0
        %1867 = vmatprep.subr.mxu0 0.0
        %1868 = vmatpush1.xpose.msra.mxu0 0.0
        %1869 = vmatprep.subr.mxu0 0.0
        %1870 = vmatpush1.xpose.msra.mxu0 0.0
        %1871 = vmatprep.subr.mxu0 0.0
        %1872 = vmatpush1.xpose.msra.mxu0 0.0
        %1873 = vmatprep.subr.mxu0 0.0
        %1874 = vmatpush1.xpose.msra.mxu0 0.0
        %1875 = vmatprep.mubr.f32.mxu0 0.0
        %1876 = vmatmul.mubr.f32.gmra.mrb[0].mxu0 %v1725
        %v1877 = vpop.f32.mrb[0].mxu0
        %v1878 = vadd.f32 0.0, %v1877
        %v1879 = vpop.f32.mrb[0].mxu0
        %1880 = vdwg.mxu0
        %v1881 = vld [vmem:[#allocation11] sm:$0x1]
        %v1882 = vld [vmem:[%s10] sm:$0xff]
        %v1883 = vld [vmem:[%s10 + $0x8] sm:$0xff]
        %v1884 = vld [vmem:[%s10 + $0x10] sm:$0xff]
        %v1885 = vld [vmem:[%s10 + $0x18] sm:$0xff]
        %v1887 = vsel %vm1723, %v1882, 0
        %v1890 = vsel %vm1723, %v1883, 0
        %v1893 = vsel %vm1723, %v1884, 0
        %v1896 = vsel %vm1723, %v1885, 0
        %1898 = vmatprep.subr.mxu0 0.0
        %1899 = vmatpush1.xpose.msra.mxu0 %v1887
        %1900 = vmatprep.subr.mxu0 0.0
        %1901 = vmatpush1.xpose.msra.mxu0 %v1890
        %1902 = vmatprep.subr.mxu0 0.0
        %1903 = vmatpush1.xpose.msra.mxu0 %v1893
        %1904 = vmatprep.subr.mxu0 0.0
        %1905 = vmatpush1.xpose.msra.mxu0 %v1896
        %1906 = vmatprep.subr.mxu0 0.0
        %1907 = vmatpush1.xpose.msra.mxu0 0.0
        %1908 = vmatprep.subr.mxu0 0.0
        %1909 = vmatpush1.xpose.msra.mxu0 0.0
        %1910 = vmatprep.subr.mxu0 0.0
        %1911 = vmatpush1.xpose.msra.mxu0 0.0
        %1912 = vmatprep.subr.mxu0 0.0
        %1913 = vmatpush1.xpose.msra.mxu0 0.0
        %1914 = vmatprep.subr.mxu0 0.0
        %1915 = vmatpush1.xpose.msra.mxu0 0.0
        %1916 = vmatprep.subr.mxu0 0.0
        %1917 = vmatpush1.xpose.msra.mxu0 0.0
        %1918 = vmatprep.subr.mxu0 0.0
        %1919 = vmatpush1.xpose.msra.mxu0 0.0
        %1920 = vmatprep.subr.mxu0 0.0
        %1921 = vmatpush1.xpose.msra.mxu0 0.0
        %1922 = vmatprep.subr.mxu0 0.0
        %1923 = vmatpush1.xpose.msra.mxu0 0.0
        %1924 = vmatprep.subr.mxu0 0.0
        %1925 = vmatpush1.xpose.msra.mxu0 0.0
        %1926 = vmatprep.subr.mxu0 0.0
        %1927 = vmatpush1.xpose.msra.mxu0 0.0
        %1928 = vmatprep.subr.mxu0 0.0
        %1929 = vmatpush1.xpose.msra.mxu0 0.0
        %1930 = vmatprep.subr.mxu0 0.0
        %1931 = vmatpush1.xpose.msra.mxu0 0.0
        %1932 = vmatprep.subr.mxu0 0.0
        %1933 = vmatpush1.xpose.msra.mxu0 0.0
        %1934 = vmatprep.subr.mxu0 0.0
        %1935 = vmatpush1.xpose.msra.mxu0 0.0
        %1936 = vmatprep.subr.mxu0 0.0
        %1937 = vmatpush1.xpose.msra.mxu0 0.0
        %1938 = vmatprep.subr.mxu0 0.0
        %1939 = vmatpush1.xpose.msra.mxu0 0.0
        %1940 = vmatprep.subr.mxu0 0.0
        %1941 = vmatpush1.xpose.msra.mxu0 0.0
        %1942 = vmatprep.subr.mxu0 0.0
        %1943 = vmatpush1.xpose.msra.mxu0 0.0
        %1944 = vmatprep.subr.mxu0 0.0
        %1945 = vmatpush1.xpose.msra.mxu0 0.0
        %1946 = vmatprep.subr.mxu0 0.0
        %1947 = vmatpush1.xpose.msra.mxu0 0.0
        %1948 = vmatprep.subr.mxu0 0.0
        %1949 = vmatpush1.xpose.msra.mxu0 0.0
        %1950 = vmatprep.subr.mxu0 0.0
        %1951 = vmatpush1.xpose.msra.mxu0 0.0
        %1952 = vmatprep.subr.mxu0 0.0
        %1953 = vmatpush1.xpose.msra.mxu0 0.0
        %1954 = vmatprep.subr.mxu0 0.0
        %1955 = vmatpush1.xpose.msra.mxu0 0.0
        %1956 = vmatprep.subr.mxu0 0.0
        %1957 = vmatpush1.xpose.msra.mxu0 0.0
        %1958 = vmatprep.subr.mxu0 0.0
        %1959 = vmatpush1.xpose.msra.mxu0 0.0
        %1960 = vmatprep.subr.mxu0 0.0
        %1961 = vmatpush1.xpose.msra.mxu0 0.0
        %1962 = vmatprep.mubr.f32.mxu0 0.0
        %1963 = vmatmul.mubr.f32.gmra.mrb[0].mxu0 %v1725
        %v1964 = vpop.f32.mrb[0].mxu0
        %v1965 = vadd.f32 0.0, %v1964
        %v1966 = vpop.f32.mrb[0].mxu0
        %1967 = vdwg.mxu0
        %v1969 = vlaneseq
        %v1970 = vshrl.u32 %v1969, 7
        %v1971 = vsub.s32 0, %v1970
        %v1972 = vrot.slane %v1881, %v1971
        %v1974 = vadd.f32 %v1972, %v1965
        %vm1975 = vcmp.gt.f32.partialorder %v1974, 20.0
        %v1976 = vmin.f32 %v1974, 20.0
        %v1977 = vmul.f32 %v1976, 1.442695
        %v1978 = vpow.pop %v1977
        %v1979 = vadd.f32 %v1978, 1.0
        %v1980 = vlog2.pop %v1979
        %v1981 = vmul.f32 %v1980, 0.6931472
        %v1982 = vsel %vm1975, %v1974, %v1981
        %v1983 = vld [vmem:[#allocation13] sm:$0xf]
        %v1984 = vmul.f32 %v1983, 1.442695
        %v1985 = vpow.pop %v1984
        %v1986 = vsub.f32 0.0, %v1985
        %v1987 = vld [vmem:[#allocation14] sm:$0xff]
        %v1988 = vld [vmem:[#allocation14 + $0x8] sm:$0xff]
        %v1989 = vld [vmem:[#allocation14 + $0x10] sm:$0xff]
        %v1990 = vld [vmem:[#allocation14 + $0x18] sm:$0xff]
        %v1991 = vld [vmem:[#allocation14 + $0x20] sm:$0xff]
        %v1992 = vld [vmem:[#allocation14 + $0x28] sm:$0xff]
        %v1993 = vld [vmem:[#allocation14 + $0x30] sm:$0xff]
        %v1994 = vld [vmem:[#allocation14 + $0x38] sm:$0xff]
        %v1995 = vld [vmem:[#allocation14 + $0x40] sm:$0xff]
        %v1996 = vld [vmem:[#allocation14 + $0x48] sm:$0xff]
        %v1997 = vld [vmem:[#allocation14 + $0x50] sm:$0xff]
        %v1998 = vld [vmem:[#allocation14 + $0x58] sm:$0xff]
        %v1999 = vld [vmem:[#allocation14 + $0x60] sm:$0xff]
        %v2000 = vld [vmem:[#allocation14 + $0x68] sm:$0xff]
        %v2001 = vld [vmem:[#allocation14 + $0x70] sm:$0xff]
        %v2002 = vld [vmem:[#allocation14 + $0x78] sm:$0xff]
        %v2003 = vld [vmem:[#allocation16] sm:$0xff]
        %v2004 = vld [vmem:[#allocation16 + $0x8] sm:$0xff]
        %v2005 = vld [vmem:[#allocation16 + $0x10] sm:$0xff]
        %v2006 = vld [vmem:[#allocation16 + $0x18] sm:$0xff]
        %v2007 = vld [vmem:[#allocation16 + $0x20] sm:$0xff]
        %v2008 = vld [vmem:[#allocation16 + $0x28] sm:$0xff]
        %v2009 = vld [vmem:[#allocation16 + $0x30] sm:$0xff]
        %v2010 = vld [vmem:[#allocation16 + $0x38] sm:$0xff]
        %v2012 = vsel %vm1723, %v1982, 0
        %2014 = vmatprep.subr.mxu0 %v1988
        %2015 = vmatpush1.msra.mxu0 %v1987
        %2016 = vmatprep.subr.mxu0 %v1992
        %2017 = vmatpush1.msra.mxu0 %v1991
        %2018 = vmatprep.subr.mxu0 %v1996
        %2019 = vmatpush1.msra.mxu0 %v1995
        %2020 = vmatprep.subr.mxu0 %v2000
        %2021 = vmatpush1.msra.mxu0 %v1999
        %2022 = vmatprep.subr.mxu0 0.0
        %2023 = vmatpush1.msra.mxu0 0.0
        %2024 = vmatprep.subr.mxu0 0.0
        %2025 = vmatpush1.msra.mxu0 0.0
        %2026 = vmatprep.subr.mxu0 0.0
        %2027 = vmatpush1.msra.mxu0 0.0
        %2028 = vmatprep.subr.mxu0 0.0
        %2029 = vmatpush1.msra.mxu0 0.0
        %2030 = vmatprep.subr.mxu0 0.0
        %2031 = vmatpush1.msra.mxu0 0.0
        %2032 = vmatprep.subr.mxu0 0.0
        %2033 = vmatpush1.msra.mxu0 0.0
        %2034 = vmatprep.subr.mxu0 0.0
        %2035 = vmatpush1.msra.mxu0 0.0
        %2036 = vmatprep.subr.mxu0 0.0
        %2037 = vmatpush1.msra.mxu0 0.0
        %2038 = vmatprep.subr.mxu0 0.0
        %2039 = vmatpush1.msra.mxu0 0.0
        %2040 = vmatprep.subr.mxu0 0.0
        %2041 = vmatpush1.msra.mxu0 0.0
        %2042 = vmatprep.subr.mxu0 0.0
        %2043 = vmatpush1.msra.mxu0 0.0
        %2044 = vmatprep.subr.mxu0 0.0
        %2045 = vmatpush1.msra.mxu0 0.0
        %2046 = vmatprep.subr.mxu0 0.0
        %2047 = vmatpush1.msra.mxu0 0.0
        %2048 = vmatprep.subr.mxu0 0.0
        %2049 = vmatpush1.msra.mxu0 0.0
        %2050 = vmatprep.subr.mxu0 0.0
        %2051 = vmatpush1.msra.mxu0 0.0
        %2052 = vmatprep.subr.mxu0 0.0
        %2053 = vmatpush1.msra.mxu0 0.0
        %2054 = vmatprep.subr.mxu0 0.0
        %2055 = vmatpush1.msra.mxu0 0.0
        %2056 = vmatprep.subr.mxu0 0.0
        %2057 = vmatpush1.msra.mxu0 0.0
        %2058 = vmatprep.subr.mxu0 0.0
        %2059 = vmatpush1.msra.mxu0 0.0
        %2060 = vmatprep.subr.mxu0 0.0
        %2061 = vmatpush1.msra.mxu0 0.0
        %2062 = vmatprep.subr.mxu0 0.0
        %2063 = vmatpush1.msra.mxu0 0.0
        %2064 = vmatprep.subr.mxu0 0.0
        %2065 = vmatpush1.msra.mxu0 0.0
        %2066 = vmatprep.subr.mxu0 0.0
        %2067 = vmatpush1.msra.mxu0 0.0
        %2068 = vmatprep.subr.mxu0 0.0
        %2069 = vmatpush1.msra.mxu0 0.0
        %2070 = vmatprep.subr.mxu0 0.0
        %2071 = vmatpush1.msra.mxu0 0.0
        %2072 = vmatprep.subr.mxu0 0.0
        %2073 = vmatpush1.msra.mxu0 0.0
        %2074 = vmatprep.subr.mxu0 0.0
        %2075 = vmatpush1.msra.mxu0 0.0
        %2076 = vmatprep.subr.mxu0 0.0
        %2077 = vmatpush1.msra.mxu0 0.0
        %2078 = vmatprep.mubr.f32.mxu0 0.0
        %2079 = vmatmul.mubr.f32.gmra.mrb[0].mxu0 %v2012
        %v2080 = vpop.f32.mrb[0].mxu0
        %v2081 = vadd.f32 0.0, %v2080
        %v2082 = vpop.f32.mrb[0].mxu0
        %v2083 = vadd.f32 0.0, %v2082
        %2084 = vdwg.mxu0
        %2085 = vmatprep.subr.mxu0 %v1990
        %2086 = vmatpush1.msra.mxu0 %v1989
        %2087 = vmatprep.subr.mxu0 %v1994
        %2088 = vmatpush1.msra.mxu0 %v1993
        %2089 = vmatprep.subr.mxu0 %v1998
        %2090 = vmatpush1.msra.mxu0 %v1997
        %2091 = vmatprep.subr.mxu0 %v2002
        %2092 = vmatpush1.msra.mxu0 %v2001
        %2093 = vmatprep.subr.mxu0 0.0
        %2094 = vmatpush1.msra.mxu0 0.0
        %2095 = vmatprep.subr.mxu0 0.0
        %2096 = vmatpush1.msra.mxu0 0.0
        %2097 = vmatprep.subr.mxu0 0.0
        %2098 = vmatpush1.msra.mxu0 0.0
        %2099 = vmatprep.subr.mxu0 0.0
        %2100 = vmatpush1.msra.mxu0 0.0
        %2101 = vmatprep.subr.mxu0 0.0
        %2102 = vmatpush1.msra.mxu0 0.0
        %2103 = vmatprep.subr.mxu0 0.0
        %2104 = vmatpush1.msra.mxu0 0.0
        %2105 = vmatprep.subr.mxu0 0.0
        %2106 = vmatpush1.msra.mxu0 0.0
        %2107 = vmatprep.subr.mxu0 0.0
        %2108 = vmatpush1.msra.mxu0 0.0
        %2109 = vmatprep.subr.mxu0 0.0
        %2110 = vmatpush1.msra.mxu0 0.0
        %2111 = vmatprep.subr.mxu0 0.0
        %2112 = vmatpush1.msra.mxu0 0.0
        %2113 = vmatprep.subr.mxu0 0.0
        %2114 = vmatpush1.msra.mxu0 0.0
        %2115 = vmatprep.subr.mxu0 0.0
        %2116 = vmatpush1.msra.mxu0 0.0
        %2117 = vmatprep.subr.mxu0 0.0
        %2118 = vmatpush1.msra.mxu0 0.0
        %2119 = vmatprep.subr.mxu0 0.0
        %2120 = vmatpush1.msra.mxu0 0.0
        %2121 = vmatprep.subr.mxu0 0.0
        %2122 = vmatpush1.msra.mxu0 0.0
        %2123 = vmatprep.subr.mxu0 0.0
        %2124 = vmatpush1.msra.mxu0 0.0
        %2125 = vmatprep.subr.mxu0 0.0
        %2126 = vmatpush1.msra.mxu0 0.0
        %2127 = vmatprep.subr.mxu0 0.0
        %2128 = vmatpush1.msra.mxu0 0.0
        %2129 = vmatprep.subr.mxu0 0.0
        %2130 = vmatpush1.msra.mxu0 0.0
        %2131 = vmatprep.subr.mxu0 0.0
        %2132 = vmatpush1.msra.mxu0 0.0
        %2133 = vmatprep.subr.mxu0 0.0
        %2134 = vmatpush1.msra.mxu0 0.0
        %2135 = vmatprep.subr.mxu0 0.0
        %2136 = vmatpush1.msra.mxu0 0.0
        %2137 = vmatprep.subr.mxu0 0.0
        %2138 = vmatpush1.msra.mxu0 0.0
        %2139 = vmatprep.subr.mxu0 0.0
        %2140 = vmatpush1.msra.mxu0 0.0
        %2141 = vmatprep.subr.mxu0 0.0
        %2142 = vmatpush1.msra.mxu0 0.0
        %2143 = vmatprep.subr.mxu0 0.0
        %2144 = vmatpush1.msra.mxu0 0.0
        %2145 = vmatprep.subr.mxu0 0.0
        %2146 = vmatpush1.msra.mxu0 0.0
        %2147 = vmatprep.subr.mxu0 0.0
        %2148 = vmatpush1.msra.mxu0 0.0
        %2149 = vmatprep.mubr.f32.mxu0 0.0
        %2150 = vmatmul.mubr.f32.gmra.mrb[0].mxu0 %v2012
        %v2151 = vpop.f32.mrb[0].mxu0
        %v2152 = vadd.f32 0.0, %v2151
        %v2153 = vpop.f32.mrb[0].mxu0
        %v2154 = vadd.f32 0.0, %v2153
        %2155 = vdwg.mxu0
        %v2157 = vlaneseq
        %v2158 = vshrl.u32 %v2157, 7
        %v2159 = vsub.s32 0, %v2158
        %v2160 = vrot.slane %v1986, %v2159
        %v2161 = vlaneseq
        %v2162 = vshrl.u32 %v2161, 7
        %v2163 = vsub.s32 1, %v2162
        %v2164 = vrot.slane %v1986, %v2163
        %v2165 = vlaneseq
        %v2166 = vshrl.u32 %v2165, 7
        %v2167 = vsub.s32 2, %v2166
        %v2168 = vrot.slane %v1986, %v2167
        %v2169 = vlaneseq
        %v2170 = vshrl.u32 %v2169, 7
        %v2171 = vsub.s32 3, %v2170
        %v2172 = vrot.slane %v1986, %v2171
        %v2177 = vmul.f32 %v2081, %v2160
        %v2178 = vmul.f32 %v2083, %v2164
        %v2179 = vmul.f32 %v2152, %v2168
        %v2180 = vmul.f32 %v2154, %v2172
        %v2181 = vmul.f32 %v2177, 1.442695
        %v2182 = vpow.pop %v2181
        %v2183 = vmul.f32 %v2178, 1.442695
        %v2184 = vpow.pop %v2183
        %v2185 = vmul.f32 %v2179, 1.442695
        %v2186 = vpow.pop %v2185
        %v2187 = vmul.f32 %v2180, 1.442695
        %v2188 = vpow.pop %v2187
        %v2189 = vmul.f32 %v1982, %v1720
        %v2191 = vsel %vm1723, %v2189, 0
        %2193 = vmatprep.subr.mxu0 %v1988
        %2194 = vmatpush1.msra.mxu0 %v1987
        %2195 = vmatprep.subr.mxu0 %v1992
        %2196 = vmatpush1.msra.mxu0 %v1991
        %2197 = vmatprep.subr.mxu0 %v1996
        %2198 = vmatpush1.msra.mxu0 %v1995
        %2199 = vmatprep.subr.mxu0 %v2000
        %2200 = vmatpush1.msra.mxu0 %v1999
        %2201 = vmatprep.subr.mxu0 0.0
        %2202 = vmatpush1.msra.mxu0 0.0
        %2203 = vmatprep.subr.mxu0 0.0
        %2204 = vmatpush1.msra.mxu0 0.0
        %2205 = vmatprep.subr.mxu0 0.0
        %2206 = vmatpush1.msra.mxu0 0.0
        %2207 = vmatprep.subr.mxu0 0.0
        %2208 = vmatpush1.msra.mxu0 0.0
        %2209 = vmatprep.subr.mxu0 0.0
        %2210 = vmatpush1.msra.mxu0 0.0
        %2211 = vmatprep.subr.mxu0 0.0
        %2212 = vmatpush1.msra.mxu0 0.0
        %2213 = vmatprep.subr.mxu0 0.0
        %2214 = vmatpush1.msra.mxu0 0.0
        %2215 = vmatprep.subr.mxu0 0.0
        %2216 = vmatpush1.msra.mxu0 0.0
        %2217 = vmatprep.subr.mxu0 0.0
        %2218 = vmatpush1.msra.mxu0 0.0
        %2219 = vmatprep.subr.mxu0 0.0
        %2220 = vmatpush1.msra.mxu0 0.0
        %2221 = vmatprep.subr.mxu0 0.0
        %2222 = vmatpush1.msra.mxu0 0.0
        %2223 = vmatprep.subr.mxu0 0.0
        %2224 = vmatpush1.msra.mxu0 0.0
        %2225 = vmatprep.subr.mxu0 0.0
        %2226 = vmatpush1.msra.mxu0 0.0
        %2227 = vmatprep.subr.mxu0 0.0
        %2228 = vmatpush1.msra.mxu0 0.0
        %2229 = vmatprep.subr.mxu0 0.0
        %2230 = vmatpush1.msra.mxu0 0.0
        %2231 = vmatprep.subr.mxu0 0.0
        %2232 = vmatpush1.msra.mxu0 0.0
        %2233 = vmatprep.subr.mxu0 0.0
        %2234 = vmatpush1.msra.mxu0 0.0
        %2235 = vmatprep.subr.mxu0 0.0
        %2236 = vmatpush1.msra.mxu0 0.0
        %2237 = vmatprep.subr.mxu0 0.0
        %2238 = vmatpush1.msra.mxu0 0.0
        %2239 = vmatprep.subr.mxu0 0.0
        %2240 = vmatpush1.msra.mxu0 0.0
        %2241 = vmatprep.subr.mxu0 0.0
        %2242 = vmatpush1.msra.mxu0 0.0
        %2243 = vmatprep.subr.mxu0 0.0
        %2244 = vmatpush1.msra.mxu0 0.0
        %2245 = vmatprep.subr.mxu0 0.0
        %2246 = vmatpush1.msra.mxu0 0.0
        %2247 = vmatprep.subr.mxu0 0.0
        %2248 = vmatpush1.msra.mxu0 0.0
        %2249 = vmatprep.subr.mxu0 0.0
        %2250 = vmatpush1.msra.mxu0 0.0
        %2251 = vmatprep.subr.mxu0 0.0
        %2252 = vmatpush1.msra.mxu0 0.0
        %2253 = vmatprep.subr.mxu0 0.0
        %2254 = vmatpush1.msra.mxu0 0.0
        %2255 = vmatprep.subr.mxu0 0.0
        %2256 = vmatpush1.msra.mxu0 0.0
        %2257 = vmatprep.mubr.f32.mxu0 0.0
        %2258 = vmatmul.mubr.f32.gmra.mrb[0].mxu0 %v2191
        %v2259 = vpop.f32.mrb[0].mxu0
        %v2260 = vadd.f32 0.0, %v2259
        %v2261 = vpop.f32.mrb[0].mxu0
        %v2262 = vadd.f32 0.0, %v2261
        %2263 = vdwg.mxu0
        %2264 = vmatprep.subr.mxu0 %v1990
        %2265 = vmatpush1.msra.mxu0 %v1989
        %2266 = vmatprep.subr.mxu0 %v1994
        %2267 = vmatpush1.msra.mxu0 %v1993
        %2268 = vmatprep.subr.mxu0 %v1998
        %2269 = vmatpush1.msra.mxu0 %v1997
        %2270 = vmatprep.subr.mxu0 %v2002
        %2271 = vmatpush1.msra.mxu0 %v2001
        %2272 = vmatprep.subr.mxu0 0.0
        %2273 = vmatpush1.msra.mxu0 0.0
        %2274 = vmatprep.subr.mxu0 0.0
        %2275 = vmatpush1.msra.mxu0 0.0
        %2276 = vmatprep.subr.mxu0 0.0
        %2277 = vmatpush1.msra.mxu0 0.0
        %2278 = vmatprep.subr.mxu0 0.0
        %2279 = vmatpush1.msra.mxu0 0.0
        %2280 = vmatprep.subr.mxu0 0.0
        %2281 = vmatpush1.msra.mxu0 0.0
        %2282 = vmatprep.subr.mxu0 0.0
        %2283 = vmatpush1.msra.mxu0 0.0
        %2284 = vmatprep.subr.mxu0 0.0
        %2285 = vmatpush1.msra.mxu0 0.0
        %2286 = vmatprep.subr.mxu0 0.0
        %2287 = vmatpush1.msra.mxu0 0.0
        %2288 = vmatprep.subr.mxu0 0.0
        %2289 = vmatpush1.msra.mxu0 0.0
        %2290 = vmatprep.subr.mxu0 0.0
        %2291 = vmatpush1.msra.mxu0 0.0
        %2292 = vmatprep.subr.mxu0 0.0
        %2293 = vmatpush1.msra.mxu0 0.0
        %2294 = vmatprep.subr.mxu0 0.0
        %2295 = vmatpush1.msra.mxu0 0.0
        %2296 = vmatprep.subr.mxu0 0.0
        %2297 = vmatpush1.msra.mxu0 0.0
        %2298 = vmatprep.subr.mxu0 0.0
        %2299 = vmatpush1.msra.mxu0 0.0
        %2300 = vmatprep.subr.mxu0 0.0
        %2301 = vmatpush1.msra.mxu0 0.0
        %2302 = vmatprep.subr.mxu0 0.0
        %2303 = vmatpush1.msra.mxu0 0.0
        %2304 = vmatprep.subr.mxu0 0.0
        %2305 = vmatpush1.msra.mxu0 0.0
        %2306 = vmatprep.subr.mxu0 0.0
        %2307 = vmatpush1.msra.mxu0 0.0
        %2308 = vmatprep.subr.mxu0 0.0
        %2309 = vmatpush1.msra.mxu0 0.0
        %2310 = vmatprep.subr.mxu0 0.0
        %2311 = vmatpush1.msra.mxu0 0.0
        %2312 = vmatprep.subr.mxu0 0.0
        %2313 = vmatpush1.msra.mxu0 0.0
        %2314 = vmatprep.subr.mxu0 0.0
        %2315 = vmatpush1.msra.mxu0 0.0
        %2316 = vmatprep.subr.mxu0 0.0
        %2317 = vmatpush1.msra.mxu0 0.0
        %2318 = vmatprep.subr.mxu0 0.0
        %2319 = vmatpush1.msra.mxu0 0.0
        %2320 = vmatprep.subr.mxu0 0.0
        %2321 = vmatpush1.msra.mxu0 0.0
        %2322 = vmatprep.subr.mxu0 0.0
        %2323 = vmatpush1.msra.mxu0 0.0
        %2324 = vmatprep.subr.mxu0 0.0
        %2325 = vmatpush1.msra.mxu0 0.0
        %2326 = vmatprep.subr.mxu0 0.0
        %2327 = vmatpush1.msra.mxu0 0.0
        %2328 = vmatprep.mubr.f32.mxu0 0.0
        %2329 = vmatmul.mubr.f32.gmra.mrb[0].mxu0 %v2191
        %v2330 = vpop.f32.mrb[0].mxu0
        %v2331 = vadd.f32 0.0, %v2330
        %v2332 = vpop.f32.mrb[0].mxu0
        %v2333 = vadd.f32 0.0, %v2332
        %2334 = vdwg.mxu0
        %v2336 = vsel %vm981, %v1800, 0
        %2338 = vmatprep.subr.mxu0 %v2004
        %2339 = vmatpush1.msra.mxu0 %v2003
        %2340 = vmatprep.subr.mxu0 %v2008
        %2341 = vmatpush1.msra.mxu0 %v2007
        %2342 = vmatprep.subr.mxu0 0.0
        %2343 = vmatpush1.msra.mxu0 0.0
        %2344 = vmatprep.subr.mxu0 0.0
        %2345 = vmatpush1.msra.mxu0 0.0
        %2346 = vmatprep.subr.mxu0 0.0
        %2347 = vmatpush1.msra.mxu0 0.0
        %2348 = vmatprep.subr.mxu0 0.0
        %2349 = vmatpush1.msra.mxu0 0.0
        %2350 = vmatprep.subr.mxu0 0.0
        %2351 = vmatpush1.msra.mxu0 0.0
        %2352 = vmatprep.subr.mxu0 0.0
        %2353 = vmatpush1.msra.mxu0 0.0
        %2354 = vmatprep.subr.mxu0 0.0
        %2355 = vmatpush1.msra.mxu0 0.0
        %2356 = vmatprep.subr.mxu0 0.0
        %2357 = vmatpush1.msra.mxu0 0.0
        %2358 = vmatprep.subr.mxu0 0.0
        %2359 = vmatpush1.msra.mxu0 0.0
        %2360 = vmatprep.subr.mxu0 0.0
        %2361 = vmatpush1.msra.mxu0 0.0
        %2362 = vmatprep.subr.mxu0 0.0
        %2363 = vmatpush1.msra.mxu0 0.0
        %2364 = vmatprep.subr.mxu0 0.0
        %2365 = vmatpush1.msra.mxu0 0.0
        %2366 = vmatprep.subr.mxu0 0.0
        %2367 = vmatpush1.msra.mxu0 0.0
        %2368 = vmatprep.subr.mxu0 0.0
        %2369 = vmatpush1.msra.mxu0 0.0
        %2370 = vmatprep.subr.mxu0 0.0
        %2371 = vmatpush1.msra.mxu0 0.0
        %2372 = vmatprep.subr.mxu0 0.0
        %2373 = vmatpush1.msra.mxu0 0.0
        %2374 = vmatprep.subr.mxu0 0.0
        %2375 = vmatpush1.msra.mxu0 0.0
        %2376 = vmatprep.subr.mxu0 0.0
        %2377 = vmatpush1.msra.mxu0 0.0
        %2378 = vmatprep.subr.mxu0 0.0
        %2379 = vmatpush1.msra.mxu0 0.0
        %2380 = vmatprep.subr.mxu0 0.0
        %2381 = vmatpush1.msra.mxu0 0.0
        %2382 = vmatprep.subr.mxu0 0.0
        %2383 = vmatpush1.msra.mxu0 0.0
        %2384 = vmatprep.subr.mxu0 0.0
        %2385 = vmatpush1.msra.mxu0 0.0
        %2386 = vmatprep.subr.mxu0 0.0
        %2387 = vmatpush1.msra.mxu0 0.0
        %2388 = vmatprep.subr.mxu0 0.0
        %2389 = vmatpush1.msra.mxu0 0.0
        %2390 = vmatprep.subr.mxu0 0.0
        %2391 = vmatpush1.msra.mxu0 0.0
        %2392 = vmatprep.subr.mxu0 0.0
        %2393 = vmatpush1.msra.mxu0 0.0
        %2394 = vmatprep.subr.mxu0 0.0
        %2395 = vmatpush1.msra.mxu0 0.0
        %2396 = vmatprep.subr.mxu0 0.0
        %2397 = vmatpush1.msra.mxu0 0.0
        %2398 = vmatprep.subr.mxu0 0.0
        %2399 = vmatpush1.msra.mxu0 0.0
        %2400 = vmatprep.subr.mxu0 0.0
        %2401 = vmatpush1.msra.mxu0 0.0
        %2402 = vmatprep.mubr.f32.mxu0 0.0
        %2403 = vmatmul.mubr.f32.gmra.mrb[0].mxu0 %v2336
        %v2404 = vpop.f32.mrb[0].mxu0
        %v2405 = vadd.f32 0.0, %v2404
        %v2406 = vpop.f32.mrb[0].mxu0
        %v2407 = vadd.f32 0.0, %v2406
        %2408 = vdwg.mxu0
        %2409 = vmatprep.subr.mxu0 %v2006
        %2410 = vmatpush1.msra.mxu0 %v2005
        %2411 = vmatprep.subr.mxu0 %v2010
        %2412 = vmatpush1.msra.mxu0 %v2009
        %2413 = vmatprep.subr.mxu0 0.0
        %2414 = vmatpush1.msra.mxu0 0.0
        %2415 = vmatprep.subr.mxu0 0.0
        %2416 = vmatpush1.msra.mxu0 0.0
        %2417 = vmatprep.subr.mxu0 0.0
        %2418 = vmatpush1.msra.mxu0 0.0
        %2419 = vmatprep.subr.mxu0 0.0
        %2420 = vmatpush1.msra.mxu0 0.0
        %2421 = vmatprep.subr.mxu0 0.0
        %2422 = vmatpush1.msra.mxu0 0.0
        %2423 = vmatprep.subr.mxu0 0.0
        %2424 = vmatpush1.msra.mxu0 0.0
        %2425 = vmatprep.subr.mxu0 0.0
        %2426 = vmatpush1.msra.mxu0 0.0
        %2427 = vmatprep.subr.mxu0 0.0
        %2428 = vmatpush1.msra.mxu0 0.0
        %2429 = vmatprep.subr.mxu0 0.0
        %2430 = vmatpush1.msra.mxu0 0.0
        %2431 = vmatprep.subr.mxu0 0.0
        %2432 = vmatpush1.msra.mxu0 0.0
        %2433 = vmatprep.subr.mxu0 0.0
        %2434 = vmatpush1.msra.mxu0 0.0
        %2435 = vmatprep.subr.mxu0 0.0
        %2436 = vmatpush1.msra.mxu0 0.0
        %2437 = vmatprep.subr.mxu0 0.0
        %2438 = vmatpush1.msra.mxu0 0.0
        %2439 = vmatprep.subr.mxu0 0.0
        %2440 = vmatpush1.msra.mxu0 0.0
        %2441 = vmatprep.subr.mxu0 0.0
        %2442 = vmatpush1.msra.mxu0 0.0
        %2443 = vmatprep.subr.mxu0 0.0
        %2444 = vmatpush1.msra.mxu0 0.0
        %2445 = vmatprep.subr.mxu0 0.0
        %2446 = vmatpush1.msra.mxu0 0.0
        %2447 = vmatprep.subr.mxu0 0.0
        %2448 = vmatpush1.msra.mxu0 0.0
        %2449 = vmatprep.subr.mxu0 0.0
        %2450 = vmatpush1.msra.mxu0 0.0
        %2451 = vmatprep.subr.mxu0 0.0
        %2452 = vmatpush1.msra.mxu0 0.0
        %2453 = vmatprep.subr.mxu0 0.0
        %2454 = vmatpush1.msra.mxu0 0.0
        %2455 = vmatprep.subr.mxu0 0.0
        %2456 = vmatpush1.msra.mxu0 0.0
        %2457 = vmatprep.subr.mxu0 0.0
        %2458 = vmatpush1.msra.mxu0 0.0
        %2459 = vmatprep.subr.mxu0 0.0
        %2460 = vmatpush1.msra.mxu0 0.0
        %2461 = vmatprep.subr.mxu0 0.0
        %2462 = vmatpush1.msra.mxu0 0.0
        %2463 = vmatprep.subr.mxu0 0.0
        %2464 = vmatpush1.msra.mxu0 0.0
        %2465 = vmatprep.subr.mxu0 0.0
        %2466 = vmatpush1.msra.mxu0 0.0
        %2467 = vmatprep.subr.mxu0 0.0
        %2468 = vmatpush1.msra.mxu0 0.0
        %2469 = vmatprep.subr.mxu0 0.0
        %2470 = vmatpush1.msra.mxu0 0.0
        %2471 = vmatprep.subr.mxu0 0.0
        %2472 = vmatpush1.msra.mxu0 0.0
        %2473 = vmatprep.mubr.f32.mxu0 0.0
        %2474 = vmatmul.mubr.f32.gmra.mrb[0].mxu0 %v2336
        %v2475 = vpop.f32.mrb[0].mxu0
        %v2476 = vadd.f32 0.0, %v2475
        %v2477 = vpop.f32.mrb[0].mxu0
        %v2478 = vadd.f32 0.0, %v2477
        %2479 = vdwg.mxu0
        %v2480 = vmul.f32 %v2260, %v2405
        %v2481 = vmul.f32 %v2262, %v2407
        %v2482 = vmul.f32 %v2331, %v2476
        %v2483 = vmul.f32 %v2333, %v2478
        %v2485 = vsel %vm981, %v1878, 0
        %2487 = vmatprep.subr.mxu0 %v2004
        %2488 = vmatpush1.msra.mxu0 %v2003
        %2489 = vmatprep.subr.mxu0 %v2008
        %2490 = vmatpush1.msra.mxu0 %v2007
        %2491 = vmatprep.subr.mxu0 0.0
        %2492 = vmatpush1.msra.mxu0 0.0
        %2493 = vmatprep.subr.mxu0 0.0
        %2494 = vmatpush1.msra.mxu0 0.0
        %2495 = vmatprep.subr.mxu0 0.0
        %2496 = vmatpush1.msra.mxu0 0.0
        %2497 = vmatprep.subr.mxu0 0.0
        %2498 = vmatpush1.msra.mxu0 0.0
        %2499 = vmatprep.subr.mxu0 0.0
        %2500 = vmatpush1.msra.mxu0 0.0
        %2501 = vmatprep.subr.mxu0 0.0
        %2502 = vmatpush1.msra.mxu0 0.0
        %2503 = vmatprep.subr.mxu0 0.0
        %2504 = vmatpush1.msra.mxu0 0.0
        %2505 = vmatprep.subr.mxu0 0.0
        %2506 = vmatpush1.msra.mxu0 0.0
        %2507 = vmatprep.subr.mxu0 0.0
        %2508 = vmatpush1.msra.mxu0 0.0
        %2509 = vmatprep.subr.mxu0 0.0
        %2510 = vmatpush1.msra.mxu0 0.0
        %2511 = vmatprep.subr.mxu0 0.0
        %2512 = vmatpush1.msra.mxu0 0.0
        %2513 = vmatprep.subr.mxu0 0.0
        %2514 = vmatpush1.msra.mxu0 0.0
        %2515 = vmatprep.subr.mxu0 0.0
        %2516 = vmatpush1.msra.mxu0 0.0
        %2517 = vmatprep.subr.mxu0 0.0
        %2518 = vmatpush1.msra.mxu0 0.0
        %2519 = vmatprep.subr.mxu0 0.0
        %2520 = vmatpush1.msra.mxu0 0.0
        %2521 = vmatprep.subr.mxu0 0.0
        %2522 = vmatpush1.msra.mxu0 0.0
        %2523 = vmatprep.subr.mxu0 0.0
        %2524 = vmatpush1.msra.mxu0 0.0
        %2525 = vmatprep.subr.mxu0 0.0
        %2526 = vmatpush1.msra.mxu0 0.0
        %2527 = vmatprep.subr.mxu0 0.0
        %2528 = vmatpush1.msra.mxu0 0.0
        %2529 = vmatprep.subr.mxu0 0.0
        %2530 = vmatpush1.msra.mxu0 0.0
        %2531 = vmatprep.subr.mxu0 0.0
        %2532 = vmatpush1.msra.mxu0 0.0
        %2533 = vmatprep.subr.mxu0 0.0
        %2534 = vmatpush1.msra.mxu0 0.0
        %2535 = vmatprep.subr.mxu0 0.0
        %2536 = vmatpush1.msra.mxu0 0.0
        %2537 = vmatprep.subr.mxu0 0.0
        %2538 = vmatpush1.msra.mxu0 0.0
        %2539 = vmatprep.subr.mxu0 0.0
        %2540 = vmatpush1.msra.mxu0 0.0
        %2541 = vmatprep.subr.mxu0 0.0
        %2542 = vmatpush1.msra.mxu0 0.0
        %2543 = vmatprep.subr.mxu0 0.0
        %2544 = vmatpush1.msra.mxu0 0.0
        %2545 = vmatprep.subr.mxu0 0.0
        %2546 = vmatpush1.msra.mxu0 0.0
        %2547 = vmatprep.subr.mxu0 0.0
        %2548 = vmatpush1.msra.mxu0 0.0
        %2549 = vmatprep.subr.mxu0 0.0
        %2550 = vmatpush1.msra.mxu0 0.0
        %2551 = vmatprep.mubr.f32.mxu0 0.0
        %2552 = vmatmul.mubr.f32.gmra.mrb[0].mxu0 %v2485
        %v2553 = vpop.f32.mrb[0].mxu0
        %v2554 = vadd.f32 0.0, %v2553
        %v2555 = vpop.f32.mrb[0].mxu0
        %v2556 = vadd.f32 0.0, %v2555
        %2557 = vdwg.mxu0
        %2558 = vmatprep.subr.mxu0 %v2006
        %2559 = vmatpush1.msra.mxu0 %v2005
        %2560 = vmatprep.subr.mxu0 %v2010
        %2561 = vmatpush1.msra.mxu0 %v2009
        %2562 = vmatprep.subr.mxu0 0.0
        %2563 = vmatpush1.msra.mxu0 0.0
        %2564 = vmatprep.subr.mxu0 0.0
        %2565 = vmatpush1.msra.mxu0 0.0
        %2566 = vmatprep.subr.mxu0 0.0
        %2567 = vmatpush1.msra.mxu0 0.0
        %2568 = vmatprep.subr.mxu0 0.0
        %2569 = vmatpush1.msra.mxu0 0.0
        %2570 = vmatprep.subr.mxu0 0.0
        %2571 = vmatpush1.msra.mxu0 0.0
        %2572 = vmatprep.subr.mxu0 0.0
        %2573 = vmatpush1.msra.mxu0 0.0
        %2574 = vmatprep.subr.mxu0 0.0
        %2575 = vmatpush1.msra.mxu0 0.0
        %2576 = vmatprep.subr.mxu0 0.0
        %2577 = vmatpush1.msra.mxu0 0.0
        %2578 = vmatprep.subr.mxu0 0.0
        %2579 = vmatpush1.msra.mxu0 0.0
        %2580 = vmatprep.subr.mxu0 0.0
        %2581 = vmatpush1.msra.mxu0 0.0
        %2582 = vmatprep.subr.mxu0 0.0
        %2583 = vmatpush1.msra.mxu0 0.0
        %2584 = vmatprep.subr.mxu0 0.0
        %2585 = vmatpush1.msra.mxu0 0.0
        %2586 = vmatprep.subr.mxu0 0.0
        %2587 = vmatpush1.msra.mxu0 0.0
        %2588 = vmatprep.subr.mxu0 0.0
        %2589 = vmatpush1.msra.mxu0 0.0
        %2590 = vmatprep.subr.mxu0 0.0
        %2591 = vmatpush1.msra.mxu0 0.0
        %2592 = vmatprep.subr.mxu0 0.0
        %2593 = vmatpush1.msra.mxu0 0.0
        %2594 = vmatprep.subr.mxu0 0.0
        %2595 = vmatpush1.msra.mxu0 0.0
        %2596 = vmatprep.subr.mxu0 0.0
        %2597 = vmatpush1.msra.mxu0 0.0
        %2598 = vmatprep.subr.mxu0 0.0
        %2599 = vmatpush1.msra.mxu0 0.0
        %2600 = vmatprep.subr.mxu0 0.0
        %2601 = vmatpush1.msra.mxu0 0.0
        %2602 = vmatprep.subr.mxu0 0.0
        %2603 = vmatpush1.msra.mxu0 0.0
        %2604 = vmatprep.subr.mxu0 0.0
        %2605 = vmatpush1.msra.mxu0 0.0
        %2606 = vmatprep.subr.mxu0 0.0
        %2607 = vmatpush1.msra.mxu0 0.0
        %2608 = vmatprep.subr.mxu0 0.0
        %2609 = vmatpush1.msra.mxu0 0.0
        %2610 = vmatprep.subr.mxu0 0.0
        %2611 = vmatpush1.msra.mxu0 0.0
        %2612 = vmatprep.subr.mxu0 0.0
        %2613 = vmatpush1.msra.mxu0 0.0
        %2614 = vmatprep.subr.mxu0 0.0
        %2615 = vmatpush1.msra.mxu0 0.0
        %2616 = vmatprep.subr.mxu0 0.0
        %2617 = vmatpush1.msra.mxu0 0.0
        %2618 = vmatprep.subr.mxu0 0.0
        %2619 = vmatpush1.msra.mxu0 0.0
        %2620 = vmatprep.subr.mxu0 0.0
        %2621 = vmatpush1.msra.mxu0 0.0
        %2622 = vmatprep.mubr.f32.mxu0 0.0
        %2623 = vmatmul.mubr.f32.gmra.mrb[0].mxu0 %v2485
        %v2624 = vpop.f32.mrb[0].mxu0
        %v2625 = vadd.f32 0.0, %v2624
        %v2626 = vpop.f32.mrb[0].mxu0
        %v2627 = vadd.f32 0.0, %v2626
        %2628 = vdwg.mxu0
        %v2629 = vmul.f32 %v2182, 0.0
        %v2630 = vmul.f32 %v2184, 0.0
        %v2631 = vmul.f32 %v2186, 0.0
        %v2632 = vmul.f32 %v2188, 0.0
        %v2633 = vadd.f32 %v2629, %v2480
        %v2634 = vadd.f32 %v2630, %v2481
        %v2635 = vadd.f32 %v2631, %v2482
        %v2636 = vadd.f32 %v2632, %v2483
        %v2641 = vrot.slane %v2633, 7
        %v2642 = vrot.slane %v2634, 7
        %v2643 = vrot.slane %v2635, 7
        %v2644 = vrot.slane %v2636, 7
        %v2649 = vmul.f32 %v2182, %v2641
        %v2650 = vmul.f32 %v2184, %v2642
        %v2651 = vmul.f32 %v2186, %v2643
        %v2652 = vmul.f32 %v2188, %v2644
        %v2653 = vadd.f32 %v2649, %v2480
        %v2654 = vadd.f32 %v2650, %v2481
        %v2655 = vadd.f32 %v2651, %v2482
        %v2656 = vadd.f32 %v2652, %v2483
        %v2661 = vrot.slane %v2653, 7
        %v2662 = vrot.slane %v2654, 7
        %v2663 = vrot.slane %v2655, 7
        %v2664 = vrot.slane %v2656, 7
        %v2669 = vmul.f32 %v2182, %v2661
        %v2670 = vmul.f32 %v2184, %v2662
        %v2671 = vmul.f32 %v2186, %v2663
        %v2672 = vmul.f32 %v2188, %v2664
        %v2673 = vadd.f32 %v2669, %v2480
        %v2674 = vadd.f32 %v2670, %v2481
        %v2675 = vadd.f32 %v2671, %v2482
        %v2676 = vadd.f32 %v2672, %v2483
        %v2681 = vrot.slane %v2673, 7
        %v2682 = vrot.slane %v2674, 7
        %v2683 = vrot.slane %v2675, 7
        %v2684 = vrot.slane %v2676, 7
        %v2689 = vmul.f32 %v2182, %v2681
        %v2690 = vmul.f32 %v2184, %v2682
        %v2691 = vmul.f32 %v2186, %v2683
        %v2692 = vmul.f32 %v2188, %v2684
        %v2693 = vadd.f32 %v2689, %v2480
        %v2694 = vadd.f32 %v2690, %v2481
        %v2695 = vadd.f32 %v2691, %v2482
        %v2696 = vadd.f32 %v2692, %v2483
        %v2701 = vrot.slane %v2693, 7
        %v2702 = vrot.slane %v2694, 7
        %v2703 = vrot.slane %v2695, 7
        %v2704 = vrot.slane %v2696, 7
        %v2709 = vmul.f32 %v2182, %v2701
        %v2710 = vmul.f32 %v2184, %v2702
        %v2711 = vmul.f32 %v2186, %v2703
        %v2712 = vmul.f32 %v2188, %v2704
        %v2713 = vadd.f32 %v2709, %v2480
        %v2714 = vadd.f32 %v2710, %v2481
        %v2715 = vadd.f32 %v2711, %v2482
        %v2716 = vadd.f32 %v2712, %v2483
        %v2721 = vrot.slane %v2713, 7
        %v2722 = vrot.slane %v2714, 7
        %v2723 = vrot.slane %v2715, 7
        %v2724 = vrot.slane %v2716, 7
        %v2729 = vmul.f32 %v2182, %v2721
        %v2730 = vmul.f32 %v2184, %v2722
        %v2731 = vmul.f32 %v2186, %v2723
        %v2732 = vmul.f32 %v2188, %v2724
        %v2733 = vadd.f32 %v2729, %v2480
        %v2734 = vadd.f32 %v2730, %v2481
        %v2735 = vadd.f32 %v2731, %v2482
        %v2736 = vadd.f32 %v2732, %v2483
        %v2741 = vrot.slane %v2733, 7
        %v2742 = vrot.slane %v2734, 7
        %v2743 = vrot.slane %v2735, 7
        %v2744 = vrot.slane %v2736, 7
        %v2749 = vmul.f32 %v2182, %v2741
        %v2750 = vmul.f32 %v2184, %v2742
        %v2751 = vmul.f32 %v2186, %v2743
        %v2752 = vmul.f32 %v2188, %v2744
        %v2753 = vadd.f32 %v2749, %v2480
        %v2754 = vadd.f32 %v2750, %v2481
        %v2755 = vadd.f32 %v2751, %v2482
        %v2756 = vadd.f32 %v2752, %v2483
        %v2761 = vrot.slane %v2753, 7
        %v2762 = vrot.slane %v2754, 7
        %v2763 = vrot.slane %v2755, 7
        %v2764 = vrot.slane %v2756, 7
        %v2769 = vmul.f32 %v2182, %v2761
        %v2770 = vmul.f32 %v2184, %v2762
        %v2771 = vmul.f32 %v2186, %v2763
        %v2772 = vmul.f32 %v2188, %v2764
        %v2773 = vadd.f32 %v2769, %v2480
        %v2774 = vadd.f32 %v2770, %v2481
        %v2775 = vadd.f32 %v2771, %v2482
        %v2776 = vadd.f32 %v2772, %v2483
        %vm2777 = vcmask 1040384
        %v2778 = vsel %vm2777, %v2633, %v2653
        %v2779 = vsel %vm2777, %v2634, %v2654
        %v2780 = vsel %vm2777, %v2635, %v2655
        %v2781 = vsel %vm2777, %v2636, %v2656
        %vm2782 = vcmask 1041408
        %v2783 = vsel %vm2782, %v2778, %v2673
        %v2784 = vsel %vm2782, %v2779, %v2674
        %v2785 = vsel %vm2782, %v2780, %v2675
        %v2786 = vsel %vm2782, %v2781, %v2676
        %v2787 = vsel %vm1489, %v2783, %v2693
        %v2788 = vsel %vm1489, %v2784, %v2694
        %v2789 = vsel %vm1489, %v2785, %v2695
        %v2790 = vsel %vm1489, %v2786, %v2696
        %vm2791 = vcmask 1043456
        %v2792 = vsel %vm2791, %v2787, %v2713
        %v2793 = vsel %vm2791, %v2788, %v2714
        %v2794 = vsel %vm2791, %v2789, %v2715
        %v2795 = vsel %vm2791, %v2790, %v2716
        %v2796 = vsel %vm1708, %v2792, %v2733
        %v2797 = vsel %vm1708, %v2793, %v2734
        %v2798 = vsel %vm1708, %v2794, %v2735
        %v2799 = vsel %vm1708, %v2795, %v2736
        %v2800 = vsel %vm1650, %v2796, %v2753
        %v2801 = vsel %vm1650, %v2797, %v2754
        %v2802 = vsel %vm1650, %v2798, %v2755
        %v2803 = vsel %vm1650, %v2799, %v2756
        %v2804 = vsel %vm1592, %v2800, %v2773
        %v2805 = vsel %vm1592, %v2801, %v2774
        %v2806 = vsel %vm1592, %v2802, %v2775
        %v2807 = vsel %vm1592, %v2803, %v2776
        %v2808 = vmul.f32 %v2804, %v2554
        %v2809 = vmul.f32 %v2805, %v2556
        %v2810 = vmul.f32 %v2806, %v2625
        %v2811 = vmul.f32 %v2807, %v2627
        %v2812 = vld [vmem:[%s15] sm:$0x1]
        %v2814 = vlaneseq
        %v2815 = vshrl.u32 %v2814, 7
        %v2816 = vsub.s32 0, %v2815
        %v2817 = vrot.slane %v2812, %v2816
        %v2819 = vmul.f32 %v1720, %v2817
        %2820 = vmatprep.subr.mxu0 %v1988
        %2821 = vmatpush1.xpose.msra.mxu0 %v1987
        %2822 = vmatprep.subr.mxu0 %v1992
        %2823 = vmatpush1.xpose.msra.mxu0 %v1991
        %2824 = vmatprep.subr.mxu0 %v1996
        %2825 = vmatpush1.xpose.msra.mxu0 %v1995
        %2826 = vmatprep.subr.mxu0 %v2000
        %2827 = vmatpush1.xpose.msra.mxu0 %v1999
        %2828 = vmatprep.subr.mxu0 0.0
        %2829 = vmatpush1.xpose.msra.mxu0 0.0
        %2830 = vmatprep.subr.mxu0 0.0
        %2831 = vmatpush1.xpose.msra.mxu0 0.0
        %2832 = vmatprep.subr.mxu0 0.0
        %2833 = vmatpush1.xpose.msra.mxu0 0.0
        %2834 = vmatprep.subr.mxu0 0.0
        %2835 = vmatpush1.xpose.msra.mxu0 0.0
        %2836 = vmatprep.subr.mxu0 0.0
        %2837 = vmatpush1.xpose.msra.mxu0 0.0
        %2838 = vmatprep.subr.mxu0 0.0
        %2839 = vmatpush1.xpose.msra.mxu0 0.0
        %2840 = vmatprep.subr.mxu0 0.0
        %2841 = vmatpush1.xpose.msra.mxu0 0.0
        %2842 = vmatprep.subr.mxu0 0.0
        %2843 = vmatpush1.xpose.msra.mxu0 0.0
        %2844 = vmatprep.subr.mxu0 0.0
        %2845 = vmatpush1.xpose.msra.mxu0 0.0
        %2846 = vmatprep.subr.mxu0 0.0
        %2847 = vmatpush1.xpose.msra.mxu0 0.0
        %2848 = vmatprep.subr.mxu0 0.0
        %2849 = vmatpush1.xpose.msra.mxu0 0.0
        %2850 = vmatprep.subr.mxu0 0.0
        %2851 = vmatpush1.xpose.msra.mxu0 0.0
        %2852 = vmatprep.subr.mxu0 0.0
        %2853 = vmatpush1.xpose.msra.mxu0 0.0
        %2854 = vmatprep.subr.mxu0 0.0
        %2855 = vmatpush1.xpose.msra.mxu0 0.0
        %2856 = vmatprep.subr.mxu0 0.0
        %2857 = vmatpush1.xpose.msra.mxu0 0.0
        %2858 = vmatprep.subr.mxu0 0.0
        %2859 = vmatpush1.xpose.msra.mxu0 0.0
        %2860 = vmatprep.subr.mxu0 0.0
        %2861 = vmatpush1.xpose.msra.mxu0 0.0
        %2862 = vmatprep.subr.mxu0 0.0
        %2863 = vmatpush1.xpose.msra.mxu0 0.0
        %2864 = vmatprep.subr.mxu0 0.0
        %2865 = vmatpush1.xpose.msra.mxu0 0.0
        %2866 = vmatprep.subr.mxu0 0.0
        %2867 = vmatpush1.xpose.msra.mxu0 0.0
        %2868 = vmatprep.subr.mxu0 0.0
        %2869 = vmatpush1.xpose.msra.mxu0 0.0
        %2870 = vmatprep.subr.mxu0 0.0
        %2871 = vmatpush1.xpose.msra.mxu0 0.0
        %2872 = vmatprep.subr.mxu0 0.0
        %2873 = vmatpush1.xpose.msra.mxu0 0.0
        %2874 = vmatprep.subr.mxu0 0.0
        %2875 = vmatpush1.xpose.msra.mxu0 0.0
        %2876 = vmatprep.subr.mxu0 0.0
        %2877 = vmatpush1.xpose.msra.mxu0 0.0
        %2878 = vmatprep.subr.mxu0 0.0
        %2879 = vmatpush1.xpose.msra.mxu0 0.0
        %2880 = vmatprep.subr.mxu0 0.0
        %2881 = vmatpush1.xpose.msra.mxu0 0.0
        %2882 = vmatprep.subr.mxu0 0.0
        %2883 = vmatpush1.xpose.msra.mxu0 0.0
        %2884 = vmatprep.mubr.f32.mxu0 %v2809
        %2885 = vmatmul.mubr.f32.gmra.mrb[0].mxu0 %v2808
        %v2886 = vpop.f32.mrb[0].mxu0
        %v2887 = vadd.f32 %v2819, %v2886
        %v2888 = vpop.f32.mrb[0].mxu0
        %2889 = vdwg.mxu0
        %2890 = vmatprep.subr.mxu0 %v1990
        %2891 = vmatpush1.xpose.msra.mxu0 %v1989
        %2892 = vmatprep.subr.mxu0 %v1994
        %2893 = vmatpush1.xpose.msra.mxu0 %v1993
        %2894 = vmatprep.subr.mxu0 %v1998
        %2895 = vmatpush1.xpose.msra.mxu0 %v1997
        %2896 = vmatprep.subr.mxu0 %v2002
        %2897 = vmatpush1.xpose.msra.mxu0 %v2001
        %2898 = vmatprep.subr.mxu0 0.0
        %2899 = vmatpush1.xpose.msra.mxu0 0.0
        %2900 = vmatprep.subr.mxu0 0.0
        %2901 = vmatpush1.xpose.msra.mxu0 0.0
        %2902 = vmatprep.subr.mxu0 0.0
        %2903 = vmatpush1.xpose.msra.mxu0 0.0
        %2904 = vmatprep.subr.mxu0 0.0
        %2905 = vmatpush1.xpose.msra.mxu0 0.0
        %2906 = vmatprep.subr.mxu0 0.0
        %2907 = vmatpush1.xpose.msra.mxu0 0.0
        %2908 = vmatprep.subr.mxu0 0.0
        %2909 = vmatpush1.xpose.msra.mxu0 0.0
        %2910 = vmatprep.subr.mxu0 0.0
        %2911 = vmatpush1.xpose.msra.mxu0 0.0
        %2912 = vmatprep.subr.mxu0 0.0
        %2913 = vmatpush1.xpose.msra.mxu0 0.0
        %2914 = vmatprep.subr.mxu0 0.0
        %2915 = vmatpush1.xpose.msra.mxu0 0.0
        %2916 = vmatprep.subr.mxu0 0.0
        %2917 = vmatpush1.xpose.msra.mxu0 0.0
        %2918 = vmatprep.subr.mxu0 0.0
        %2919 = vmatpush1.xpose.msra.mxu0 0.0
        %2920 = vmatprep.subr.mxu0 0.0
        %2921 = vmatpush1.xpose.msra.mxu0 0.0
        %2922 = vmatprep.subr.mxu0 0.0
        %2923 = vmatpush1.xpose.msra.mxu0 0.0
        %2924 = vmatprep.subr.mxu0 0.0
        %2925 = vmatpush1.xpose.msra.mxu0 0.0
        %2926 = vmatprep.subr.mxu0 0.0
        %2927 = vmatpush1.xpose.msra.mxu0 0.0
        %2928 = vmatprep.subr.mxu0 0.0
        %2929 = vmatpush1.xpose.msra.mxu0 0.0
        %2930 = vmatprep.subr.mxu0 0.0
        %2931 = vmatpush1.xpose.msra.mxu0 0.0
        %2932 = vmatprep.subr.mxu0 0.0
        %2933 = vmatpush1.xpose.msra.mxu0 0.0
        %2934 = vmatprep.subr.mxu0 0.0
        %2935 = vmatpush1.xpose.msra.mxu0 0.0
        %2936 = vmatprep.subr.mxu0 0.0
        %2937 = vmatpush1.xpose.msra.mxu0 0.0
        %2938 = vmatprep.subr.mxu0 0.0
        %2939 = vmatpush1.xpose.msra.mxu0 0.0
        %2940 = vmatprep.subr.mxu0 0.0
        %2941 = vmatpush1.xpose.msra.mxu0 0.0
        %2942 = vmatprep.subr.mxu0 0.0
        %2943 = vmatpush1.xpose.msra.mxu0 0.0
        %2944 = vmatprep.subr.mxu0 0.0
        %2945 = vmatpush1.xpose.msra.mxu0 0.0
        %2946 = vmatprep.subr.mxu0 0.0
        %2947 = vmatpush1.xpose.msra.mxu0 0.0
        %2948 = vmatprep.subr.mxu0 0.0
        %2949 = vmatpush1.xpose.msra.mxu0 0.0
        %2950 = vmatprep.subr.mxu0 0.0
        %2951 = vmatpush1.xpose.msra.mxu0 0.0
        %2952 = vmatprep.subr.mxu0 0.0
        %2953 = vmatpush1.xpose.msra.mxu0 0.0
        %2954 = vmatprep.mubr.f32.mxu0 %v2811
        %2955 = vmatmul.mubr.f32.gmra.mrb[0].mxu0 %v2810
        %v2956 = vpop.f32.mrb[0].mxu0
        %v2957 = vadd.f32 %v2887, %v2956
        %v2958 = vpop.f32.mrb[0].mxu0
        %2959 = vdwg.mxu0
        %v2960 = vsub.f32 0.0, %v1479
        %v2961 = vmul.f32 %v2960, 1.442695
        %v2962 = vpow.pop %v2961
        %v2963 = vadd.f32 %v2962, 1.0
        %v2964 = vrcp.pop %v2963
        %v2965 = vmul.f32 1.0, %v2964
        %v2966 = vmul.f32 %v1479, %v2965
        %v2967 = vmul.f32 %v2957, %v2966
        %v2968 = vld [vmem:[%s16] sm:$0xff]
        %v2969 = vld [vmem:[%s16 + $0x8] sm:$0xff]
        %v2971 = vsel %vm1723, %v2967, 0
        %v2974 = vsel %vm1723, %v2968, 0
        %v2977 = vsel %vm1723, %v2969, 0
        %2979 = vmatprep.subr.mxu0 0.0
        %2980 = vmatpush1.xpose.msra.mxu0 %v2974
        %2981 = vmatprep.subr.mxu0 0.0
        %2982 = vmatpush1.xpose.msra.mxu0 %v2977
        %2983 = vmatprep.subr.mxu0 0.0
        %2984 = vmatpush1.xpose.msra.mxu0 0.0
        %2985 = vmatprep.subr.mxu0 0.0
        %2986 = vmatpush1.xpose.msra.mxu0 0.0
        %2987 = vmatprep.subr.mxu0 0.0
        %2988 = vmatpush1.xpose.msra.mxu0 0.0
        %2989 = vmatprep.subr.mxu0 0.0
        %2990 = vmatpush1.xpose.msra.mxu0 0.0
        %2991 = vmatprep.subr.mxu0 0.0
        %2992 = vmatpush1.xpose.msra.mxu0 0.0
        %2993 = vmatprep.subr.mxu0 0.0
        %2994 = vmatpush1.xpose.msra.mxu0 0.0
        %2995 = vmatprep.subr.mxu0 0.0
        %2996 = vmatpush1.xpose.msra.mxu0 0.0
        %2997 = vmatprep.subr.mxu0 0.0
        %2998 = vmatpush1.xpose.msra.mxu0 0.0
        %2999 = vmatprep.subr.mxu0 0.0
        %3000 = vmatpush1.xpose.msra.mxu0 0.0
        %3001 = vmatprep.subr.mxu0 0.0
        %3002 = vmatpush1.xpose.msra.mxu0 0.0
        %3003 = vmatprep.subr.mxu0 0.0
        %3004 = vmatpush1.xpose.msra.mxu0 0.0
        %3005 = vmatprep.subr.mxu0 0.0
        %3006 = vmatpush1.xpose.msra.mxu0 0.0
        %3007 = vmatprep.subr.mxu0 0.0
        %3008 = vmatpush1.xpose.msra.mxu0 0.0
        %3009 = vmatprep.subr.mxu0 0.0
        %3010 = vmatpush1.xpose.msra.mxu0 0.0
        %3011 = vmatprep.subr.mxu0 0.0
        %3012 = vmatpush1.xpose.msra.mxu0 0.0
        %3013 = vmatprep.subr.mxu0 0.0
        %3014 = vmatpush1.xpose.msra.mxu0 0.0
        %3015 = vmatprep.subr.mxu0 0.0
        %3016 = vmatpush1.xpose.msra.mxu0 0.0
        %3017 = vmatprep.subr.mxu0 0.0
        %3018 = vmatpush1.xpose.msra.mxu0 0.0
        %3019 = vmatprep.subr.mxu0 0.0
        %3020 = vmatpush1.xpose.msra.mxu0 0.0
        %3021 = vmatprep.subr.mxu0 0.0
        %3022 = vmatpush1.xpose.msra.mxu0 0.0
        %3023 = vmatprep.subr.mxu0 0.0
        %3024 = vmatpush1.xpose.msra.mxu0 0.0
        %3025 = vmatprep.subr.mxu0 0.0
        %3026 = vmatpush1.xpose.msra.mxu0 0.0
        %3027 = vmatprep.subr.mxu0 0.0
        %3028 = vmatpush1.xpose.msra.mxu0 0.0
        %3029 = vmatprep.subr.mxu0 0.0
        %3030 = vmatpush1.xpose.msra.mxu0 0.0
        %3031 = vmatprep.subr.mxu0 0.0
        %3032 = vmatpush1.xpose.msra.mxu0 0.0
        %3033 = vmatprep.subr.mxu0 0.0
        %3034 = vmatpush1.xpose.msra.mxu0 0.0
        %3035 = vmatprep.subr.mxu0 0.0
        %3036 = vmatpush1.xpose.msra.mxu0 0.0
        %3037 = vmatprep.subr.mxu0 0.0
        %3038 = vmatpush1.xpose.msra.mxu0 0.0
        %3039 = vmatprep.subr.mxu0 0.0
        %3040 = vmatpush1.xpose.msra.mxu0 0.0
        %3041 = vmatprep.subr.mxu0 0.0
        %3042 = vmatpush1.xpose.msra.mxu0 0.0
        %3043 = vmatprep.mubr.f32.mxu0 0.0
        %3044 = vmatmul.mubr.f32.gmra.mrb[0].mxu0 %v2971
        %v3045 = vpop.f32.mrb[0].mxu0
        %v3046 = vadd.f32 0.0, %v3045
        %v3047 = vpop.f32.mrb[0].mxu0
        %3048 = vdwg.mxu0
        %3049 = vxpose.xlu0.b32.start [1/16] %v3046, 128
        %3050 = vxpose.xlu0.b32.cont [2/16] 0.0, 128
        %3051 = vxpose.xlu0.b32.cont [3/16] 0.0, 128
        %3052 = vxpose.xlu0.b32.cont [4/16] 0.0, 128
        %3053 = vxpose.xlu0.b32.cont [5/16] 0.0, 128
        %3054 = vxpose.xlu0.b32.cont [6/16] 0.0, 128
        %3055 = vxpose.xlu0.b32.cont [7/16] 0.0, 128
        %3056 = vxpose.xlu0.b32.cont [8/16] 0.0, 128
        %3057 = vxpose.xlu0.b32.cont [9/16] 0.0, 128
        %3058 = vxpose.xlu0.b32.cont [10/16] 0.0, 128
        %3059 = vxpose.xlu0.b32.cont [11/16] 0.0, 128
        %3060 = vxpose.xlu0.b32.cont [12/16] 0.0, 128
        %3061 = vxpose.xlu0.b32.cont [13/16] 0.0, 128
        %3062 = vxpose.xlu0.b32.cont [14/16] 0.0, 128
        %3063 = vxpose.xlu0.b32.cont [15/16] 0.0, 128
        %3064 = vxpose.xlu0.b32.end [16/16] 0.0, 128
        %v3065 = vpop.trf.xlu0
        %v3066 = vpop.trf.xlu0
        %v3067 = vpop.trf.xlu0
        %v3068 = vpop.trf.xlu0
        %v3069 = vpop.trf.xlu0
        %v3070 = vpop.trf.xlu0
        %v3071 = vpop.trf.xlu0
        %v3072 = vpop.trf.xlu0
        %v3073 = vpop.trf.xlu0
        %v3074 = vpop.trf.xlu0
        %v3075 = vpop.trf.xlu0
        %v3076 = vpop.trf.xlu0
        %v3077 = vpop.trf.xlu0
        %v3078 = vpop.trf.xlu0
        %v3079 = vpop.trf.xlu0
        %v3080 = vpop.trf.xlu0
        %3082 = vrot.lane.b32.xlu0 %v3046, 120
        %v3083 = vpop.permute.xlu0 %3082
        %3085 = vxpose.xlu0.b32.start [1/16] %v3083, 128
        %3086 = vxpose.xlu0.b32.cont [2/16] 0.0, 128
        %3087 = vxpose.xlu0.b32.cont [3/16] 0.0, 128
        %3088 = vxpose.xlu0.b32.cont [4/16] 0.0, 128
        %3089 = vxpose.xlu0.b32.cont [5/16] 0.0, 128
        %3090 = vxpose.xlu0.b32.cont [6/16] 0.0, 128
        %3091 = vxpose.xlu0.b32.cont [7/16] 0.0, 128
        %3092 = vxpose.xlu0.b32.cont [8/16] 0.0, 128
        %3093 = vxpose.xlu0.b32.cont [9/16] 0.0, 128
        %3094 = vxpose.xlu0.b32.cont [10/16] 0.0, 128
        %3095 = vxpose.xlu0.b32.cont [11/16] 0.0, 128
        %3096 = vxpose.xlu0.b32.cont [12/16] 0.0, 128
        %3097 = vxpose.xlu0.b32.cont [13/16] 0.0, 128
        %3098 = vxpose.xlu0.b32.cont [14/16] 0.0, 128
        %3099 = vxpose.xlu0.b32.cont [15/16] 0.0, 128
        %3100 = vxpose.xlu0.b32.end [16/16] 0.0, 128
        %v3101 = vpop.trf.xlu0
        %v3102 = vpop.trf.xlu0
        %v3103 = vpop.trf.xlu0
        %v3104 = vpop.trf.xlu0
        %v3105 = vpop.trf.xlu0
        %v3106 = vpop.trf.xlu0
        %v3107 = vpop.trf.xlu0
        %v3108 = vpop.trf.xlu0
        %v3109 = vpop.trf.xlu0
        %v3110 = vpop.trf.xlu0
        %v3111 = vpop.trf.xlu0
        %v3112 = vpop.trf.xlu0
        %v3113 = vpop.trf.xlu0
        %v3114 = vpop.trf.xlu0
        %v3115 = vpop.trf.xlu0
        %v3116 = vpop.trf.xlu0
        %v3118 = vsel %vm1305, %v3101, 0
        %3120 = vmatprep.subr.mxu0 0.0
        %3121 = vmatpush1.msra.mxu0 %v1227
        %3122 = vmatprep.subr.mxu0 0.0
        %3123 = vmatpush1.msra.mxu0 0.0
        %3124 = vmatprep.subr.mxu0 0.0
        %3125 = vmatpush1.msra.mxu0 0.0
        %3126 = vmatprep.subr.mxu0 0.0
        %3127 = vmatpush1.msra.mxu0 0.0
        %3128 = vmatprep.subr.mxu0 0.0
        %3129 = vmatpush1.msra.mxu0 0.0
        %3130 = vmatprep.subr.mxu0 0.0
        %3131 = vmatpush1.msra.mxu0 0.0
        %3132 = vmatprep.subr.mxu0 0.0
        %3133 = vmatpush1.msra.mxu0 0.0
        %3134 = vmatprep.subr.mxu0 0.0
        %3135 = vmatpush1.msra.mxu0 0.0
        %3136 = vmatprep.subr.mxu0 0.0
        %3137 = vmatpush1.msra.mxu0 0.0
        %3138 = vmatprep.subr.mxu0 0.0
        %3139 = vmatpush1.msra.mxu0 0.0
        %3140 = vmatprep.subr.mxu0 0.0
        %3141 = vmatpush1.msra.mxu0 0.0
        %3142 = vmatprep.subr.mxu0 0.0
        %3143 = vmatpush1.msra.mxu0 0.0
        %3144 = vmatprep.subr.mxu0 0.0
        %3145 = vmatpush1.msra.mxu0 0.0
        %3146 = vmatprep.subr.mxu0 0.0
        %3147 = vmatpush1.msra.mxu0 0.0
        %3148 = vmatprep.subr.mxu0 0.0
        %3149 = vmatpush1.msra.mxu0 0.0
        %3150 = vmatprep.subr.mxu0 0.0
        %3151 = vmatpush1.msra.mxu0 0.0
        %3152 = vmatprep.subr.mxu0 0.0
        %3153 = vmatpush1.msra.mxu0 0.0
        %3154 = vmatprep.subr.mxu0 0.0
        %3155 = vmatpush1.msra.mxu0 0.0
        %3156 = vmatprep.subr.mxu0 0.0
        %3157 = vmatpush1.msra.mxu0 0.0
        %3158 = vmatprep.subr.mxu0 0.0
        %3159 = vmatpush1.msra.mxu0 0.0
        %3160 = vmatprep.subr.mxu0 0.0
        %3161 = vmatpush1.msra.mxu0 0.0
        %3162 = vmatprep.subr.mxu0 0.0
        %3163 = vmatpush1.msra.mxu0 0.0
        %3164 = vmatprep.subr.mxu0 0.0
        %3165 = vmatpush1.msra.mxu0 0.0
        %3166 = vmatprep.subr.mxu0 0.0
        %3167 = vmatpush1.msra.mxu0 0.0
        %3168 = vmatprep.subr.mxu0 0.0
        %3169 = vmatpush1.msra.mxu0 0.0
        %3170 = vmatprep.subr.mxu0 0.0
        %3171 = vmatpush1.msra.mxu0 0.0
        %3172 = vmatprep.subr.mxu0 0.0
        %3173 = vmatpush1.msra.mxu0 0.0
        %3174 = vmatprep.subr.mxu0 0.0
        %3175 = vmatpush1.msra.mxu0 0.0
        %3176 = vmatprep.subr.mxu0 0.0
        %3177 = vmatpush1.msra.mxu0 0.0
        %3178 = vmatprep.subr.mxu0 0.0
        %3179 = vmatpush1.msra.mxu0 0.0
        %3180 = vmatprep.subr.mxu0 0.0
        %3181 = vmatpush1.msra.mxu0 0.0
        %3182 = vmatprep.subr.mxu0 0.0
        %3183 = vmatpush1.msra.mxu0 0.0
        %3184 = vmatprep.mubr.f32.mxu0 0.0
        %3185 = vmatmul.mubr.f32.gmra.mrb[0].mxu0 %v3118
        %v3186 = vpop.f32.mrb[0].mxu0
        %v3187 = vadd.f32 0.0, %v3186
        %v3188 = vpop.f32.mrb[0].mxu0
        %3189 = vdwg.mxu0
        %v3191 = vsel %vm1305, %v3065, 0
        %3193 = vmatprep.subr.mxu0 0.0
        %3194 = vmatpush1.msra.mxu0 %v1149
        %3195 = vmatprep.subr.mxu0 0.0
        %3196 = vmatpush1.msra.mxu0 0.0
        %3197 = vmatprep.subr.mxu0 0.0
        %3198 = vmatpush1.msra.mxu0 0.0
        %3199 = vmatprep.subr.mxu0 0.0
        %3200 = vmatpush1.msra.mxu0 0.0
        %3201 = vmatprep.subr.mxu0 0.0
        %3202 = vmatpush1.msra.mxu0 0.0
        %3203 = vmatprep.subr.mxu0 0.0
        %3204 = vmatpush1.msra.mxu0 0.0
        %3205 = vmatprep.subr.mxu0 0.0
        %3206 = vmatpush1.msra.mxu0 0.0
        %3207 = vmatprep.subr.mxu0 0.0
        %3208 = vmatpush1.msra.mxu0 0.0
        %3209 = vmatprep.subr.mxu0 0.0
        %3210 = vmatpush1.msra.mxu0 0.0
        %3211 = vmatprep.subr.mxu0 0.0
        %3212 = vmatpush1.msra.mxu0 0.0
        %3213 = vmatprep.subr.mxu0 0.0
        %3214 = vmatpush1.msra.mxu0 0.0
        %3215 = vmatprep.subr.mxu0 0.0
        %3216 = vmatpush1.msra.mxu0 0.0
        %3217 = vmatprep.subr.mxu0 0.0
        %3218 = vmatpush1.msra.mxu0 0.0
        %3219 = vmatprep.subr.mxu0 0.0
        %3220 = vmatpush1.msra.mxu0 0.0
        %3221 = vmatprep.subr.mxu0 0.0
        %3222 = vmatpush1.msra.mxu0 0.0
        %3223 = vmatprep.subr.mxu0 0.0
        %3224 = vmatpush1.msra.mxu0 0.0
        %3225 = vmatprep.subr.mxu0 0.0
        %3226 = vmatpush1.msra.mxu0 0.0
        %3227 = vmatprep.subr.mxu0 0.0
        %3228 = vmatpush1.msra.mxu0 0.0
        %3229 = vmatprep.subr.mxu0 0.0
        %3230 = vmatpush1.msra.mxu0 0.0
        %3231 = vmatprep.subr.mxu0 0.0
        %3232 = vmatpush1.msra.mxu0 0.0
        %3233 = vmatprep.subr.mxu0 0.0
        %3234 = vmatpush1.msra.mxu0 0.0
        %3235 = vmatprep.subr.mxu0 0.0
        %3236 = vmatpush1.msra.mxu0 0.0
        %3237 = vmatprep.subr.mxu0 0.0
        %3238 = vmatpush1.msra.mxu0 0.0
        %3239 = vmatprep.subr.mxu0 0.0
        %3240 = vmatpush1.msra.mxu0 0.0
        %3241 = vmatprep.subr.mxu0 0.0
        %3242 = vmatpush1.msra.mxu0 0.0
        %3243 = vmatprep.subr.mxu0 0.0
        %3244 = vmatpush1.msra.mxu0 0.0
        %3245 = vmatprep.subr.mxu0 0.0
        %3246 = vmatpush1.msra.mxu0 0.0
        %3247 = vmatprep.subr.mxu0 0.0
        %3248 = vmatpush1.msra.mxu0 0.0
        %3249 = vmatprep.subr.mxu0 0.0
        %3250 = vmatpush1.msra.mxu0 0.0
        %3251 = vmatprep.subr.mxu0 0.0
        %3252 = vmatpush1.msra.mxu0 0.0
        %3253 = vmatprep.subr.mxu0 0.0
        %3254 = vmatpush1.msra.mxu0 0.0
        %3255 = vmatprep.subr.mxu0 0.0
        %3256 = vmatpush1.msra.mxu0 0.0
        %3257 = vmatprep.mubr.f32.mxu0 0.0
        %3258 = vmatmul.mubr.f32.gmra.mrb[0].mxu0 %v3191
        %v3259 = vpop.f32.mrb[0].mxu0
        %v3260 = vadd.f32 %v3187, %v3259
        %v3261 = vpop.f32.mrb[0].mxu0
        %3262 = vdwg.mxu0
        %v3264 = vsel %vm981, %v3260, 0
        %3266 = vmatprep.subr.mxu0 %v683
        %3267 = vmatpush1.msra.mxu0 %v682
        %3268 = vmatprep.subr.mxu0 %v691
        %3269 = vmatpush1.msra.mxu0 %v690
        %3270 = vmatprep.subr.mxu0 0.0
        %3271 = vmatpush1.msra.mxu0 0.0
        %3272 = vmatprep.subr.mxu0 0.0
        %3273 = vmatpush1.msra.mxu0 0.0
        %3274 = vmatprep.subr.mxu0 0.0
        %3275 = vmatpush1.msra.mxu0 0.0
        %3276 = vmatprep.subr.mxu0 0.0
        %3277 = vmatpush1.msra.mxu0 0.0
        %3278 = vmatprep.subr.mxu0 0.0
        %3279 = vmatpush1.msra.mxu0 0.0
        %3280 = vmatprep.subr.mxu0 0.0
        %3281 = vmatpush1.msra.mxu0 0.0
        %3282 = vmatprep.subr.mxu0 0.0
        %3283 = vmatpush1.msra.mxu0 0.0
        %3284 = vmatprep.subr.mxu0 0.0
        %3285 = vmatpush1.msra.mxu0 0.0
        %3286 = vmatprep.subr.mxu0 0.0
        %3287 = vmatpush1.msra.mxu0 0.0
        %3288 = vmatprep.subr.mxu0 0.0
        %3289 = vmatpush1.msra.mxu0 0.0
        %3290 = vmatprep.subr.mxu0 0.0
        %3291 = vmatpush1.msra.mxu0 0.0
        %3292 = vmatprep.subr.mxu0 0.0
        %3293 = vmatpush1.msra.mxu0 0.0
        %3294 = vmatprep.subr.mxu0 0.0
        %3295 = vmatpush1.msra.mxu0 0.0
        %3296 = vmatprep.subr.mxu0 0.0
        %3297 = vmatpush1.msra.mxu0 0.0
        %3298 = vmatprep.subr.mxu0 0.0
        %3299 = vmatpush1.msra.mxu0 0.0
        %3300 = vmatprep.subr.mxu0 0.0
        %3301 = vmatpush1.msra.mxu0 0.0
        %3302 = vmatprep.subr.mxu0 0.0
        %3303 = vmatpush1.msra.mxu0 0.0
        %3304 = vmatprep.subr.mxu0 0.0
        %3305 = vmatpush1.msra.mxu0 0.0
        %3306 = vmatprep.subr.mxu0 0.0
        %3307 = vmatpush1.msra.mxu0 0.0
        %3308 = vmatprep.subr.mxu0 0.0
        %3309 = vmatpush1.msra.mxu0 0.0
        %3310 = vmatprep.subr.mxu0 0.0
        %3311 = vmatpush1.msra.mxu0 0.0
        %3312 = vmatprep.subr.mxu0 0.0
        %3313 = vmatpush1.msra.mxu0 0.0
        %3314 = vmatprep.subr.mxu0 0.0
        %3315 = vmatpush1.msra.mxu0 0.0
        %3316 = vmatprep.subr.mxu0 0.0
        %3317 = vmatpush1.msra.mxu0 0.0
        %3318 = vmatprep.subr.mxu0 0.0
        %3319 = vmatpush1.msra.mxu0 0.0
        %3320 = vmatprep.subr.mxu0 0.0
        %3321 = vmatpush1.msra.mxu0 0.0
        %3322 = vmatprep.subr.mxu0 0.0
        %3323 = vmatpush1.msra.mxu0 0.0
        %3324 = vmatprep.subr.mxu0 0.0
        %3325 = vmatpush1.msra.mxu0 0.0
        %3326 = vmatprep.subr.mxu0 0.0
        %3327 = vmatpush1.msra.mxu0 0.0
        %3328 = vmatprep.subr.mxu0 0.0
        %3329 = vmatpush1.msra.mxu0 0.0
        %3330 = vmatprep.mubr.f32.mxu0 0.0
        %3331 = vmatmul.mubr.f32.gmra.mrb[0].mxu0 %v3264
        %v3332 = vpop.f32.mrb[0].mxu0
        %v3333 = vadd.f32 0.0, %v3332
        %v3334 = vpop.f32.mrb[0].mxu0
        %v3335 = vadd.f32 0.0, %v3334
        %3336 = vdwg.mxu0
        %3337 = vmatprep.subr.mxu0 %v685
        %3338 = vmatpush1.msra.mxu0 %v684
        %3339 = vmatprep.subr.mxu0 %v693
        %3340 = vmatpush1.msra.mxu0 %v692
        %3341 = vmatprep.subr.mxu0 0.0
        %3342 = vmatpush1.msra.mxu0 0.0
        %3343 = vmatprep.subr.mxu0 0.0
        %3344 = vmatpush1.msra.mxu0 0.0
        %3345 = vmatprep.subr.mxu0 0.0
        %3346 = vmatpush1.msra.mxu0 0.0
        %3347 = vmatprep.subr.mxu0 0.0
        %3348 = vmatpush1.msra.mxu0 0.0
        %3349 = vmatprep.subr.mxu0 0.0
        %3350 = vmatpush1.msra.mxu0 0.0
        %3351 = vmatprep.subr.mxu0 0.0
        %3352 = vmatpush1.msra.mxu0 0.0
        %3353 = vmatprep.subr.mxu0 0.0
        %3354 = vmatpush1.msra.mxu0 0.0
        %3355 = vmatprep.subr.mxu0 0.0
        %3356 = vmatpush1.msra.mxu0 0.0
        %3357 = vmatprep.subr.mxu0 0.0
        %3358 = vmatpush1.msra.mxu0 0.0
        %3359 = vmatprep.subr.mxu0 0.0
        %3360 = vmatpush1.msra.mxu0 0.0
        %3361 = vmatprep.subr.mxu0 0.0
        %3362 = vmatpush1.msra.mxu0 0.0
        %3363 = vmatprep.subr.mxu0 0.0
        %3364 = vmatpush1.msra.mxu0 0.0
        %3365 = vmatprep.subr.mxu0 0.0
        %3366 = vmatpush1.msra.mxu0 0.0
        %3367 = vmatprep.subr.mxu0 0.0
        %3368 = vmatpush1.msra.mxu0 0.0
        %3369 = vmatprep.subr.mxu0 0.0
        %3370 = vmatpush1.msra.mxu0 0.0
        %3371 = vmatprep.subr.mxu0 0.0
        %3372 = vmatpush1.msra.mxu0 0.0
        %3373 = vmatprep.subr.mxu0 0.0
        %3374 = vmatpush1.msra.mxu0 0.0
        %3375 = vmatprep.subr.mxu0 0.0
        %3376 = vmatpush1.msra.mxu0 0.0
        %3377 = vmatprep.subr.mxu0 0.0
        %3378 = vmatpush1.msra.mxu0 0.0
        %3379 = vmatprep.subr.mxu0 0.0
        %3380 = vmatpush1.msra.mxu0 0.0
        %3381 = vmatprep.subr.mxu0 0.0
        %3382 = vmatpush1.msra.mxu0 0.0
        %3383 = vmatprep.subr.mxu0 0.0
        %3384 = vmatpush1.msra.mxu0 0.0
        %3385 = vmatprep.subr.mxu0 0.0
        %3386 = vmatpush1.msra.mxu0 0.0
        %3387 = vmatprep.subr.mxu0 0.0
        %3388 = vmatpush1.msra.mxu0 0.0
        %3389 = vmatprep.subr.mxu0 0.0
        %3390 = vmatpush1.msra.mxu0 0.0
        %3391 = vmatprep.subr.mxu0 0.0
        %3392 = vmatpush1.msra.mxu0 0.0
        %3393 = vmatprep.subr.mxu0 0.0
        %3394 = vmatpush1.msra.mxu0 0.0
        %3395 = vmatprep.subr.mxu0 0.0
        %3396 = vmatpush1.msra.mxu0 0.0
        %3397 = vmatprep.subr.mxu0 0.0
        %3398 = vmatpush1.msra.mxu0 0.0
        %3399 = vmatprep.subr.mxu0 0.0
        %3400 = vmatpush1.msra.mxu0 0.0
        %3401 = vmatprep.mubr.f32.mxu0 0.0
        %3402 = vmatmul.mubr.f32.gmra.mrb[0].mxu0 %v3264
        %v3403 = vpop.f32.mrb[0].mxu0
        %v3404 = vadd.f32 0.0, %v3403
        %v3405 = vpop.f32.mrb[0].mxu0
        %v3406 = vadd.f32 0.0, %v3405
        %3407 = vdwg.mxu0
        %3408 = vmatprep.subr.mxu0 %v687
        %3409 = vmatpush1.msra.mxu0 %v686
        %3410 = vmatprep.subr.mxu0 %v695
        %3411 = vmatpush1.msra.mxu0 %v694
        %3412 = vmatprep.subr.mxu0 0.0
        %3413 = vmatpush1.msra.mxu0 0.0
        %3414 = vmatprep.subr.mxu0 0.0
        %3415 = vmatpush1.msra.mxu0 0.0
        %3416 = vmatprep.subr.mxu0 0.0
        %3417 = vmatpush1.msra.mxu0 0.0
        %3418 = vmatprep.subr.mxu0 0.0
        %3419 = vmatpush1.msra.mxu0 0.0
        %3420 = vmatprep.subr.mxu0 0.0
        %3421 = vmatpush1.msra.mxu0 0.0
        %3422 = vmatprep.subr.mxu0 0.0
        %3423 = vmatpush1.msra.mxu0 0.0
        %3424 = vmatprep.subr.mxu0 0.0
        %3425 = vmatpush1.msra.mxu0 0.0
        %3426 = vmatprep.subr.mxu0 0.0
        %3427 = vmatpush1.msra.mxu0 0.0
        %3428 = vmatprep.subr.mxu0 0.0
        %3429 = vmatpush1.msra.mxu0 0.0
        %3430 = vmatprep.subr.mxu0 0.0
        %3431 = vmatpush1.msra.mxu0 0.0
        %3432 = vmatprep.subr.mxu0 0.0
        %3433 = vmatpush1.msra.mxu0 0.0
        %3434 = vmatprep.subr.mxu0 0.0
        %3435 = vmatpush1.msra.mxu0 0.0
        %3436 = vmatprep.subr.mxu0 0.0
        %3437 = vmatpush1.msra.mxu0 0.0
        %3438 = vmatprep.subr.mxu0 0.0
        %3439 = vmatpush1.msra.mxu0 0.0
        %3440 = vmatprep.subr.mxu0 0.0
        %3441 = vmatpush1.msra.mxu0 0.0
        %3442 = vmatprep.subr.mxu0 0.0
        %3443 = vmatpush1.msra.mxu0 0.0
        %3444 = vmatprep.subr.mxu0 0.0
        %3445 = vmatpush1.msra.mxu0 0.0
        %3446 = vmatprep.subr.mxu0 0.0
        %3447 = vmatpush1.msra.mxu0 0.0
        %3448 = vmatprep.subr.mxu0 0.0
        %3449 = vmatpush1.msra.mxu0 0.0
        %3450 = vmatprep.subr.mxu0 0.0
        %3451 = vmatpush1.msra.mxu0 0.0
        %3452 = vmatprep.subr.mxu0 0.0
        %3453 = vmatpush1.msra.mxu0 0.0
        %3454 = vmatprep.subr.mxu0 0.0
        %3455 = vmatpush1.msra.mxu0 0.0
        %3456 = vmatprep.subr.mxu0 0.0
        %3457 = vmatpush1.msra.mxu0 0.0
        %3458 = vmatprep.subr.mxu0 0.0
        %3459 = vmatpush1.msra.mxu0 0.0
        %3460 = vmatprep.subr.mxu0 0.0
        %3461 = vmatpush1.msra.mxu0 0.0
        %3462 = vmatprep.subr.mxu0 0.0
        %3463 = vmatpush1.msra.mxu0 0.0
        %3464 = vmatprep.subr.mxu0 0.0
        %3465 = vmatpush1.msra.mxu0 0.0
        %3466 = vmatprep.subr.mxu0 0.0
        %3467 = vmatpush1.msra.mxu0 0.0
        %3468 = vmatprep.subr.mxu0 0.0
        %3469 = vmatpush1.msra.mxu0 0.0
        %3470 = vmatprep.subr.mxu0 0.0
        %3471 = vmatpush1.msra.mxu0 0.0
        %3472 = vmatprep.mubr.f32.mxu0 0.0
        %3473 = vmatmul.mubr.f32.gmra.mrb[0].mxu0 %v3264
        %v3474 = vpop.f32.mrb[0].mxu0
        %v3475 = vadd.f32 0.0, %v3474
        %v3476 = vpop.f32.mrb[0].mxu0
        %v3477 = vadd.f32 0.0, %v3476
        %3478 = vdwg.mxu0
        %3479 = vmatprep.subr.mxu0 %v689
        %3480 = vmatpush1.msra.mxu0 %v688
        %3481 = vmatprep.subr.mxu0 %v697
        %3482 = vmatpush1.msra.mxu0 %v696
        %3483 = vmatprep.subr.mxu0 0.0
        %3484 = vmatpush1.msra.mxu0 0.0
        %3485 = vmatprep.subr.mxu0 0.0
        %3486 = vmatpush1.msra.mxu0 0.0
        %3487 = vmatprep.subr.mxu0 0.0
        %3488 = vmatpush1.msra.mxu0 0.0
        %3489 = vmatprep.subr.mxu0 0.0
        %3490 = vmatpush1.msra.mxu0 0.0
        %3491 = vmatprep.subr.mxu0 0.0
        %3492 = vmatpush1.msra.mxu0 0.0
        %3493 = vmatprep.subr.mxu0 0.0
        %3494 = vmatpush1.msra.mxu0 0.0
        %3495 = vmatprep.subr.mxu0 0.0
        %3496 = vmatpush1.msra.mxu0 0.0
        %3497 = vmatprep.subr.mxu0 0.0
        %3498 = vmatpush1.msra.mxu0 0.0
        %3499 = vmatprep.subr.mxu0 0.0
        %3500 = vmatpush1.msra.mxu0 0.0
        %3501 = vmatprep.subr.mxu0 0.0
        %3502 = vmatpush1.msra.mxu0 0.0
        %3503 = vmatprep.subr.mxu0 0.0
        %3504 = vmatpush1.msra.mxu0 0.0
        %3505 = vmatprep.subr.mxu0 0.0
        %3506 = vmatpush1.msra.mxu0 0.0
        %3507 = vmatprep.subr.mxu0 0.0
        %3508 = vmatpush1.msra.mxu0 0.0
        %3509 = vmatprep.subr.mxu0 0.0
        %3510 = vmatpush1.msra.mxu0 0.0
        %3511 = vmatprep.subr.mxu0 0.0
        %3512 = vmatpush1.msra.mxu0 0.0
        %3513 = vmatprep.subr.mxu0 0.0
        %3514 = vmatpush1.msra.mxu0 0.0
        %3515 = vmatprep.subr.mxu0 0.0
        %3516 = vmatpush1.msra.mxu0 0.0
        %3517 = vmatprep.subr.mxu0 0.0
        %3518 = vmatpush1.msra.mxu0 0.0
        %3519 = vmatprep.subr.mxu0 0.0
        %3520 = vmatpush1.msra.mxu0 0.0
        %3521 = vmatprep.subr.mxu0 0.0
        %3522 = vmatpush1.msra.mxu0 0.0
        %3523 = vmatprep.subr.mxu0 0.0
        %3524 = vmatpush1.msra.mxu0 0.0
        %3525 = vmatprep.subr.mxu0 0.0
        %3526 = vmatpush1.msra.mxu0 0.0
        %3527 = vmatprep.subr.mxu0 0.0
        %3528 = vmatpush1.msra.mxu0 0.0
        %3529 = vmatprep.subr.mxu0 0.0
        %3530 = vmatpush1.msra.mxu0 0.0
        %3531 = vmatprep.subr.mxu0 0.0
        %3532 = vmatpush1.msra.mxu0 0.0
        %3533 = vmatprep.subr.mxu0 0.0
        %3534 = vmatpush1.msra.mxu0 0.0
        %3535 = vmatprep.subr.mxu0 0.0
        %3536 = vmatpush1.msra.mxu0 0.0
        %3537 = vmatprep.subr.mxu0 0.0
        %3538 = vmatpush1.msra.mxu0 0.0
        %3539 = vmatprep.subr.mxu0 0.0
        %3540 = vmatpush1.msra.mxu0 0.0
        %3541 = vmatprep.subr.mxu0 0.0
        %3542 = vmatpush1.msra.mxu0 0.0
        %3543 = vmatprep.mubr.f32.mxu0 0.0
        %3544 = vmatmul.mubr.f32.gmra.mrb[0].mxu0 %v3264
        %v3545 = vpop.f32.mrb[0].mxu0
        %v3546 = vadd.f32 0.0, %v3545
        %v3547 = vpop.f32.mrb[0].mxu0
        %v3548 = vadd.f32 0.0, %v3547
        %3549 = vdwg.mxu0
        %v3550 = vmul.f32 %v674, %v3333
        %v3551 = vmul.f32 %v675, %v3335
        %v3552 = vmul.f32 %v676, %v3404
        %v3553 = vmul.f32 %v677, %v3406
        %v3554 = vmul.f32 %v678, %v3475
        %v3555 = vmul.f32 %v679, %v3477
        %v3556 = vmul.f32 %v680, %v3546
        %v3557 = vmul.f32 %v681, %v3548
        %3558 = vst [vmem:[%s668] sm:$0xff] %v3550
        %3559 = vst [vmem:[%s668 + $0x8] sm:$0xff] %v3551
        %3560 = vst [vmem:[%s668 + $0x10] sm:$0xff] %v3552
        %3561 = vst [vmem:[%s668 + $0x18] sm:$0xff] %v3553
        %3562 = vst [vmem:[%s668 + $0x20] sm:$0xff] %v3554
        %3563 = vst [vmem:[%s668 + $0x28] sm:$0xff] %v3555
        %3564 = vst [vmem:[%s668 + $0x30] sm:$0xff] %v3556
        %3565 = vst [vmem:[%s668 + $0x38] sm:$0xff] %v3557
        %s3566 = sand.u32 %s406, 1
        %s3567 = scalar_lea.sflag [#allocation4], %s3566
        %s3568 = sand.u32 %s406, 1
        %s3569 = smul.addr %s3568, 64
        %s3570 = scalar_lea.vmem [#allocation17], %s3569
        // Predicated region
        $region125: #{tpu_custom_call.1} parent=87 // pred_check
          %p3571 = pneg %p416
        $region126: #{tpu_custom_call.1} parent=87 // pred_check_branch
          %3573 = sbr.rel (%p3571) target = $region128
        $region127: #{tpu_custom_call.1} parent=87 // pred_region
          %s3575 = ssub.s32 1024, 1024
          %3576 = vsyncadd %s3567, %s3575
          %s3577 = smul.addr %s36, 8
          %s3578 = smul.addr %s3577, 128
          %s3579 = scalar_lea.hbm %s17, %s3578
          %s3581 = sshll.u32 %s3570, 4
          %s3582 = int_to_ptr.vmem [resolvable:$true] %s3581
          %3584 = dma.vmem_to_hbm [thread:$0]  %s3582, 1024, %s3579, %s3567
        $region128: #{tpu_custom_call.1} parent=87 // pred_fallthru
          _
      $region88: #{tpu_custom_call.1} parent=5 // pred_fallthru
        _
      %p3585 = scmp.le.s32.totalorder 2, %s31
      // Predicated region
      $region129: #{tpu_custom_call.1} parent=5 // pred_check
        %p3586 = pneg %p3585
      $region130: #{tpu_custom_call.1} parent=5 // pred_check_branch
        %3588 = sbr.rel (%p3586) target = $region132
      $region131: #{tpu_custom_call.1} parent=5 // pred_region
        %s3589 = ssub.s32 %s31, 2
        // Predicated region
        $region133: #{tpu_custom_call.1} parent=131 // pred_check
          %p3590 = pneg %p422
        $region134: #{tpu_custom_call.1} parent=131 // pred_check_branch
          %3592 = sbr.rel (%p3590) target = $region136
        $region135: #{tpu_custom_call.1} parent=131 // pred_region
          %s3593 = sand.u32 %s407, 1
          %s3594 = scalar_lea.sflag [#allocation4], %s3593
          %s3595 = sand.u32 %s407, 1
          %s3596 = smul.addr %s3595, 64
          %s3597 = scalar_lea.vmem [#allocation17], %s3596
          %3598 = dma.done %s3594, 1024
        $region136: #{tpu_custom_call.1} parent=131 // pred_fallthru
          _
      $region132: #{tpu_custom_call.1} parent=5 // pred_fallthru
        _
    $region6: #{tpu_custom_call.1} parent=1 // loop_footer
      %s35 = sadd.s32 1, %s31
    $region7: #{tpu_custom_call.1} parent=1 // loop_footer_branch
      %30 = sbr.rel target = $region3
    $region8: #{tpu_custom_call.1} parent=1 // loop_exit
      _
    %3599 = vsyncpa [#allocation3], 1
    %s3600 = scalar_lea.sflag [#allocation3], 1
    %3601 = vsyncpa %s3600, 1
    %3602 = vsyncpa [#allocation6], 1
    %3603 = vsyncpa [#allocation9], 1
    %3604 = vsyncpa [#allocation12], 1
    %3605 = vsyncpa [#allocation15], 1
    %3606 = vsyncpa [#allocation4], 1
    %s3607 = scalar_lea.sflag [#allocation4], 1
    %3608 = vsyncpa %s3607, 1

</llo_original>
